<compile_context>
chip_gen: v5e
topology: v5e:2x2
jax: 0.10.0
libtpu: 0.0.40
codegen_flags: <defaults>
</compile_context>

<pallas_src>
import functools

import jax
import jax.numpy as jnp
from jax.experimental import pallas as pl
from jax.experimental.pallas import tpu as pltpu

_LN_EPS = 1e-5  # PyTorch nn.LayerNorm default
_VMEM_LIMIT = 64 * 1024 * 1024


def _layernorm(z, gamma, beta):
    mean = jnp.mean(z, axis=-1, keepdims=True)
    var = jnp.mean((z - mean) ** 2, axis=-1, keepdims=True)
    return (z - mean) * jax.lax.rsqrt(var + _LN_EPS) * gamma + beta


def _resident_spec():
    # Whole-array operand placed in VMEM once (no pipelining, single buffer).
    return pl.BlockSpec(memory_space=pltpu.MemorySpace.VMEM)


def _pick_batch_block(n):
    """Batch elements per grid step: bigger M for the projections, but keep >=2 grid steps
    when possible so both v7x TensorCores get work."""
    for b in (4, 2):
        if n % b == 0 and n // b >= 2:
            return b
    return n if n <= 4 else (2 if n % 2 == 0 else 1)


# --------------------- fused MHA + residual + LayerNorm ----------------------

def _mha_ln_kernel(*refs, nhead, is_self, has_qpos, has_kpos):
    refs = list(refs)
    o_ref = refs.pop()                      # single output ref (last)
    it = iter(refs)

    x_ref = next(it)                        # (Bb, Lq, E) query-side input (residual branch)
    qp_ref = next(it) if has_qpos else None
    if is_self:
        kv_ref = kp_ref = None
    else:
        kv_ref = next(it)                   # (Bb, Lk, E) memory
        kp_ref = next(it) if has_kpos else None

    if is_self:
        wqk_ref, bqk_ref, wv_ref, bv_ref = next(it), next(it), next(it), next(it)
    else:
        wq_ref, bq_ref = next(it), next(it)
        wk_ref, bk_ref = next(it), next(it)
        wv_ref, bv_ref = next(it), next(it)
    wo_ref, bo_ref, g_ref, beta_ref = next(it), next(it), next(it), next(it)

    f32, bf16 = jnp.float32, jnp.bfloat16
    x = x_ref[...]                          # f32, (Bb, Lq, E)
    Bb, Lq, E = x.shape
    H = nhead
    dh = E // H

    x2 = x.reshape(Bb * Lq, E)              # residual rows, f32
    q_src = (x + qp_ref[...]) if has_qpos else x
    q_src = q_src.reshape(Bb * Lq, E).astype(bf16)

    # ---- input projections (bf16 operands, f32 accumulation) ----
    if is_self:
        Lk = Lq
        # q and k share the same source -> one fused (M, 2E) matmul (q scale folded into weights)
        qk = jnp.dot(q_src, wqk_ref[...], preferred_element_type=f32) + bqk_ref[...]
        q = qk[:, :E]
        k = qk[:, E:]
        v = jnp.dot(x2.astype(bf16), wv_ref[...], preferred_element_type=f32) + bv_ref[...]
    else:
        kv = kv_ref[...]
        Lk = kv.shape[1]
        k_src = (kv + kp_ref[...]) if has_kpos else kv
        k_src = k_src.reshape(Bb * Lk, E).astype(bf16)
        kv2 = kv.reshape(Bb * Lk, E).astype(bf16)
        q = jnp.dot(q_src, wq_ref[...], preferred_element_type=f32) + bq_ref[...]
        k = jnp.dot(k_src, wk_ref[...], preferred_element_type=f32) + bk_ref[...]
        v = jnp.dot(kv2, wv_ref[...], preferred_element_type=f32) + bv_ref[...]

    # ---- head-batched attention core (single batch dim over Bb*H) ----
    qh = jnp.stack([q[b * Lq:(b + 1) * Lq, h * dh:(h + 1) * dh]
                    for b in range(Bb) for h in range(H)], axis=0).astype(bf16)
    kh = jnp.stack([k[b * Lk:(b + 1) * Lk, h * dh:(h + 1) * dh]
                    for b in range(Bb) for h in range(H)], axis=0).astype(bf16)
    vh = jnp.stack([v[b * Lk:(b + 1) * Lk, h * dh:(h + 1) * dh]
                    for b in range(Bb) for h in range(H)], axis=0).astype(bf16)

    s = jnp.einsum('nqd,nkd->nqk', qh, kh, preferred_element_type=f32)   # (Bb*H, Lq, Lk)
    s = s - jnp.max(s, axis=-1, keepdims=True)
    p = jnp.exp(s)
    p = p / jnp.sum(p, axis=-1, keepdims=True)                           # exact softmax
    ctx = jnp.einsum('nqk,nkd->nqd', p.astype(bf16), vh,
                     preferred_element_type=f32)                          # (Bb*H, Lq, dh)

    # reassemble (Bb*Lq, E): lane-concat heads per batch element, row-concat batch elements
    ctx = jnp.concatenate(
        [jnp.concatenate([ctx[b * H + h] for h in range(H)], axis=-1) for b in range(Bb)],
        axis=0)

    # ---- single out-projection + fused epilogue ----
    attn = jnp.dot(ctx.astype(bf16), wo_ref[...], preferred_element_type=f32) + bo_ref[...]
    z = x2 + attn
    o_ref[...] = _layernorm(z, g_ref[...], beta_ref[...]).reshape(Bb, Lq, E)


def fused_mha_ln(q_base, q_pos, kv_base, kv_pos, attn_p, ln_g, ln_b, nhead, *, is_self):
    """One pallas_call: pos-add + QKV proj + MHA + out-proj + residual + LayerNorm."""
    N, Lq, E = q_base.shape
    has_qpos = q_pos is not None
    has_kpos = (not is_self) and (kv_pos is not None)
    Bb = _pick_batch_block(N)

    def act_spec(L_):
        return pl.BlockSpec((Bb, L_, E), lambda b: (b, 0, 0))

    in_specs = [act_spec(Lq)]
    args = [q_base]
    if has_qpos:
        in_specs.append(act_spec(Lq)); args.append(q_pos)
    if not is_self:
        Lk = kv_base.shape[1]
        in_specs.append(act_spec(Lk)); args.append(kv_base)
        if has_kpos:
            in_specs.append(act_spec(Lk)); args.append(kv_pos)

    if is_self:
        w_names = ["wqk_t", "bqk", "wv_t", "bv", "wo_t", "bo"]
    else:
        w_names = ["wq_t", "bq", "wk_t", "bk", "wv_t", "bv", "wo_t", "bo"]
    for nm in w_names:
        in_specs.append(_resident_spec()); args.append(attn_p[nm])
    in_specs += [_resident_spec(), _resident_spec()]
    args += [ln_g, ln_b]

    kernel = functools.partial(_mha_ln_kernel, nhead=nhead, is_self=is_self,
                               has_qpos=has_qpos, has_kpos=has_kpos)
    return pl.pallas_call(
        kernel,
        out_shape=jax.ShapeDtypeStruct((N, Lq, E), jnp.float32),
        grid=(N // Bb,),
        in_specs=in_specs,
        out_specs=pl.BlockSpec((Bb, Lq, E), lambda b: (b, 0, 0)),
        compiler_params=pltpu.CompilerParams(
            dimension_semantics=("parallel",),
            vmem_limit_bytes=_VMEM_LIMIT),
    )(*args)


# --------------------- fused FFN + residual + LayerNorm ----------------------

def _ffn_ln_kernel(x_ref, w1_ref, b1_ref, w2_ref, b2_ref, g_ref, beta_ref, o_ref):
    f32, bf16 = jnp.float32, jnp.bfloat16
    x = x_ref[...]                                                        # (tm, E) f32
    h = jnp.dot(x.astype(bf16), w1_ref[...], preferred_element_type=f32) + b1_ref[...]
    h = jnp.maximum(h, 0.0)                                               # ReLU
    y = jnp.dot(h.astype(bf16), w2_ref[...], preferred_element_type=f32) + b2_ref[...]
    o_ref[...] = _layernorm(x + y, g_ref[...], beta_ref[...])


def _pick_row_tile(m):
    # Capped at 256 rows so (tm, F) intermediates + resident bf16 weights fit v7x's 64 MiB VMEM.
    for t in (256, 128, 64, 32, 16, 8):
        if m % t == 0:
            return t
    return m


def fused_ffn_ln(x, w1_t, b1, w2_t, b2, ln_g, ln_b):
    """One pallas_call: linear1 + ReLU + linear2 + residual + LayerNorm, M-row tiled."""
    M, E = x.shape
    tm = _pick_row_tile(M)
    return pl.pallas_call(
        _ffn_ln_kernel,
        out_shape=jax.ShapeDtypeStruct((M, E), jnp.float32),
        grid=(M // tm,),
        in_specs=[
            pl.BlockSpec((tm, E), lambda i: (i, 0)),
            _resident_spec(), _resident_spec(),   # w1, b1
            _resident_spec(), _resident_spec(),   # w2, b2
            _resident_spec(), _resident_spec(),   # gamma, beta
        ],
        out_specs=pl.BlockSpec((tm, E), lambda i: (i, 0)),
        compiler_params=pltpu.CompilerParams(
            dimension_semantics=("parallel",),
            vmem_limit_bytes=_VMEM_LIMIT),
    )(x, w1_t, b1, w2_t, b2, ln_g, ln_b)


# ------------------------------ layer wrappers --------------------------------

def transformer_decoder_layer_batch_major(tgt_b, memory_b, params, nhead,
                                          pos_b=None, query_pos_b=None):
    """Batch-major (N, L, E) interface — use this when stacking layers (no transposes)."""
    N, L, E = tgt_b.shape
    # self-attention + residual + LN1
    x1 = fused_mha_ln(tgt_b, query_pos_b, None, None, params["self_attn"],
                      params["ln1_g"], params["ln1_b"], nhead, is_self=True)
    # cross-attention + residual + LN2
    x2 = fused_mha_ln(x1, query_pos_b, memory_b, pos_b, params["cross_attn"],
                      params["ln2_g"], params["ln2_b"], nhead, is_self=False)
    # FFN + residual + LN3 (contiguous (N*L, E) view — free in batch-major layout)
    x3 = fused_ffn_ln(x2.reshape(N * L, E),
                      params["w1_t"], params["b1"], params["w2_t"], params["b2"],
                      params["ln3_g"], params["ln3_b"])
    return x3.reshape(N, L, E)


def transformer_decoder_layer(tgt, memory, params, nhead, pos=None, query_pos=None):
    """PyTorch-style (L, N, E) interface; forward_post semantics, dropout = identity (eval)."""
    tgt_b = jnp.transpose(tgt, (1, 0, 2))
    mem_b = jnp.transpose(memory, (1, 0, 2))
    qp_b = None if query_pos is None else jnp.transpose(query_pos, (1, 0, 2))
    pos_b = None if pos is None else jnp.transpose(pos, (1, 0, 2))
    out_b = transformer_decoder_layer_batch_major(tgt_b, mem_b, params, nhead,
                                                  pos_b=pos_b, query_pos_b=qp_b)
    return jnp.transpose(out_b, (1, 0, 2))


# ----------------------------- parameter setup -------------------------------

def init_params(key, d_model, nhead, dim_feedforward):
    assert d_model % nhead == 0
    scale = (d_model // nhead) ** -0.5       # PyTorch scales q post-projection; fold into wq/bq
    ks = jax.random.split(key, 10)
    s = 0.02
    bf16 = jnp.bfloat16
    w = lambda k, shape: jax.random.normal(k, shape, jnp.float32) * s
    zeros = lambda n: jnp.zeros((1, n), jnp.float32)
    ones = lambda n: jnp.ones((1, n), jnp.float32)

    def self_mha(k0, k1, k2, k3):
        wq = w(k0, (d_model, d_model)) * scale
        wk = w(k1, (d_model, d_model))
        return {
            # weights stored transposed (in, out) and bf16 so kernels do x @ w on the MXU
            "wqk_t": jnp.concatenate([wq, wk], axis=1).astype(bf16),          # (E, 2E)
            "bqk": jnp.concatenate([zeros(d_model) * scale, zeros(d_model)], axis=1),
            "wv_t": w(k2, (d_model, d_model)).astype(bf16),
            "bv": zeros(d_model),
            "wo_t": w(k3, (d_model, d_model)).astype(bf16),
            "bo": zeros(d_model),
        }

    def cross_mha(k0, k1, k2, k3):
        return {
            "wq_t": (w(k0, (d_model, d_model)) * scale).astype(bf16),
            "bq": zeros(d_model) * scale,
            "wk_t": w(k1, (d_model, d_model)).astype(bf16),
            "bk": zeros(d_model),
            "wv_t": w(k2, (d_model, d_model)).astype(bf16),
            "bv": zeros(d_model),
            "wo_t": w(k3, (d_model, d_model)).astype(bf16),
            "bo": zeros(d_model),
        }

    return {
        "self_attn": self_mha(ks[0], ks[1], ks[2], ks[3]),
        "cross_attn": cross_mha(ks[4], ks[5], ks[6], ks[7]),
        "w1_t": w(ks[8], (d_model, dim_feedforward)).astype(bf16),
        "b1": zeros(dim_feedforward),
        "w2_t": w(ks[9], (dim_feedforward, d_model)).astype(bf16),
        "b2": zeros(d_model),
        "ln1_g": ones(d_model), "ln1_b": zeros(d_model),
        "ln2_g": ones(d_model), "ln2_b": zeros(d_model),
        "ln3_g": ones(d_model), "ln3_b": zeros(d_model),
    }


# ---------------------------------- main --------------------------------------

if __name__ == "__main__":
    d_model = 128    # full lane width so the demo exercises realistic layouts, still small
    nhead = 4
    dim_feedforward = 256
    L = 8            # tgt (query) sequence length
    S = 16           # memory sequence length
    N = 4            # batch

    key = jax.random.PRNGKey(0)
    k_t, k_m, k_qp, k_p, k_w = jax.random.split(key, 5)

    tgt = jax.random.normal(k_t, (L, N, d_model), jnp.float32)
    memory = jax.random.normal(k_m, (S, N, d_model), jnp.float32)
    query_pos = jax.random.normal(k_qp, (L, N, d_model), jnp.float32)
    pos = jax.random.normal(k_p, (S, N, d_model), jnp.float32)

    params = init_params(k_w, d_model, nhead, dim_feedforward)

    fwd = jax.jit(functools.partial(transformer_decoder_layer, nhead=nhead))
    out = fwd(tgt, memory, params, pos=pos, query_pos=query_pos)
    jax.block_until_ready(out)

    assert out.shape == (L, N, d_model)
    assert jnp.all(jnp.isfinite(out))
    print("KERNEL_OK")
</pallas_src>

<mosaic_0001>
module attributes {stable_mosaic.version = 11 : i64} {
  func.func @_mha_ln_kernel(%arg0: i32, %arg1: memref<2x8x128xf32, #tpu.memory_space<vmem>>, %arg2: memref<2x8x128xf32, #tpu.memory_space<vmem>>, %arg3: memref<2x16x128xf32, #tpu.memory_space<vmem>>, %arg4: memref<2x16x128xf32, #tpu.memory_space<vmem>>, %arg5: memref<128x128xbf16, #tpu.memory_space<vmem>>, %arg6: memref<1x128xf32, #tpu.memory_space<vmem>>, %arg7: memref<128x128xbf16, #tpu.memory_space<vmem>>, %arg8: memref<1x128xf32, #tpu.memory_space<vmem>>, %arg9: memref<128x128xbf16, #tpu.memory_space<vmem>>, %arg10: memref<1x128xf32, #tpu.memory_space<vmem>>, %arg11: memref<128x128xbf16, #tpu.memory_space<vmem>>, %arg12: memref<1x128xf32, #tpu.memory_space<vmem>>, %arg13: memref<1x128xf32, #tpu.memory_space<vmem>>, %arg14: memref<1x128xf32, #tpu.memory_space<vmem>>, %arg15: memref<2x8x128xf32, #tpu.memory_space<vmem>>) attributes {dimension_semantics = [#tpu.dimension_semantics<parallel>], iteration_bounds = array<i64: 2>, scalar_prefetch = 0 : i64, scratch_operands = 0 : i64, tpu.core_type = #tpu.core_type<tc>, window_params = [{transform_indices = @transform_0, window_bounds = array<i64: 2, 8, 128>}, {transform_indices = @transform_1, window_bounds = array<i64: 2, 8, 128>}, {transform_indices = @transform_2, window_bounds = array<i64: 2, 16, 128>}, {transform_indices = @transform_3, window_bounds = array<i64: 2, 16, 128>}, {pipeline_mode = #tpu.pipeline_mode<synchronous>, transform_indices = @transform_4, window_bounds = array<i64: 128, 128>}, {pipeline_mode = #tpu.pipeline_mode<synchronous>, transform_indices = @transform_5, window_bounds = array<i64: 1, 128>}, {pipeline_mode = #tpu.pipeline_mode<synchronous>, transform_indices = @transform_6, window_bounds = array<i64: 128, 128>}, {pipeline_mode = #tpu.pipeline_mode<synchronous>, transform_indices = @transform_7, window_bounds = array<i64: 1, 128>}, {pipeline_mode = #tpu.pipeline_mode<synchronous>, transform_indices = @transform_8, window_bounds = array<i64: 128, 128>}, {pipeline_mode = #tpu.pipeline_mode<synchronous>, transform_indices = @transform_9, window_bounds = array<i64: 1, 128>}, {pipeline_mode = #tpu.pipeline_mode<synchronous>, transform_indices = @transform_10, window_bounds = array<i64: 128, 128>}, {pipeline_mode = #tpu.pipeline_mode<synchronous>, transform_indices = @transform_11, window_bounds = array<i64: 1, 128>}, {pipeline_mode = #tpu.pipeline_mode<synchronous>, transform_indices = @transform_12, window_bounds = array<i64: 1, 128>}, {pipeline_mode = #tpu.pipeline_mode<synchronous>, transform_indices = @transform_13, window_bounds = array<i64: 1, 128>}, {transform_indices = @transform_14, window_bounds = array<i64: 2, 8, 128>}]} {
    %c0 = arith.constant 0 : index
    %c0_0 = arith.constant 0 : index
    %c0_1 = arith.constant 0 : index
    %0 = vector.load %arg1[%c0, %c0_0, %c0_1] : memref<2x8x128xf32, #tpu.memory_space<vmem>>, vector<2x8x128xf32>
    %1 = vector.shape_cast %0 : vector<2x8x128xf32> to vector<16x128xf32>
    %c0_2 = arith.constant 0 : index
    %c0_3 = arith.constant 0 : index
    %c0_4 = arith.constant 0 : index
    %2 = vector.load %arg2[%c0_2, %c0_3, %c0_4] : memref<2x8x128xf32, #tpu.memory_space<vmem>>, vector<2x8x128xf32>
    %3 = arith.addf %0, %2 : vector<2x8x128xf32>
    %4 = vector.shape_cast %3 : vector<2x8x128xf32> to vector<16x128xf32>
    %5 = arith.truncf %4 : vector<16x128xf32> to vector<16x128xbf16>
    %c0_5 = arith.constant 0 : index
    %c0_6 = arith.constant 0 : index
    %c0_7 = arith.constant 0 : index
    %6 = vector.load %arg3[%c0_5, %c0_6, %c0_7] : memref<2x16x128xf32, #tpu.memory_space<vmem>>, vector<2x16x128xf32>
    %c0_8 = arith.constant 0 : index
    %c0_9 = arith.constant 0 : index
    %c0_10 = arith.constant 0 : index
    %7 = vector.load %arg4[%c0_8, %c0_9, %c0_10] : memref<2x16x128xf32, #tpu.memory_space<vmem>>, vector<2x16x128xf32>
    %8 = arith.addf %6, %7 : vector<2x16x128xf32>
    %9 = vector.shape_cast %8 : vector<2x16x128xf32> to vector<32x128xf32>
    %10 = arith.truncf %9 : vector<32x128xf32> to vector<32x128xbf16>
    %11 = vector.shape_cast %6 : vector<2x16x128xf32> to vector<32x128xf32>
    %12 = arith.truncf %11 : vector<32x128xf32> to vector<32x128xbf16>
    %c0_11 = arith.constant 0 : index
    %c0_12 = arith.constant 0 : index
    %13 = vector.load %arg5[%c0_11, %c0_12] : memref<128x128xbf16, #tpu.memory_space<vmem>>, vector<128x128xbf16>
    %cst = arith.constant dense<0.000000e+00> : vector<16x128xf32>
    %14 = tpu.matmul %5, %13, %cst {dimension_numbers = #tpu.dot_dimension_numbers<[1], [0], [0], [1], [0, 0, 1, 1], [], []>} : vector<16x128xbf16>, vector<128x128xbf16>, vector<16x128xf32> -> vector<16x128xf32>
    %c0_13 = arith.constant 0 : index
    %c0_14 = arith.constant 0 : index
    %15 = vector.load %arg6[%c0_13, %c0_14] : memref<1x128xf32, #tpu.memory_space<vmem>>, vector<1x128xf32>
    %16 = vector.broadcast %15 : vector<1x128xf32> to vector<16x128xf32>
    %17 = arith.addf %14, %16 : vector<16x128xf32>
    %c0_15 = arith.constant 0 : index
    %c0_16 = arith.constant 0 : index
    %18 = vector.load %arg7[%c0_15, %c0_16] : memref<128x128xbf16, #tpu.memory_space<vmem>>, vector<128x128xbf16>
    %cst_17 = arith.constant dense<0.000000e+00> : vector<32x128xf32>
    %19 = tpu.matmul %10, %18, %cst_17 {dimension_numbers = #tpu.dot_dimension_numbers<[1], [0], [0], [1], [0, 0, 1, 1], [], []>} : vector<32x128xbf16>, vector<128x128xbf16>, vector<32x128xf32> -> vector<32x128xf32>
    %c0_18 = arith.constant 0 : index
    %c0_19 = arith.constant 0 : index
    %20 = vector.load %arg8[%c0_18, %c0_19] : memref<1x128xf32, #tpu.memory_space<vmem>>, vector<1x128xf32>
    %21 = vector.broadcast %20 : vector<1x128xf32> to vector<32x128xf32>
    %22 = arith.addf %19, %21 : vector<32x128xf32>
    %c0_20 = arith.constant 0 : index
    %c0_21 = arith.constant 0 : index
    %23 = vector.load %arg9[%c0_20, %c0_21] : memref<128x128xbf16, #tpu.memory_space<vmem>>, vector<128x128xbf16>
    %cst_22 = arith.constant dense<0.000000e+00> : vector<32x128xf32>
    %24 = tpu.matmul %12, %23, %cst_22 {dimension_numbers = #tpu.dot_dimension_numbers<[1], [0], [0], [1], [0, 0, 1, 1], [], []>} : vector<32x128xbf16>, vector<128x128xbf16>, vector<32x128xf32> -> vector<32x128xf32>
    %c0_23 = arith.constant 0 : index
    %c0_24 = arith.constant 0 : index
    %25 = vector.load %arg10[%c0_23, %c0_24] : memref<1x128xf32, #tpu.memory_space<vmem>>, vector<1x128xf32>
    %26 = vector.broadcast %25 : vector<1x128xf32> to vector<32x128xf32>
    %27 = arith.addf %24, %26 : vector<32x128xf32>
    %28 = vector.extract_strided_slice %17 {offsets = [0, 0], sizes = [8, 32], strides = [1, 1]} : vector<16x128xf32> to vector<8x32xf32>
    %29 = vector.extract_strided_slice %17 {offsets = [0, 32], sizes = [8, 32], strides = [1, 1]} : vector<16x128xf32> to vector<8x32xf32>
    %30 = vector.extract_strided_slice %17 {offsets = [0, 64], sizes = [8, 32], strides = [1, 1]} : vector<16x128xf32> to vector<8x32xf32>
    %31 = vector.extract_strided_slice %17 {offsets = [0, 96], sizes = [8, 32], strides = [1, 1]} : vector<16x128xf32> to vector<8x32xf32>
    %32 = vector.extract_strided_slice %17 {offsets = [8, 0], sizes = [8, 32], strides = [1, 1]} : vector<16x128xf32> to vector<8x32xf32>
    %33 = vector.extract_strided_slice %17 {offsets = [8, 32], sizes = [8, 32], strides = [1, 1]} : vector<16x128xf32> to vector<8x32xf32>
    %34 = vector.extract_strided_slice %17 {offsets = [8, 64], sizes = [8, 32], strides = [1, 1]} : vector<16x128xf32> to vector<8x32xf32>
    %35 = vector.extract_strided_slice %17 {offsets = [8, 96], sizes = [8, 32], strides = [1, 1]} : vector<16x128xf32> to vector<8x32xf32>
    %36 = vector.shape_cast %28 : vector<8x32xf32> to vector<1x8x32xf32>
    %37 = vector.shape_cast %29 : vector<8x32xf32> to vector<1x8x32xf32>
    %38 = vector.shape_cast %30 : vector<8x32xf32> to vector<1x8x32xf32>
    %39 = vector.shape_cast %31 : vector<8x32xf32> to vector<1x8x32xf32>
    %40 = vector.shape_cast %32 : vector<8x32xf32> to vector<1x8x32xf32>
    %41 = vector.shape_cast %33 : vector<8x32xf32> to vector<1x8x32xf32>
    %42 = vector.shape_cast %34 : vector<8x32xf32> to vector<1x8x32xf32>
    %43 = vector.shape_cast %35 : vector<8x32xf32> to vector<1x8x32xf32>
    %44 = tpu.concatenate %36, %37, %38, %39, %40, %41, %42, %43 in 0 : vector<1x8x32xf32>, vector<1x8x32xf32>, vector<1x8x32xf32>, vector<1x8x32xf32>, vector<1x8x32xf32>, vector<1x8x32xf32>, vector<1x8x32xf32>, vector<1x8x32xf32> -> vector<8x8x32xf32>
    %45 = arith.truncf %44 : vector<8x8x32xf32> to vector<8x8x32xbf16>
    %46 = vector.extract_strided_slice %22 {offsets = [0, 0], sizes = [16, 32], strides = [1, 1]} : vector<32x128xf32> to vector<16x32xf32>
    %47 = vector.extract_strided_slice %22 {offsets = [0, 32], sizes = [16, 32], strides = [1, 1]} : vector<32x128xf32> to vector<16x32xf32>
    %48 = vector.extract_strided_slice %22 {offsets = [0, 64], sizes = [16, 32], strides = [1, 1]} : vector<32x128xf32> to vector<16x32xf32>
    %49 = vector.extract_strided_slice %22 {offsets = [0, 96], sizes = [16, 32], strides = [1, 1]} : vector<32x128xf32> to vector<16x32xf32>
    %50 = vector.extract_strided_slice %22 {offsets = [16, 0], sizes = [16, 32], strides = [1, 1]} : vector<32x128xf32> to vector<16x32xf32>
    %51 = vector.extract_strided_slice %22 {offsets = [16, 32], sizes = [16, 32], strides = [1, 1]} : vector<32x128xf32> to vector<16x32xf32>
    %52 = vector.extract_strided_slice %22 {offsets = [16, 64], sizes = [16, 32], strides = [1, 1]} : vector<32x128xf32> to vector<16x32xf32>
    %53 = vector.extract_strided_slice %22 {offsets = [16, 96], sizes = [16, 32], strides = [1, 1]} : vector<32x128xf32> to vector<16x32xf32>
    %54 = vector.shape_cast %46 : vector<16x32xf32> to vector<1x16x32xf32>
    %55 = vector.shape_cast %47 : vector<16x32xf32> to vector<1x16x32xf32>
    %56 = vector.shape_cast %48 : vector<16x32xf32> to vector<1x16x32xf32>
    %57 = vector.shape_cast %49 : vector<16x32xf32> to vector<1x16x32xf32>
    %58 = vector.shape_cast %50 : vector<16x32xf32> to vector<1x16x32xf32>
    %59 = vector.shape_cast %51 : vector<16x32xf32> to vector<1x16x32xf32>
    %60 = vector.shape_cast %52 : vector<16x32xf32> to vector<1x16x32xf32>
    %61 = vector.shape_cast %53 : vector<16x32xf32> to vector<1x16x32xf32>
    %62 = tpu.concatenate %54, %55, %56, %57, %58, %59, %60, %61 in 0 : vector<1x16x32xf32>, vector<1x16x32xf32>, vector<1x16x32xf32>, vector<1x16x32xf32>, vector<1x16x32xf32>, vector<1x16x32xf32>, vector<1x16x32xf32>, vector<1x16x32xf32> -> vector<8x16x32xf32>
    %63 = arith.truncf %62 : vector<8x16x32xf32> to vector<8x16x32xbf16>
    %64 = vector.extract_strided_slice %27 {offsets = [0, 0], sizes = [16, 32], strides = [1, 1]} : vector<32x128xf32> to vector<16x32xf32>
    %65 = vector.extract_strided_slice %27 {offsets = [0, 32], sizes = [16, 32], strides = [1, 1]} : vector<32x128xf32> to vector<16x32xf32>
    %66 = vector.extract_strided_slice %27 {offsets = [0, 64], sizes = [16, 32], strides = [1, 1]} : vector<32x128xf32> to vector<16x32xf32>
    %67 = vector.extract_strided_slice %27 {offsets = [0, 96], sizes = [16, 32], strides = [1, 1]} : vector<32x128xf32> to vector<16x32xf32>
    %68 = vector.extract_strided_slice %27 {offsets = [16, 0], sizes = [16, 32], strides = [1, 1]} : vector<32x128xf32> to vector<16x32xf32>
    %69 = vector.extract_strided_slice %27 {offsets = [16, 32], sizes = [16, 32], strides = [1, 1]} : vector<32x128xf32> to vector<16x32xf32>
    %70 = vector.extract_strided_slice %27 {offsets = [16, 64], sizes = [16, 32], strides = [1, 1]} : vector<32x128xf32> to vector<16x32xf32>
    %71 = vector.extract_strided_slice %27 {offsets = [16, 96], sizes = [16, 32], strides = [1, 1]} : vector<32x128xf32> to vector<16x32xf32>
    %72 = vector.shape_cast %64 : vector<16x32xf32> to vector<1x16x32xf32>
    %73 = vector.shape_cast %65 : vector<16x32xf32> to vector<1x16x32xf32>
    %74 = vector.shape_cast %66 : vector<16x32xf32> to vector<1x16x32xf32>
    %75 = vector.shape_cast %67 : vector<16x32xf32> to vector<1x16x32xf32>
    %76 = vector.shape_cast %68 : vector<16x32xf32> to vector<1x16x32xf32>
    %77 = vector.shape_cast %69 : vector<16x32xf32> to vector<1x16x32xf32>
    %78 = vector.shape_cast %70 : vector<16x32xf32> to vector<1x16x32xf32>
    %79 = vector.shape_cast %71 : vector<16x32xf32> to vector<1x16x32xf32>
    %80 = tpu.concatenate %72, %73, %74, %75, %76, %77, %78, %79 in 0 : vector<1x16x32xf32>, vector<1x16x32xf32>, vector<1x16x32xf32>, vector<1x16x32xf32>, vector<1x16x32xf32>, vector<1x16x32xf32>, vector<1x16x32xf32>, vector<1x16x32xf32> -> vector<8x16x32xf32>
    %81 = arith.truncf %80 : vector<8x16x32xf32> to vector<8x16x32xbf16>
    "tpu.trace_start"() <{level = 10 : i32, message = "nqd,nkd->nqk"}> : () -> ()
    %cst_25 = arith.constant dense<0.000000e+00> : vector<8x8x16xf32>
    %82 = tpu.matmul %45, %63, %cst_25 {dimension_numbers = #tpu.dot_dimension_numbers<[2], [2], [1], [1], [0, 0, 0, 1, 1, 1], [0], [0]>} : vector<8x8x32xbf16>, vector<8x16x32xbf16>, vector<8x8x16xf32> -> vector<8x8x16xf32>
    "tpu.trace_stop"() : () -> ()
    %cst_26 = arith.constant dense<0xFF800000> : vector<8x8xf32>
    %83 = vector.multi_reduction <maximumf>, %82, %cst_26 [2] : vector<8x8x16xf32> to vector<8x8xf32>
    %84 = vector.shape_cast %83 : vector<8x8xf32> to vector<8x8x1xf32>
    %85 = vector.broadcast %84 : vector<8x8x1xf32> to vector<8x8x16xf32>
    %86 = arith.subf %82, %85 : vector<8x8x16xf32>
    %87 = math.exp %86 : vector<8x8x16xf32>
    %cst_27 = arith.constant dense<0.000000e+00> : vector<8x8xf32>
    %88 = vector.multi_reduction <add>, %87, %cst_27 [2] : vector<8x8x16xf32> to vector<8x8xf32>
    %89 = vector.shape_cast %88 : vector<8x8xf32> to vector<8x8x1xf32>
    %90 = vector.broadcast %89 : vector<8x8x1xf32> to vector<8x8x16xf32>
    %91 = arith.divf %87, %90 : vector<8x8x16xf32>
    %92 = arith.truncf %91 : vector<8x8x16xf32> to vector<8x8x16xbf16>
    "tpu.trace_start"() <{level = 10 : i32, message = "nqk,nkd->nqd"}> : () -> ()
    %cst_28 = arith.constant dense<0.000000e+00> : vector<8x8x32xf32>
    %93 = tpu.matmul %92, %81, %cst_28 {dimension_numbers = #tpu.dot_dimension_numbers<[2], [1], [1], [2], [0, 0, 0, 1, 1, 2], [0], [0]>} : vector<8x8x16xbf16>, vector<8x16x32xbf16>, vector<8x8x32xf32> -> vector<8x8x32xf32>
    "tpu.trace_stop"() : () -> ()
    %94 = vector.extract_strided_slice %93 {offsets = [0, 0, 0], sizes = [1, 8, 32], strides = [1, 1, 1]} : vector<8x8x32xf32> to vector<1x8x32xf32>
    %95 = vector.shape_cast %94 : vector<1x8x32xf32> to vector<8x32xf32>
    %96 = vector.extract_strided_slice %93 {offsets = [1, 0, 0], sizes = [1, 8, 32], strides = [1, 1, 1]} : vector<8x8x32xf32> to vector<1x8x32xf32>
    %97 = vector.shape_cast %96 : vector<1x8x32xf32> to vector<8x32xf32>
    %98 = vector.extract_strided_slice %93 {offsets = [2, 0, 0], sizes = [1, 8, 32], strides = [1, 1, 1]} : vector<8x8x32xf32> to vector<1x8x32xf32>
    %99 = vector.shape_cast %98 : vector<1x8x32xf32> to vector<8x32xf32>
    %100 = vector.extract_strided_slice %93 {offsets = [3, 0, 0], sizes = [1, 8, 32], strides = [1, 1, 1]} : vector<8x8x32xf32> to vector<1x8x32xf32>
    %101 = vector.shape_cast %100 : vector<1x8x32xf32> to vector<8x32xf32>
    %102 = tpu.concatenate %95, %97, %99, %101 in 1 : vector<8x32xf32>, vector<8x32xf32>, vector<8x32xf32>, vector<8x32xf32> -> vector<8x128xf32>
    %103 = vector.extract_strided_slice %93 {offsets = [4, 0, 0], sizes = [1, 8, 32], strides = [1, 1, 1]} : vector<8x8x32xf32> to vector<1x8x32xf32>
    %104 = vector.shape_cast %103 : vector<1x8x32xf32> to vector<8x32xf32>
    %105 = vector.extract_strided_slice %93 {offsets = [5, 0, 0], sizes = [1, 8, 32], strides = [1, 1, 1]} : vector<8x8x32xf32> to vector<1x8x32xf32>
    %106 = vector.shape_cast %105 : vector<1x8x32xf32> to vector<8x32xf32>
    %107 = vector.extract_strided_slice %93 {offsets = [6, 0, 0], sizes = [1, 8, 32], strides = [1, 1, 1]} : vector<8x8x32xf32> to vector<1x8x32xf32>
    %108 = vector.shape_cast %107 : vector<1x8x32xf32> to vector<8x32xf32>
    %109 = vector.extract_strided_slice %93 {offsets = [7, 0, 0], sizes = [1, 8, 32], strides = [1, 1, 1]} : vector<8x8x32xf32> to vector<1x8x32xf32>
    %110 = vector.shape_cast %109 : vector<1x8x32xf32> to vector<8x32xf32>
    %111 = tpu.concatenate %104, %106, %108, %110 in 1 : vector<8x32xf32>, vector<8x32xf32>, vector<8x32xf32>, vector<8x32xf32> -> vector<8x128xf32>
    %112 = tpu.concatenate %102, %111 in 0 : vector<8x128xf32>, vector<8x128xf32> -> vector<16x128xf32>
    %113 = arith.truncf %112 : vector<16x128xf32> to vector<16x128xbf16>
    %c0_29 = arith.constant 0 : index
    %c0_30 = arith.constant 0 : index
    %114 = vector.load %arg11[%c0_29, %c0_30] : memref<128x128xbf16, #tpu.memory_space<vmem>>, vector<128x128xbf16>
    %cst_31 = arith.constant dense<0.000000e+00> : vector<16x128xf32>
    %115 = tpu.matmul %113, %114, %cst_31 {dimension_numbers = #tpu.dot_dimension_numbers<[1], [0], [0], [1], [0, 0, 1, 1], [], []>} : vector<16x128xbf16>, vector<128x128xbf16>, vector<16x128xf32> -> vector<16x128xf32>
    %c0_32 = arith.constant 0 : index
    %c0_33 = arith.constant 0 : index
    %116 = vector.load %arg12[%c0_32, %c0_33] : memref<1x128xf32, #tpu.memory_space<vmem>>, vector<1x128xf32>
    %117 = vector.broadcast %116 : vector<1x128xf32> to vector<16x128xf32>
    %118 = arith.addf %115, %117 : vector<16x128xf32>
    %119 = arith.addf %1, %118 : vector<16x128xf32>
    %c0_34 = arith.constant 0 : index
    %c0_35 = arith.constant 0 : index
    %120 = vector.load %arg13[%c0_34, %c0_35] : memref<1x128xf32, #tpu.memory_space<vmem>>, vector<1x128xf32>
    %c0_36 = arith.constant 0 : index
    %c0_37 = arith.constant 0 : index
    %121 = vector.load %arg14[%c0_36, %c0_37] : memref<1x128xf32, #tpu.memory_space<vmem>>, vector<1x128xf32>
    %cst_38 = arith.constant dense<0.000000e+00> : vector<16xf32>
    %122 = vector.multi_reduction <add>, %119, %cst_38 [1] : vector<16x128xf32> to vector<16xf32>
    %123 = vector.shape_cast %122 : vector<16xf32> to vector<16x1xf32>
    %cst_39 = arith.constant 1.280000e+02 : f32
    %124 = vector.broadcast %cst_39 : f32 to vector<16x1xf32>
    %125 = arith.divf %123, %124 : vector<16x1xf32>
    %126 = vector.broadcast %125 : vector<16x1xf32> to vector<16x128xf32>
    %127 = arith.subf %119, %126 : vector<16x128xf32>
    %128 = arith.mulf %127, %127 : vector<16x128xf32>
    %cst_40 = arith.constant dense<0.000000e+00> : vector<16xf32>
    %129 = vector.multi_reduction <add>, %128, %cst_40 [1] : vector<16x128xf32> to vector<16xf32>
    %130 = vector.shape_cast %129 : vector<16xf32> to vector<16x1xf32>
    %cst_41 = arith.constant 1.280000e+02 : f32
    %131 = vector.broadcast %cst_41 : f32 to vector<16x1xf32>
    %132 = arith.divf %130, %131 : vector<16x1xf32>
    %133 = vector.broadcast %125 : vector<16x1xf32> to vector<16x128xf32>
    %134 = arith.subf %119, %133 : vector<16x128xf32>
    %cst_42 = arith.constant 9.99999974E-6 : f32
    %135 = vector.broadcast %cst_42 : f32 to vector<16x1xf32>
    %136 = arith.addf %132, %135 : vector<16x1xf32>
    %137 = math.rsqrt %136 : vector<16x1xf32>
    %138 = vector.broadcast %137 : vector<16x1xf32> to vector<16x128xf32>
    %139 = arith.mulf %134, %138 : vector<16x128xf32>
    %140 = vector.broadcast %120 : vector<1x128xf32> to vector<16x128xf32>
    %141 = arith.mulf %139, %140 : vector<16x128xf32>
    %142 = vector.broadcast %121 : vector<1x128xf32> to vector<16x128xf32>
    %143 = arith.addf %141, %142 : vector<16x128xf32>
    %144 = vector.shape_cast %143 : vector<16x128xf32> to vector<2x8x128xf32>
    %c0_43 = arith.constant 0 : index
    %c0_44 = arith.constant 0 : index
    %c0_45 = arith.constant 0 : index
    %145 = vector.load %arg15[%c0_43, %c0_44, %c0_45] : memref<2x8x128xf32, #tpu.memory_space<vmem>>, vector<2x8x128xf32>
    tpu.vector_store %arg15[%c0_43, %c0_44, %c0_45], %144 {strides = array<i32>} : memref<2x8x128xf32, #tpu.memory_space<vmem>>, vector<2x8x128xf32>,
    return
  }
  func.func @transform_0(%arg0: i32) -> (i32, i32, i32) {
    %c0_i32 = arith.constant 0 : i32
    %c0_i32_0 = arith.constant 0 : i32
    %c0_i32_1 = arith.constant 0 : i32
    return %arg0, %c0_i32, %c0_i32_0 : i32, i32, i32
  }
  func.func @transform_1(%arg0: i32) -> (i32, i32, i32) {
    %c0_i32 = arith.constant 0 : i32
    %c0_i32_0 = arith.constant 0 : i32
    %c0_i32_1 = arith.constant 0 : i32
    return %arg0, %c0_i32, %c0_i32_0 : i32, i32, i32
  }
  func.func @transform_2(%arg0: i32) -> (i32, i32, i32) {
    %c0_i32 = arith.constant 0 : i32
    %c0_i32_0 = arith.constant 0 : i32
    %c0_i32_1 = arith.constant 0 : i32
    return %arg0, %c0_i32, %c0_i32_0 : i32, i32, i32
  }
  func.func @transform_3(%arg0: i32) -> (i32, i32, i32) {
    %c0_i32 = arith.constant 0 : i32
    %c0_i32_0 = arith.constant 0 : i32
    %c0_i32_1 = arith.constant 0 : i32
    return %arg0, %c0_i32, %c0_i32_0 : i32, i32, i32
  }
  func.func @transform_4(%arg0: i32) -> (i32, i32) {
    %c0_i32 = arith.constant 0 : i32
    %c0_i32_0 = arith.constant 0 : i32
    %c0_i32_1 = arith.constant 0 : i32
    return %c0_i32, %c0_i32_0 : i32, i32
  }
  func.func @transform_5(%arg0: i32) -> (i32, i32) {
    %c0_i32 = arith.constant 0 : i32
    %c0_i32_0 = arith.constant 0 : i32
    %c0_i32_1 = arith.constant 0 : i32
    return %c0_i32, %c0_i32_0 : i32, i32
  }
  func.func @transform_6(%arg0: i32) -> (i32, i32) {
    %c0_i32 = arith.constant 0 : i32
    %c0_i32_0 = arith.constant 0 : i32
    %c0_i32_1 = arith.constant 0 : i32
    return %c0_i32, %c0_i32_0 : i32, i32
  }
  func.func @transform_7(%arg0: i32) -> (i32, i32) {
    %c0_i32 = arith.constant 0 : i32
    %c0_i32_0 = arith.constant 0 : i32
    %c0_i32_1 = arith.constant 0 : i32
    return %c0_i32, %c0_i32_0 : i32, i32
  }
  func.func @transform_8(%arg0: i32) -> (i32, i32) {
    %c0_i32 = arith.constant 0 : i32
    %c0_i32_0 = arith.constant 0 : i32
    %c0_i32_1 = arith.constant 0 : i32
    return %c0_i32, %c0_i32_0 : i32, i32
  }
  func.func @transform_9(%arg0: i32) -> (i32, i32) {
    %c0_i32 = arith.constant 0 : i32
    %c0_i32_0 = arith.constant 0 : i32
    %c0_i32_1 = arith.constant 0 : i32
    return %c0_i32, %c0_i32_0 : i32, i32
  }
  func.func @transform_10(%arg0: i32) -> (i32, i32) {
    %c0_i32 = arith.constant 0 : i32
    %c0_i32_0 = arith.constant 0 : i32
    %c0_i32_1 = arith.constant 0 : i32
    return %c0_i32, %c0_i32_0 : i32, i32
  }
  func.func @transform_11(%arg0: i32) -> (i32, i32) {
    %c0_i32 = arith.constant 0 : i32
    %c0_i32_0 = arith.constant 0 : i32
    %c0_i32_1 = arith.constant 0 : i32
    return %c0_i32, %c0_i32_0 : i32, i32
  }
  func.func @transform_12(%arg0: i32) -> (i32, i32) {
    %c0_i32 = arith.constant 0 : i32
    %c0_i32_0 = arith.constant 0 : i32
    %c0_i32_1 = arith.constant 0 : i32
    return %c0_i32, %c0_i32_0 : i32, i32
  }
  func.func @transform_13(%arg0: i32) -> (i32, i32) {
    %c0_i32 = arith.constant 0 : i32
    %c0_i32_0 = arith.constant 0 : i32
    %c0_i32_1 = arith.constant 0 : i32
    return %c0_i32, %c0_i32_0 : i32, i32
  }
  func.func @transform_14(%arg0: i32) -> (i32, i32, i32) {
    %c0_i32 = arith.constant 0 : i32
    %c0_i32_0 = arith.constant 0 : i32
    %c0_i32_1 = arith.constant 0 : i32
    return %arg0, %c0_i32, %c0_i32_0 : i32, i32, i32
  }
}

module attributes {stable_mosaic.version = 11 : i64} {
  func.func @_mha_ln_kernel(%arg0: i32, %arg1: memref<2x8x128xf32, #tpu.memory_space<vmem>>, %arg2: memref<2x8x128xf32, #tpu.memory_space<vmem>>, %arg3: memref<128x256xbf16, #tpu.memory_space<vmem>>, %arg4: memref<1x256xf32, #tpu.memory_space<vmem>>, %arg5: memref<128x128xbf16, #tpu.memory_space<vmem>>, %arg6: memref<1x128xf32, #tpu.memory_space<vmem>>, %arg7: memref<128x128xbf16, #tpu.memory_space<vmem>>, %arg8: memref<1x128xf32, #tpu.memory_space<vmem>>, %arg9: memref<1x128xf32, #tpu.memory_space<vmem>>, %arg10: memref<1x128xf32, #tpu.memory_space<vmem>>, %arg11: memref<2x8x128xf32, #tpu.memory_space<vmem>>) attributes {dimension_semantics = [#tpu.dimension_semantics<parallel>], iteration_bounds = array<i64: 2>, scalar_prefetch = 0 : i64, scratch_operands = 0 : i64, tpu.core_type = #tpu.core_type<tc>, window_params = [{transform_indices = @transform_0, window_bounds = array<i64: 2, 8, 128>}, {transform_indices = @transform_1, window_bounds = array<i64: 2, 8, 128>}, {pipeline_mode = #tpu.pipeline_mode<synchronous>, transform_indices = @transform_2, window_bounds = array<i64: 128, 256>}, {pipeline_mode = #tpu.pipeline_mode<synchronous>, transform_indices = @transform_3, window_bounds = array<i64: 1, 256>}, {pipeline_mode = #tpu.pipeline_mode<synchronous>, transform_indices = @transform_4, window_bounds = array<i64: 128, 128>}, {pipeline_mode = #tpu.pipeline_mode<synchronous>, transform_indices = @transform_5, window_bounds = array<i64: 1, 128>}, {pipeline_mode = #tpu.pipeline_mode<synchronous>, transform_indices = @transform_6, window_bounds = array<i64: 128, 128>}, {pipeline_mode = #tpu.pipeline_mode<synchronous>, transform_indices = @transform_7, window_bounds = array<i64: 1, 128>}, {pipeline_mode = #tpu.pipeline_mode<synchronous>, transform_indices = @transform_8, window_bounds = array<i64: 1, 128>}, {pipeline_mode = #tpu.pipeline_mode<synchronous>, transform_indices = @transform_9, window_bounds = array<i64: 1, 128>}, {transform_indices = @transform_10, window_bounds = array<i64: 2, 8, 128>}]} {
    %c0 = arith.constant 0 : index
    %c0_0 = arith.constant 0 : index
    %c0_1 = arith.constant 0 : index
    %0 = vector.load %arg1[%c0, %c0_0, %c0_1] : memref<2x8x128xf32, #tpu.memory_space<vmem>>, vector<2x8x128xf32>
    %1 = vector.shape_cast %0 : vector<2x8x128xf32> to vector<16x128xf32>
    %c0_2 = arith.constant 0 : index
    %c0_3 = arith.constant 0 : index
    %c0_4 = arith.constant 0 : index
    %2 = vector.load %arg2[%c0_2, %c0_3, %c0_4] : memref<2x8x128xf32, #tpu.memory_space<vmem>>, vector<2x8x128xf32>
    %3 = arith.addf %0, %2 : vector<2x8x128xf32>
    %4 = vector.shape_cast %3 : vector<2x8x128xf32> to vector<16x128xf32>
    %5 = arith.truncf %4 : vector<16x128xf32> to vector<16x128xbf16>
    %c0_5 = arith.constant 0 : index
    %c0_6 = arith.constant 0 : index
    %6 = vector.load %arg3[%c0_5, %c0_6] : memref<128x256xbf16, #tpu.memory_space<vmem>>, vector<128x256xbf16>
    %cst = arith.constant dense<0.000000e+00> : vector<16x256xf32>
    %7 = tpu.matmul %5, %6, %cst {dimension_numbers = #tpu.dot_dimension_numbers<[1], [0], [0], [1], [0, 0, 1, 1], [], []>} : vector<16x128xbf16>, vector<128x256xbf16>, vector<16x256xf32> -> vector<16x256xf32>
    %c0_7 = arith.constant 0 : index
    %c0_8 = arith.constant 0 : index
    %8 = vector.load %arg4[%c0_7, %c0_8] : memref<1x256xf32, #tpu.memory_space<vmem>>, vector<1x256xf32>
    %9 = vector.broadcast %8 : vector<1x256xf32> to vector<16x256xf32>
    %10 = arith.addf %7, %9 : vector<16x256xf32>
    %11 = vector.extract_strided_slice %10 {offsets = [0, 0], sizes = [16, 128], strides = [1, 1]} : vector<16x256xf32> to vector<16x128xf32>
    %12 = vector.extract_strided_slice %10 {offsets = [0, 128], sizes = [16, 128], strides = [1, 1]} : vector<16x256xf32> to vector<16x128xf32>
    %13 = arith.truncf %1 : vector<16x128xf32> to vector<16x128xbf16>
    %c0_9 = arith.constant 0 : index
    %c0_10 = arith.constant 0 : index
    %14 = vector.load %arg5[%c0_9, %c0_10] : memref<128x128xbf16, #tpu.memory_space<vmem>>, vector<128x128xbf16>
    %cst_11 = arith.constant dense<0.000000e+00> : vector<16x128xf32>
    %15 = tpu.matmul %13, %14, %cst_11 {dimension_numbers = #tpu.dot_dimension_numbers<[1], [0], [0], [1], [0, 0, 1, 1], [], []>} : vector<16x128xbf16>, vector<128x128xbf16>, vector<16x128xf32> -> vector<16x128xf32>
    %c0_12 = arith.constant 0 : index
    %c0_13 = arith.constant 0 : index
    %16 = vector.load %arg6[%c0_12, %c0_13] : memref<1x128xf32, #tpu.memory_space<vmem>>, vector<1x128xf32>
    %17 = vector.broadcast %16 : vector<1x128xf32> to vector<16x128xf32>
    %18 = arith.addf %15, %17 : vector<16x128xf32>
    %19 = vector.extract_strided_slice %11 {offsets = [0, 0], sizes = [8, 32], strides = [1, 1]} : vector<16x128xf32> to vector<8x32xf32>
    %20 = vector.extract_strided_slice %11 {offsets = [0, 32], sizes = [8, 32], strides = [1, 1]} : vector<16x128xf32> to vector<8x32xf32>
    %21 = vector.extract_strided_slice %11 {offsets = [0, 64], sizes = [8, 32], strides = [1, 1]} : vector<16x128xf32> to vector<8x32xf32>
    %22 = vector.extract_strided_slice %11 {offsets = [0, 96], sizes = [8, 32], strides = [1, 1]} : vector<16x128xf32> to vector<8x32xf32>
    %23 = vector.extract_strided_slice %11 {offsets = [8, 0], sizes = [8, 32], strides = [1, 1]} : vector<16x128xf32> to vector<8x32xf32>
    %24 = vector.extract_strided_slice %11 {offsets = [8, 32], sizes = [8, 32], strides = [1, 1]} : vector<16x128xf32> to vector<8x32xf32>
    %25 = vector.extract_strided_slice %11 {offsets = [8, 64], sizes = [8, 32], strides = [1, 1]} : vector<16x128xf32> to vector<8x32xf32>
    %26 = vector.extract_strided_slice %11 {offsets = [8, 96], sizes = [8, 32], strides = [1, 1]} : vector<16x128xf32> to vector<8x32xf32>
    %27 = vector.shape_cast %19 : vector<8x32xf32> to vector<1x8x32xf32>
    %28 = vector.shape_cast %20 : vector<8x32xf32> to vector<1x8x32xf32>
    %29 = vector.shape_cast %21 : vector<8x32xf32> to vector<1x8x32xf32>
    %30 = vector.shape_cast %22 : vector<8x32xf32> to vector<1x8x32xf32>
    %31 = vector.shape_cast %23 : vector<8x32xf32> to vector<1x8x32xf32>
    %32 = vector.shape_cast %24 : vector<8x32xf32> to vector<1x8x32xf32>
    %33 = vector.shape_cast %25 : vector<8x32xf32> to vector<1x8x32xf32>
    %34 = vector.shape_cast %26 : vector<8x32xf32> to vector<1x8x32xf32>
    %35 = tpu.concatenate %27, %28, %29, %30, %31, %32, %33, %34 in 0 : vector<1x8x32xf32>, vector<1x8x32xf32>, vector<1x8x32xf32>, vector<1x8x32xf32>, vector<1x8x32xf32>, vector<1x8x32xf32>, vector<1x8x32xf32>, vector<1x8x32xf32> -> vector<8x8x32xf32>
    %36 = arith.truncf %35 : vector<8x8x32xf32> to vector<8x8x32xbf16>
    %37 = vector.extract_strided_slice %12 {offsets = [0, 0], sizes = [8, 32], strides = [1, 1]} : vector<16x128xf32> to vector<8x32xf32>
    %38 = vector.extract_strided_slice %12 {offsets = [0, 32], sizes = [8, 32], strides = [1, 1]} : vector<16x128xf32> to vector<8x32xf32>
    %39 = vector.extract_strided_slice %12 {offsets = [0, 64], sizes = [8, 32], strides = [1, 1]} : vector<16x128xf32> to vector<8x32xf32>
    %40 = vector.extract_strided_slice %12 {offsets = [0, 96], sizes = [8, 32], strides = [1, 1]} : vector<16x128xf32> to vector<8x32xf32>
    %41 = vector.extract_strided_slice %12 {offsets = [8, 0], sizes = [8, 32], strides = [1, 1]} : vector<16x128xf32> to vector<8x32xf32>
    %42 = vector.extract_strided_slice %12 {offsets = [8, 32], sizes = [8, 32], strides = [1, 1]} : vector<16x128xf32> to vector<8x32xf32>
    %43 = vector.extract_strided_slice %12 {offsets = [8, 64], sizes = [8, 32], strides = [1, 1]} : vector<16x128xf32> to vector<8x32xf32>
    %44 = vector.extract_strided_slice %12 {offsets = [8, 96], sizes = [8, 32], strides = [1, 1]} : vector<16x128xf32> to vector<8x32xf32>
    %45 = vector.shape_cast %37 : vector<8x32xf32> to vector<1x8x32xf32>
    %46 = vector.shape_cast %38 : vector<8x32xf32> to vector<1x8x32xf32>
    %47 = vector.shape_cast %39 : vector<8x32xf32> to vector<1x8x32xf32>
    %48 = vector.shape_cast %40 : vector<8x32xf32> to vector<1x8x32xf32>
    %49 = vector.shape_cast %41 : vector<8x32xf32> to vector<1x8x32xf32>
    %50 = vector.shape_cast %42 : vector<8x32xf32> to vector<1x8x32xf32>
    %51 = vector.shape_cast %43 : vector<8x32xf32> to vector<1x8x32xf32>
    %52 = vector.shape_cast %44 : vector<8x32xf32> to vector<1x8x32xf32>
    %53 = tpu.concatenate %45, %46, %47, %48, %49, %50, %51, %52 in 0 : vector<1x8x32xf32>, vector<1x8x32xf32>, vector<1x8x32xf32>, vector<1x8x32xf32>, vector<1x8x32xf32>, vector<1x8x32xf32>, vector<1x8x32xf32>, vector<1x8x32xf32> -> vector<8x8x32xf32>
    %54 = arith.truncf %53 : vector<8x8x32xf32> to vector<8x8x32xbf16>
    %55 = vector.extract_strided_slice %18 {offsets = [0, 0], sizes = [8, 32], strides = [1, 1]} : vector<16x128xf32> to vector<8x32xf32>
    %56 = vector.extract_strided_slice %18 {offsets = [0, 32], sizes = [8, 32], strides = [1, 1]} : vector<16x128xf32> to vector<8x32xf32>
    %57 = vector.extract_strided_slice %18 {offsets = [0, 64], sizes = [8, 32], strides = [1, 1]} : vector<16x128xf32> to vector<8x32xf32>
    %58 = vector.extract_strided_slice %18 {offsets = [0, 96], sizes = [8, 32], strides = [1, 1]} : vector<16x128xf32> to vector<8x32xf32>
    %59 = vector.extract_strided_slice %18 {offsets = [8, 0], sizes = [8, 32], strides = [1, 1]} : vector<16x128xf32> to vector<8x32xf32>
    %60 = vector.extract_strided_slice %18 {offsets = [8, 32], sizes = [8, 32], strides = [1, 1]} : vector<16x128xf32> to vector<8x32xf32>
    %61 = vector.extract_strided_slice %18 {offsets = [8, 64], sizes = [8, 32], strides = [1, 1]} : vector<16x128xf32> to vector<8x32xf32>
    %62 = vector.extract_strided_slice %18 {offsets = [8, 96], sizes = [8, 32], strides = [1, 1]} : vector<16x128xf32> to vector<8x32xf32>
    %63 = vector.shape_cast %55 : vector<8x32xf32> to vector<1x8x32xf32>
    %64 = vector.shape_cast %56 : vector<8x32xf32> to vector<1x8x32xf32>
    %65 = vector.shape_cast %57 : vector<8x32xf32> to vector<1x8x32xf32>
    %66 = vector.shape_cast %58 : vector<8x32xf32> to vector<1x8x32xf32>
    %67 = vector.shape_cast %59 : vector<8x32xf32> to vector<1x8x32xf32>
    %68 = vector.shape_cast %60 : vector<8x32xf32> to vector<1x8x32xf32>
    %69 = vector.shape_cast %61 : vector<8x32xf32> to vector<1x8x32xf32>
    %70 = vector.shape_cast %62 : vector<8x32xf32> to vector<1x8x32xf32>
    %71 = tpu.concatenate %63, %64, %65, %66, %67, %68, %69, %70 in 0 : vector<1x8x32xf32>, vector<1x8x32xf32>, vector<1x8x32xf32>, vector<1x8x32xf32>, vector<1x8x32xf32>, vector<1x8x32xf32>, vector<1x8x32xf32>, vector<1x8x32xf32> -> vector<8x8x32xf32>
    %72 = arith.truncf %71 : vector<8x8x32xf32> to vector<8x8x32xbf16>
    "tpu.trace_start"() <{level = 10 : i32, message = "nqd,nkd->nqk"}> : () -> ()
    %cst_14 = arith.constant dense<0.000000e+00> : vector<8x8x8xf32>
    %73 = tpu.matmul %36, %54, %cst_14 {dimension_numbers = #tpu.dot_dimension_numbers<[2], [2], [1], [1], [0, 0, 0, 1, 1, 1], [0], [0]>} : vector<8x8x32xbf16>, vector<8x8x32xbf16>, vector<8x8x8xf32> -> vector<8x8x8xf32>
    "tpu.trace_stop"() : () -> ()
    %cst_15 = arith.constant dense<0xFF800000> : vector<8x8xf32>
    %74 = vector.multi_reduction <maximumf>, %73, %cst_15 [2] : vector<8x8x8xf32> to vector<8x8xf32>
    %75 = vector.shape_cast %74 : vector<8x8xf32> to vector<8x8x1xf32>
    %76 = vector.broadcast %75 : vector<8x8x1xf32> to vector<8x8x8xf32>
    %77 = arith.subf %73, %76 : vector<8x8x8xf32>
    %78 = math.exp %77 : vector<8x8x8xf32>
    %cst_16 = arith.constant dense<0.000000e+00> : vector<8x8xf32>
    %79 = vector.multi_reduction <add>, %78, %cst_16 [2] : vector<8x8x8xf32> to vector<8x8xf32>
    %80 = vector.shape_cast %79 : vector<8x8xf32> to vector<8x8x1xf32>
    %81 = vector.broadcast %80 : vector<8x8x1xf32> to vector<8x8x8xf32>
    %82 = arith.divf %78, %81 : vector<8x8x8xf32>
    %83 = arith.truncf %82 : vector<8x8x8xf32> to vector<8x8x8xbf16>
    "tpu.trace_start"() <{level = 10 : i32, message = "nqk,nkd->nqd"}> : () -> ()
    %cst_17 = arith.constant dense<0.000000e+00> : vector<8x8x32xf32>
    %84 = tpu.matmul %83, %72, %cst_17 {dimension_numbers = #tpu.dot_dimension_numbers<[2], [1], [1], [2], [0, 0, 0, 1, 1, 2], [0], [0]>} : vector<8x8x8xbf16>, vector<8x8x32xbf16>, vector<8x8x32xf32> -> vector<8x8x32xf32>
    "tpu.trace_stop"() : () -> ()
    %85 = vector.extract_strided_slice %84 {offsets = [0, 0, 0], sizes = [1, 8, 32], strides = [1, 1, 1]} : vector<8x8x32xf32> to vector<1x8x32xf32>
    %86 = vector.shape_cast %85 : vector<1x8x32xf32> to vector<8x32xf32>
    %87 = vector.extract_strided_slice %84 {offsets = [1, 0, 0], sizes = [1, 8, 32], strides = [1, 1, 1]} : vector<8x8x32xf32> to vector<1x8x32xf32>
    %88 = vector.shape_cast %87 : vector<1x8x32xf32> to vector<8x32xf32>
    %89 = vector.extract_strided_slice %84 {offsets = [2, 0, 0], sizes = [1, 8, 32], strides = [1, 1, 1]} : vector<8x8x32xf32> to vector<1x8x32xf32>
    %90 = vector.shape_cast %89 : vector<1x8x32xf32> to vector<8x32xf32>
    %91 = vector.extract_strided_slice %84 {offsets = [3, 0, 0], sizes = [1, 8, 32], strides = [1, 1, 1]} : vector<8x8x32xf32> to vector<1x8x32xf32>
    %92 = vector.shape_cast %91 : vector<1x8x32xf32> to vector<8x32xf32>
    %93 = tpu.concatenate %86, %88, %90, %92 in 1 : vector<8x32xf32>, vector<8x32xf32>, vector<8x32xf32>, vector<8x32xf32> -> vector<8x128xf32>
    %94 = vector.extract_strided_slice %84 {offsets = [4, 0, 0], sizes = [1, 8, 32], strides = [1, 1, 1]} : vector<8x8x32xf32> to vector<1x8x32xf32>
    %95 = vector.shape_cast %94 : vector<1x8x32xf32> to vector<8x32xf32>
    %96 = vector.extract_strided_slice %84 {offsets = [5, 0, 0], sizes = [1, 8, 32], strides = [1, 1, 1]} : vector<8x8x32xf32> to vector<1x8x32xf32>
    %97 = vector.shape_cast %96 : vector<1x8x32xf32> to vector<8x32xf32>
    %98 = vector.extract_strided_slice %84 {offsets = [6, 0, 0], sizes = [1, 8, 32], strides = [1, 1, 1]} : vector<8x8x32xf32> to vector<1x8x32xf32>
    %99 = vector.shape_cast %98 : vector<1x8x32xf32> to vector<8x32xf32>
    %100 = vector.extract_strided_slice %84 {offsets = [7, 0, 0], sizes = [1, 8, 32], strides = [1, 1, 1]} : vector<8x8x32xf32> to vector<1x8x32xf32>
    %101 = vector.shape_cast %100 : vector<1x8x32xf32> to vector<8x32xf32>
    %102 = tpu.concatenate %95, %97, %99, %101 in 1 : vector<8x32xf32>, vector<8x32xf32>, vector<8x32xf32>, vector<8x32xf32> -> vector<8x128xf32>
    %103 = tpu.concatenate %93, %102 in 0 : vector<8x128xf32>, vector<8x128xf32> -> vector<16x128xf32>
    %104 = arith.truncf %103 : vector<16x128xf32> to vector<16x128xbf16>
    %c0_18 = arith.constant 0 : index
    %c0_19 = arith.constant 0 : index
    %105 = vector.load %arg7[%c0_18, %c0_19] : memref<128x128xbf16, #tpu.memory_space<vmem>>, vector<128x128xbf16>
    %cst_20 = arith.constant dense<0.000000e+00> : vector<16x128xf32>
    %106 = tpu.matmul %104, %105, %cst_20 {dimension_numbers = #tpu.dot_dimension_numbers<[1], [0], [0], [1], [0, 0, 1, 1], [], []>} : vector<16x128xbf16>, vector<128x128xbf16>, vector<16x128xf32> -> vector<16x128xf32>
    %c0_21 = arith.constant 0 : index
    %c0_22 = arith.constant 0 : index
    %107 = vector.load %arg8[%c0_21, %c0_22] : memref<1x128xf32, #tpu.memory_space<vmem>>, vector<1x128xf32>
    %108 = vector.broadcast %107 : vector<1x128xf32> to vector<16x128xf32>
    %109 = arith.addf %106, %108 : vector<16x128xf32>
    %110 = arith.addf %1, %109 : vector<16x128xf32>
    %c0_23 = arith.constant 0 : index
    %c0_24 = arith.constant 0 : index
    %111 = vector.load %arg9[%c0_23, %c0_24] : memref<1x128xf32, #tpu.memory_space<vmem>>, vector<1x128xf32>
    %c0_25 = arith.constant 0 : index
    %c0_26 = arith.constant 0 : index
    %112 = vector.load %arg10[%c0_25, %c0_26] : memref<1x128xf32, #tpu.memory_space<vmem>>, vector<1x128xf32>
    %cst_27 = arith.constant dense<0.000000e+00> : vector<16xf32>
    %113 = vector.multi_reduction <add>, %110, %cst_27 [1] : vector<16x128xf32> to vector<16xf32>
    %114 = vector.shape_cast %113 : vector<16xf32> to vector<16x1xf32>
    %cst_28 = arith.constant 1.280000e+02 : f32
    %115 = vector.broadcast %cst_28 : f32 to vector<16x1xf32>
    %116 = arith.divf %114, %115 : vector<16x1xf32>
    %117 = vector.broadcast %116 : vector<16x1xf32> to vector<16x128xf32>
    %118 = arith.subf %110, %117 : vector<16x128xf32>
    %119 = arith.mulf %118, %118 : vector<16x128xf32>
    %cst_29 = arith.constant dense<0.000000e+00> : vector<16xf32>
    %120 = vector.multi_reduction <add>, %119, %cst_29 [1] : vector<16x128xf32> to vector<16xf32>
    %121 = vector.shape_cast %120 : vector<16xf32> to vector<16x1xf32>
    %cst_30 = arith.constant 1.280000e+02 : f32
    %122 = vector.broadcast %cst_30 : f32 to vector<16x1xf32>
    %123 = arith.divf %121, %122 : vector<16x1xf32>
    %124 = vector.broadcast %116 : vector<16x1xf32> to vector<16x128xf32>
    %125 = arith.subf %110, %124 : vector<16x128xf32>
    %cst_31 = arith.constant 9.99999974E-6 : f32
    %126 = vector.broadcast %cst_31 : f32 to vector<16x1xf32>
    %127 = arith.addf %123, %126 : vector<16x1xf32>
    %128 = math.rsqrt %127 : vector<16x1xf32>
    %129 = vector.broadcast %128 : vector<16x1xf32> to vector<16x128xf32>
    %130 = arith.mulf %125, %129 : vector<16x128xf32>
    %131 = vector.broadcast %111 : vector<1x128xf32> to vector<16x128xf32>
    %132 = arith.mulf %130, %131 : vector<16x128xf32>
    %133 = vector.broadcast %112 : vector<1x128xf32> to vector<16x128xf32>
    %134 = arith.addf %132, %133 : vector<16x128xf32>
    %135 = vector.shape_cast %134 : vector<16x128xf32> to vector<2x8x128xf32>
    %c0_32 = arith.constant 0 : index
    %c0_33 = arith.constant 0 : index
    %c0_34 = arith.constant 0 : index
    %136 = vector.load %arg11[%c0_32, %c0_33, %c0_34] : memref<2x8x128xf32, #tpu.memory_space<vmem>>, vector<2x8x128xf32>
    tpu.vector_store %arg11[%c0_32, %c0_33, %c0_34], %135 {strides = array<i32>} : memref<2x8x128xf32, #tpu.memory_space<vmem>>, vector<2x8x128xf32>,
    return
  }
  func.func @transform_0(%arg0: i32) -> (i32, i32, i32) {
    %c0_i32 = arith.constant 0 : i32
    %c0_i32_0 = arith.constant 0 : i32
    %c0_i32_1 = arith.constant 0 : i32
    return %arg0, %c0_i32, %c0_i32_0 : i32, i32, i32
  }
  func.func @transform_1(%arg0: i32) -> (i32, i32, i32) {
    %c0_i32 = arith.constant 0 : i32
    %c0_i32_0 = arith.constant 0 : i32
    %c0_i32_1 = arith.constant 0 : i32
    return %arg0, %c0_i32, %c0_i32_0 : i32, i32, i32
  }
  func.func @transform_2(%arg0: i32) -> (i32, i32) {
    %c0_i32 = arith.constant 0 : i32
    %c0_i32_0 = arith.constant 0 : i32
    %c0_i32_1 = arith.constant 0 : i32
    return %c0_i32, %c0_i32_0 : i32, i32
  }
  func.func @transform_3(%arg0: i32) -> (i32, i32) {
    %c0_i32 = arith.constant 0 : i32
    %c0_i32_0 = arith.constant 0 : i32
    %c0_i32_1 = arith.constant 0 : i32
    return %c0_i32, %c0_i32_0 : i32, i32
  }
  func.func @transform_4(%arg0: i32) -> (i32, i32) {
    %c0_i32 = arith.constant 0 : i32
    %c0_i32_0 = arith.constant 0 : i32
    %c0_i32_1 = arith.constant 0 : i32
    return %c0_i32, %c0_i32_0 : i32, i32
  }
  func.func @transform_5(%arg0: i32) -> (i32, i32) {
    %c0_i32 = arith.constant 0 : i32
    %c0_i32_0 = arith.constant 0 : i32
    %c0_i32_1 = arith.constant 0 : i32
    return %c0_i32, %c0_i32_0 : i32, i32
  }
  func.func @transform_6(%arg0: i32) -> (i32, i32) {
    %c0_i32 = arith.constant 0 : i32
    %c0_i32_0 = arith.constant 0 : i32
    %c0_i32_1 = arith.constant 0 : i32
    return %c0_i32, %c0_i32_0 : i32, i32
  }
  func.func @transform_7(%arg0: i32) -> (i32, i32) {
    %c0_i32 = arith.constant 0 : i32
    %c0_i32_0 = arith.constant 0 : i32
    %c0_i32_1 = arith.constant 0 : i32
    return %c0_i32, %c0_i32_0 : i32, i32
  }
  func.func @transform_8(%arg0: i32) -> (i32, i32) {
    %c0_i32 = arith.constant 0 : i32
    %c0_i32_0 = arith.constant 0 : i32
    %c0_i32_1 = arith.constant 0 : i32
    return %c0_i32, %c0_i32_0 : i32, i32
  }
  func.func @transform_9(%arg0: i32) -> (i32, i32) {
    %c0_i32 = arith.constant 0 : i32
    %c0_i32_0 = arith.constant 0 : i32
    %c0_i32_1 = arith.constant 0 : i32
    return %c0_i32, %c0_i32_0 : i32, i32
  }
  func.func @transform_10(%arg0: i32) -> (i32, i32, i32) {
    %c0_i32 = arith.constant 0 : i32
    %c0_i32_0 = arith.constant 0 : i32
    %c0_i32_1 = arith.constant 0 : i32
    return %arg0, %c0_i32, %c0_i32_0 : i32, i32, i32
  }
}

module attributes {stable_mosaic.version = 11 : i64} {
  func.func @_ffn_ln_kernel(%arg0: i32, %arg1: memref<32x128xf32, #tpu.memory_space<vmem>>, %arg2: memref<128x256xbf16, #tpu.memory_space<vmem>>, %arg3: memref<1x256xf32, #tpu.memory_space<vmem>>, %arg4: memref<256x128xbf16, #tpu.memory_space<vmem>>, %arg5: memref<1x128xf32, #tpu.memory_space<vmem>>, %arg6: memref<1x128xf32, #tpu.memory_space<vmem>>, %arg7: memref<1x128xf32, #tpu.memory_space<vmem>>, %arg8: memref<32x128xf32, #tpu.memory_space<vmem>>) attributes {dimension_semantics = [#tpu.dimension_semantics<parallel>], iteration_bounds = array<i64: 1>, scalar_prefetch = 0 : i64, scratch_operands = 0 : i64, tpu.core_type = #tpu.core_type<tc>, window_params = [{transform_indices = @transform_0, window_bounds = array<i64: 32, 128>}, {pipeline_mode = #tpu.pipeline_mode<synchronous>, transform_indices = @transform_1, window_bounds = array<i64: 128, 256>}, {pipeline_mode = #tpu.pipeline_mode<synchronous>, transform_indices = @transform_2, window_bounds = array<i64: 1, 256>}, {pipeline_mode = #tpu.pipeline_mode<synchronous>, transform_indices = @transform_3, window_bounds = array<i64: 256, 128>}, {pipeline_mode = #tpu.pipeline_mode<synchronous>, transform_indices = @transform_4, window_bounds = array<i64: 1, 128>}, {pipeline_mode = #tpu.pipeline_mode<synchronous>, transform_indices = @transform_5, window_bounds = array<i64: 1, 128>}, {pipeline_mode = #tpu.pipeline_mode<synchronous>, transform_indices = @transform_6, window_bounds = array<i64: 1, 128>}, {transform_indices = @transform_7, window_bounds = array<i64: 32, 128>}]} {
    %c0 = arith.constant 0 : index
    %c0_0 = arith.constant 0 : index
    %0 = vector.load %arg1[%c0, %c0_0] : memref<32x128xf32, #tpu.memory_space<vmem>>, vector<32x128xf32>
    %1 = arith.truncf %0 : vector<32x128xf32> to vector<32x128xbf16>
    %c0_1 = arith.constant 0 : index
    %c0_2 = arith.constant 0 : index
    %2 = vector.load %arg2[%c0_1, %c0_2] : memref<128x256xbf16, #tpu.memory_space<vmem>>, vector<128x256xbf16>
    %cst = arith.constant dense<0.000000e+00> : vector<32x256xf32>
    %3 = tpu.matmul %1, %2, %cst {dimension_numbers = #tpu.dot_dimension_numbers<[1], [0], [0], [1], [0, 0, 1, 1], [], []>} : vector<32x128xbf16>, vector<128x256xbf16>, vector<32x256xf32> -> vector<32x256xf32>
    %c0_3 = arith.constant 0 : index
    %c0_4 = arith.constant 0 : index
    %4 = vector.load %arg3[%c0_3, %c0_4] : memref<1x256xf32, #tpu.memory_space<vmem>>, vector<1x256xf32>
    %5 = vector.broadcast %4 : vector<1x256xf32> to vector<32x256xf32>
    %6 = arith.addf %3, %5 : vector<32x256xf32>
    %cst_5 = arith.constant 0.000000e+00 : f32
    %7 = vector.broadcast %cst_5 : f32 to vector<32x256xf32>
    %8 = arith.maximumf %6, %7 : vector<32x256xf32>
    %9 = arith.truncf %8 : vector<32x256xf32> to vector<32x256xbf16>
    %c0_6 = arith.constant 0 : index
    %c0_7 = arith.constant 0 : index
    %10 = vector.load %arg4[%c0_6, %c0_7] : memref<256x128xbf16, #tpu.memory_space<vmem>>, vector<256x128xbf16>
    %cst_8 = arith.constant dense<0.000000e+00> : vector<32x128xf32>
    %11 = tpu.matmul %9, %10, %cst_8 {dimension_numbers = #tpu.dot_dimension_numbers<[1], [0], [0], [1], [0, 0, 1, 1], [], []>} : vector<32x256xbf16>, vector<256x128xbf16>, vector<32x128xf32> -> vector<32x128xf32>
    %c0_9 = arith.constant 0 : index
    %c0_10 = arith.constant 0 : index
    %12 = vector.load %arg5[%c0_9, %c0_10] : memref<1x128xf32, #tpu.memory_space<vmem>>, vector<1x128xf32>
    %13 = vector.broadcast %12 : vector<1x128xf32> to vector<32x128xf32>
    %14 = arith.addf %11, %13 : vector<32x128xf32>
    %15 = arith.addf %0, %14 : vector<32x128xf32>
    %c0_11 = arith.constant 0 : index
    %c0_12 = arith.constant 0 : index
    %16 = vector.load %arg6[%c0_11, %c0_12] : memref<1x128xf32, #tpu.memory_space<vmem>>, vector<1x128xf32>
    %c0_13 = arith.constant 0 : index
    %c0_14 = arith.constant 0 : index
    %17 = vector.load %arg7[%c0_13, %c0_14] : memref<1x128xf32, #tpu.memory_space<vmem>>, vector<1x128xf32>
    %cst_15 = arith.constant dense<0.000000e+00> : vector<32xf32>
    %18 = vector.multi_reduction <add>, %15, %cst_15 [1] : vector<32x128xf32> to vector<32xf32>
    %19 = vector.shape_cast %18 : vector<32xf32> to vector<32x1xf32>
    %cst_16 = arith.constant 1.280000e+02 : f32
    %20 = vector.broadcast %cst_16 : f32 to vector<32x1xf32>
    %21 = arith.divf %19, %20 : vector<32x1xf32>
    %22 = vector.broadcast %21 : vector<32x1xf32> to vector<32x128xf32>
    %23 = arith.subf %15, %22 : vector<32x128xf32>
    %24 = arith.mulf %23, %23 : vector<32x128xf32>
    %cst_17 = arith.constant dense<0.000000e+00> : vector<32xf32>
    %25 = vector.multi_reduction <add>, %24, %cst_17 [1] : vector<32x128xf32> to vector<32xf32>
    %26 = vector.shape_cast %25 : vector<32xf32> to vector<32x1xf32>
    %cst_18 = arith.constant 1.280000e+02 : f32
    %27 = vector.broadcast %cst_18 : f32 to vector<32x1xf32>
    %28 = arith.divf %26, %27 : vector<32x1xf32>
    %29 = vector.broadcast %21 : vector<32x1xf32> to vector<32x128xf32>
    %30 = arith.subf %15, %29 : vector<32x128xf32>
    %cst_19 = arith.constant 9.99999974E-6 : f32
    %31 = vector.broadcast %cst_19 : f32 to vector<32x1xf32>
    %32 = arith.addf %28, %31 : vector<32x1xf32>
    %33 = math.rsqrt %32 : vector<32x1xf32>
    %34 = vector.broadcast %33 : vector<32x1xf32> to vector<32x128xf32>
    %35 = arith.mulf %30, %34 : vector<32x128xf32>
    %36 = vector.broadcast %16 : vector<1x128xf32> to vector<32x128xf32>
    %37 = arith.mulf %35, %36 : vector<32x128xf32>
    %38 = vector.broadcast %17 : vector<1x128xf32> to vector<32x128xf32>
    %39 = arith.addf %37, %38 : vector<32x128xf32>
    %c0_20 = arith.constant 0 : index
    %c0_21 = arith.constant 0 : index
    %40 = vector.load %arg8[%c0_20, %c0_21] : memref<32x128xf32, #tpu.memory_space<vmem>>, vector<32x128xf32>
    tpu.vector_store %arg8[%c0_20, %c0_21], %39 {strides = array<i32>} : memref<32x128xf32, #tpu.memory_space<vmem>>, vector<32x128xf32>,
    return
  }
  func.func @transform_0(%arg0: i32) -> (i32, i32) {
    %c0_i32 = arith.constant 0 : i32
    %c0_i32_0 = arith.constant 0 : i32
    return %arg0, %c0_i32 : i32, i32
  }
  func.func @transform_1(%arg0: i32) -> (i32, i32) {
    %c0_i32 = arith.constant 0 : i32
    %c0_i32_0 = arith.constant 0 : i32
    %c0_i32_1 = arith.constant 0 : i32
    return %c0_i32, %c0_i32_0 : i32, i32
  }
  func.func @transform_2(%arg0: i32) -> (i32, i32) {
    %c0_i32 = arith.constant 0 : i32
    %c0_i32_0 = arith.constant 0 : i32
    %c0_i32_1 = arith.constant 0 : i32
    return %c0_i32, %c0_i32_0 : i32, i32
  }
  func.func @transform_3(%arg0: i32) -> (i32, i32) {
    %c0_i32 = arith.constant 0 : i32
    %c0_i32_0 = arith.constant 0 : i32
    %c0_i32_1 = arith.constant 0 : i32
    return %c0_i32, %c0_i32_0 : i32, i32
  }
  func.func @transform_4(%arg0: i32) -> (i32, i32) {
    %c0_i32 = arith.constant 0 : i32
    %c0_i32_0 = arith.constant 0 : i32
    %c0_i32_1 = arith.constant 0 : i32
    return %c0_i32, %c0_i32_0 : i32, i32
  }
  func.func @transform_5(%arg0: i32) -> (i32, i32) {
    %c0_i32 = arith.constant 0 : i32
    %c0_i32_0 = arith.constant 0 : i32
    %c0_i32_1 = arith.constant 0 : i32
    return %c0_i32, %c0_i32_0 : i32, i32
  }
  func.func @transform_6(%arg0: i32) -> (i32, i32) {
    %c0_i32 = arith.constant 0 : i32
    %c0_i32_0 = arith.constant 0 : i32
    %c0_i32_1 = arith.constant 0 : i32
    return %c0_i32, %c0_i32_0 : i32, i32
  }
  func.func @transform_7(%arg0: i32) -> (i32, i32) {
    %c0_i32 = arith.constant 0 : i32
    %c0_i32_0 = arith.constant 0 : i32
    return %arg0, %c0_i32 : i32, i32
  }
}

</mosaic_0001>

<llo_original>
// kernel: transformer_decoder_layer.5
$region0: #{transformer_decoder_layer.5}
  #allocation0 [shape = 'u32[]', space=smem, size = 0x4, offset = 0x4, fixed_abs, tag = 'smem constant byte address 0x4 - core index']
  #allocation1 [shape = 'u32[72,128]{1,0:T(1,128)}', space=vmem, size = 0x9000, scoped, tag = 'internal scratch']
  %s0 = inlined_call_operand.vmem [shape: f32[32,128], index: 0, kind: input, shape index: {}]
  %s1 = inlined_call_operand.vmem [shape: bf16[128,256], index: 1, kind: input, shape index: {}]
  %s2 = inlined_call_operand.vmem [shape: f32[1,256], index: 2, kind: input, shape index: {}]
  %s3 = inlined_call_operand.vmem [shape: bf16[256,128], index: 3, kind: input, shape index: {}]
  %s4 = inlined_call_operand.hbm [shape: f32[1,128], index: 4, kind: input, shape index: {}]
  %s5 = inlined_call_operand.vmem [shape: f32[1,128], index: 5, kind: input, shape index: {}]
  %s6 = inlined_call_operand.vmem [shape: f32[1,128], index: 6, kind: input, shape index: {}]
  %s7 = inlined_call_operand.vmem [shape: f32[32,128], index: 7, kind: output, shape index: {}]
  %s8 = sld [smem:[#allocation0]]
  $region42: #{transformer_decoder_layer.5} parent=0
    _
  %s10 = ssub.s32 1, %s8
  %s11 = scalar_select 0, %s10, %s8
  $region1: #{transformer_decoder_layer.5} parent=0
    #allocation2 [shape = 'u8[512]{0}', space=vmem, size = 0x400, scoped, tag = 'input window, operand 4, single buffered']
    #allocation3 [shape = 's32[1]{0}', space=sflag, size = 0x4, scoped, tag = 'scoped memory for transformer_decoder_layer.5']
    %12 = vsyncpa [#allocation3], 0
    // Predicated region
    $region2: #{transformer_decoder_layer.5} parent=1 // pred_check
      _
    $region3: #{transformer_decoder_layer.5} parent=1 // pred_check_branch
      %14 = sbr.rel (0) target = $region5
    $region4: #{transformer_decoder_layer.5} parent=1 // pred_region
      _
    $region5: #{transformer_decoder_layer.5} parent=1 // pred_fallthru
      _
    // Predicated region
    $region6: #{transformer_decoder_layer.5} parent=1 // pred_check
      _
    $region7: #{transformer_decoder_layer.5} parent=1 // pred_check_branch
      %16 = sbr.rel (0) target = $region9
    $region8: #{transformer_decoder_layer.5} parent=1 // pred_region
      _
    $region9: #{transformer_decoder_layer.5} parent=1 // pred_fallthru
      _
    // Predicated region
    $region10: #{transformer_decoder_layer.5} parent=1 // pred_check
      _
    $region11: #{transformer_decoder_layer.5} parent=1 // pred_check_branch
      %18 = sbr.rel (0) target = $region13
    $region12: #{transformer_decoder_layer.5} parent=1 // pred_region
      _
    $region13: #{transformer_decoder_layer.5} parent=1 // pred_fallthru
      _
    // Predicated region
    $region14: #{transformer_decoder_layer.5} parent=1 // pred_check
      _
    $region15: #{transformer_decoder_layer.5} parent=1 // pred_check_branch
      %20 = sbr.rel (0) target = $region17
    $region16: #{transformer_decoder_layer.5} parent=1 // pred_region
      _
    $region17: #{transformer_decoder_layer.5} parent=1 // pred_fallthru
      _
    // Predicated region
    $region18: #{transformer_decoder_layer.5} parent=1 // pred_check
      _
    $region19: #{transformer_decoder_layer.5} parent=1 // pred_check_branch
      %22 = sbr.rel (0) target = $region21
    $region20: #{transformer_decoder_layer.5} parent=1 // pred_region
      %24 = vsyncadd [#allocation3], 0
      %s26 = sshll.u32 %s4, 4
      %s27 = int_to_ptr.hbm [resolvable:$true] %s26
      %s28 = sshll.u32 [#allocation2], 4
      %s29 = int_to_ptr.vmem [resolvable:$true] %s28
      %31 = dma.hbm_to_vmem [thread:$0]  %s27, 16, %s29, [#allocation3]
    $region21: #{transformer_decoder_layer.5} parent=1 // pred_fallthru
      _
    // Predicated region
    $region22: #{transformer_decoder_layer.5} parent=1 // pred_check
      _
    $region23: #{transformer_decoder_layer.5} parent=1 // pred_check_branch
      %33 = sbr.rel (0) target = $region25
    $region24: #{transformer_decoder_layer.5} parent=1 // pred_region
      _
    $region25: #{transformer_decoder_layer.5} parent=1 // pred_fallthru
      _
    // Predicated region
    $region26: #{transformer_decoder_layer.5} parent=1 // pred_check
      _
    $region27: #{transformer_decoder_layer.5} parent=1 // pred_check_branch
      %35 = sbr.rel (0) target = $region29
    $region28: #{transformer_decoder_layer.5} parent=1 // pred_region
      _
    $region29: #{transformer_decoder_layer.5} parent=1 // pred_fallthru
      _
    // Predicated region
    $region30: #{transformer_decoder_layer.5} parent=1 // pred_check
      _
    $region31: #{transformer_decoder_layer.5} parent=1 // pred_check_branch
      %37 = sbr.rel (0) target = $region33
    $region32: #{transformer_decoder_layer.5} parent=1 // pred_region
      %39 = dma.done [#allocation3], 16
    $region33: #{transformer_decoder_layer.5} parent=1 // pred_fallthru
      _
    %v40 = vld [vmem:[%s0] sm:$0xff]
    %v41 = vld [vmem:[%s0 + $0x8] sm:$0xff]
    %v42 = vld [vmem:[%s0 + $0x10] sm:$0xff]
    %v43 = vld [vmem:[%s0 + $0x18] sm:$0xff]
    %v44 = vpack.c.bf16 %v41, %v40
    %v45 = vpack.c.bf16 %v43, %v42
    %v46 = vld [vmem:[%s1] sm:$0xff]
    %v47 = vld [vmem:[%s1 + $0x8] sm:$0xff]
    %v48 = vld [vmem:[%s1 + $0x10] sm:$0xff]
    %v49 = vld [vmem:[%s1 + $0x18] sm:$0xff]
    %v50 = vld [vmem:[%s1 + $0x20] sm:$0xff]
    %v51 = vld [vmem:[%s1 + $0x28] sm:$0xff]
    %v52 = vld [vmem:[%s1 + $0x30] sm:$0xff]
    %v53 = vld [vmem:[%s1 + $0x38] sm:$0xff]
    %v54 = vld [vmem:[%s1 + $0x40] sm:$0xff]
    %v55 = vld [vmem:[%s1 + $0x48] sm:$0xff]
    %v56 = vld [vmem:[%s1 + $0x50] sm:$0xff]
    %v57 = vld [vmem:[%s1 + $0x58] sm:$0xff]
    %v58 = vld [vmem:[%s1 + $0x60] sm:$0xff]
    %v59 = vld [vmem:[%s1 + $0x68] sm:$0xff]
    %v60 = vld [vmem:[%s1 + $0x70] sm:$0xff]
    %v61 = vld [vmem:[%s1 + $0x78] sm:$0xff]
    %v62 = vld [vmem:[%s2] sm:$0x3]
    %v64 = vperm.slane %v62, 0
    %v65 = vperm.slane %v62, 1
    %v84 = vunpack.c.l.b16 %v46
    %v85 = vunpack.c.h.b16 %v46
    %v86 = vunpack.c.l.b16 %v47
    %v87 = vunpack.c.h.b16 %v47
    %v88 = vunpack.c.l.b16 %v48
    %v89 = vunpack.c.h.b16 %v48
    %v90 = vunpack.c.l.b16 %v49
    %v91 = vunpack.c.h.b16 %v49
    %v92 = vunpack.c.l.b16 %v50
    %v93 = vunpack.c.h.b16 %v50
    %v94 = vunpack.c.l.b16 %v51
    %v95 = vunpack.c.h.b16 %v51
    %v96 = vunpack.c.l.b16 %v52
    %v97 = vunpack.c.h.b16 %v52
    %v98 = vunpack.c.l.b16 %v53
    %v99 = vunpack.c.h.b16 %v53
    %v100 = vunpack.c.l.b16 %v54
    %v101 = vunpack.c.h.b16 %v54
    %v102 = vunpack.c.l.b16 %v55
    %v103 = vunpack.c.h.b16 %v55
    %v104 = vunpack.c.l.b16 %v56
    %v105 = vunpack.c.h.b16 %v56
    %v106 = vunpack.c.l.b16 %v57
    %v107 = vunpack.c.h.b16 %v57
    %v108 = vunpack.c.l.b16 %v58
    %v109 = vunpack.c.h.b16 %v58
    %v110 = vunpack.c.l.b16 %v59
    %v111 = vunpack.c.h.b16 %v59
    %v112 = vunpack.c.l.b16 %v60
    %v113 = vunpack.c.h.b16 %v60
    %v114 = vunpack.c.l.b16 %v61
    %v115 = vunpack.c.h.b16 %v61
    %v116 = vpack.c.b16 %v86, %v84
    %v117 = vpack.c.b16 %v87, %v85
    %v118 = vpack.c.b16 %v90, %v88
    %v119 = vpack.c.b16 %v91, %v89
    %v120 = vpack.c.b16 %v94, %v92
    %v121 = vpack.c.b16 %v95, %v93
    %v122 = vpack.c.b16 %v98, %v96
    %v123 = vpack.c.b16 %v99, %v97
    %v124 = vpack.c.b16 %v102, %v100
    %v125 = vpack.c.b16 %v103, %v101
    %v126 = vpack.c.b16 %v106, %v104
    %v127 = vpack.c.b16 %v107, %v105
    %v128 = vpack.c.b16 %v110, %v108
    %v129 = vpack.c.b16 %v111, %v109
    %v130 = vpack.c.b16 %v114, %v112
    %v131 = vpack.c.b16 %v115, %v113
    %148 = vmatpush.bf16.msra.mxu0 %v130
    %149 = vmatpush.bf16.msra.mxu0 %v128
    %150 = vmatpush.bf16.msra.mxu0 %v126
    %151 = vmatpush.bf16.msra.mxu0 %v124
    %152 = vmatpush.bf16.msra.mxu0 %v122
    %153 = vmatpush.bf16.msra.mxu0 %v120
    %154 = vmatpush.bf16.msra.mxu0 %v118
    %155 = vmatpush.bf16.msra.mxu0 %v116
    %156 = vmatmul.bf16.gmra.mxu0 %v44
    %v157 = vpop.f32.mrf.mxu0
    %v158 = vadd.f32 %v64, %v157
    %v159 = vpop.f32.mrf.mxu0
    %v160 = vadd.f32 %v64, %v159
    %161 = vmatmul.bf16.gmra.mxu0 %v45
    %v162 = vpop.f32.mrf.mxu0
    %v163 = vadd.f32 %v64, %v162
    %v164 = vpop.f32.mrf.mxu0
    %v165 = vadd.f32 %v64, %v164
    %166 = vdwg.mxu0
    %167 = vmatpush.bf16.msra.mxu0 %v131
    %168 = vmatpush.bf16.msra.mxu0 %v129
    %169 = vmatpush.bf16.msra.mxu0 %v127
    %170 = vmatpush.bf16.msra.mxu0 %v125
    %171 = vmatpush.bf16.msra.mxu0 %v123
    %172 = vmatpush.bf16.msra.mxu0 %v121
    %173 = vmatpush.bf16.msra.mxu0 %v119
    %174 = vmatpush.bf16.msra.mxu0 %v117
    %175 = vmatmul.bf16.gmra.mxu0 %v44
    %v176 = vpop.f32.mrf.mxu0
    %v177 = vadd.f32 %v65, %v176
    %v178 = vpop.f32.mrf.mxu0
    %v179 = vadd.f32 %v65, %v178
    %180 = vmatmul.bf16.gmra.mxu0 %v45
    %v181 = vpop.f32.mrf.mxu0
    %v182 = vadd.f32 %v65, %v181
    %v183 = vpop.f32.mrf.mxu0
    %v184 = vadd.f32 %v65, %v183
    %185 = vdwg.mxu0
    %v186 = vmax.f32 %v158, 0.0
    %v187 = vmax.f32 %v177, 0.0
    %v188 = vmax.f32 %v160, 0.0
    %v189 = vmax.f32 %v179, 0.0
    %v190 = vmax.f32 %v163, 0.0
    %v191 = vmax.f32 %v182, 0.0
    %v192 = vmax.f32 %v165, 0.0
    %v193 = vmax.f32 %v184, 0.0
    %v194 = vpack.c.bf16 %v188, %v186
    %v195 = vpack.c.bf16 %v189, %v187
    %v196 = vpack.c.bf16 %v192, %v190
    %v197 = vpack.c.bf16 %v193, %v191
    %v198 = vld [vmem:[%s3] sm:$0xf]
    %v199 = vld [vmem:[%s3 + $0x4] sm:$0xf]
    %v200 = vld [vmem:[%s3 + $0x8] sm:$0xf]
    %v201 = vld [vmem:[%s3 + $0xc] sm:$0xf]
    %v202 = vld [vmem:[%s3 + $0x10] sm:$0xf]
    %v203 = vld [vmem:[%s3 + $0x14] sm:$0xf]
    %v204 = vld [vmem:[%s3 + $0x18] sm:$0xf]
    %v205 = vld [vmem:[%s3 + $0x1c] sm:$0xf]
    %v206 = vld [vmem:[%s3 + $0x20] sm:$0xf]
    %v207 = vld [vmem:[%s3 + $0x24] sm:$0xf]
    %v208 = vld [vmem:[%s3 + $0x28] sm:$0xf]
    %v209 = vld [vmem:[%s3 + $0x2c] sm:$0xf]
    %v210 = vld [vmem:[%s3 + $0x30] sm:$0xf]
    %v211 = vld [vmem:[%s3 + $0x34] sm:$0xf]
    %v212 = vld [vmem:[%s3 + $0x38] sm:$0xf]
    %v213 = vld [vmem:[%s3 + $0x3c] sm:$0xf]
    %v214 = vld [vmem:[%s3 + $0x40] sm:$0xf]
    %v215 = vld [vmem:[%s3 + $0x44] sm:$0xf]
    %v216 = vld [vmem:[%s3 + $0x48] sm:$0xf]
    %v217 = vld [vmem:[%s3 + $0x4c] sm:$0xf]
    %v218 = vld [vmem:[%s3 + $0x50] sm:$0xf]
    %v219 = vld [vmem:[%s3 + $0x54] sm:$0xf]
    %v220 = vld [vmem:[%s3 + $0x58] sm:$0xf]
    %v221 = vld [vmem:[%s3 + $0x5c] sm:$0xf]
    %v222 = vld [vmem:[%s3 + $0x60] sm:$0xf]
    %v223 = vld [vmem:[%s3 + $0x64] sm:$0xf]
    %v224 = vld [vmem:[%s3 + $0x68] sm:$0xf]
    %v225 = vld [vmem:[%s3 + $0x6c] sm:$0xf]
    %v226 = vld [vmem:[%s3 + $0x70] sm:$0xf]
    %v227 = vld [vmem:[%s3 + $0x74] sm:$0xf]
    %v228 = vld [vmem:[%s3 + $0x78] sm:$0xf]
    %v229 = vld [vmem:[%s3 + $0x7c] sm:$0xf]
    %v230 = vld [vmem:[#allocation2] sm:$0x1]
    %v232 = vperm.slane %v230, 0
    %v266 = vunpack.c.l.b16 %v198
    %v267 = vunpack.c.l.b16 %v199
    %v268 = vunpack.c.l.b16 %v200
    %v269 = vunpack.c.l.b16 %v201
    %v270 = vunpack.c.l.b16 %v202
    %v271 = vunpack.c.l.b16 %v203
    %v272 = vunpack.c.l.b16 %v204
    %v273 = vunpack.c.l.b16 %v205
    %v274 = vunpack.c.l.b16 %v206
    %v275 = vunpack.c.l.b16 %v207
    %v276 = vunpack.c.l.b16 %v208
    %v277 = vunpack.c.l.b16 %v209
    %v278 = vunpack.c.l.b16 %v210
    %v279 = vunpack.c.l.b16 %v211
    %v280 = vunpack.c.l.b16 %v212
    %v281 = vunpack.c.l.b16 %v213
    %v282 = vunpack.c.l.b16 %v214
    %v283 = vunpack.c.l.b16 %v215
    %v284 = vunpack.c.l.b16 %v216
    %v285 = vunpack.c.l.b16 %v217
    %v286 = vunpack.c.l.b16 %v218
    %v287 = vunpack.c.l.b16 %v219
    %v288 = vunpack.c.l.b16 %v220
    %v289 = vunpack.c.l.b16 %v221
    %v290 = vunpack.c.l.b16 %v222
    %v291 = vunpack.c.l.b16 %v223
    %v292 = vunpack.c.l.b16 %v224
    %v293 = vunpack.c.l.b16 %v225
    %v294 = vunpack.c.l.b16 %v226
    %v295 = vunpack.c.l.b16 %v227
    %v296 = vunpack.c.l.b16 %v228
    %v297 = vunpack.c.l.b16 %v229
    %v298 = vpack.c.b16 %v267, %v266
    %v299 = vpack.c.b16 %v269, %v268
    %v300 = vpack.c.b16 %v271, %v270
    %v301 = vpack.c.b16 %v273, %v272
    %v302 = vpack.c.b16 %v275, %v274
    %v303 = vpack.c.b16 %v277, %v276
    %v304 = vpack.c.b16 %v279, %v278
    %v305 = vpack.c.b16 %v281, %v280
    %v306 = vpack.c.b16 %v283, %v282
    %v307 = vpack.c.b16 %v285, %v284
    %v308 = vpack.c.b16 %v287, %v286
    %v309 = vpack.c.b16 %v289, %v288
    %v310 = vpack.c.b16 %v291, %v290
    %v311 = vpack.c.b16 %v293, %v292
    %v312 = vpack.c.b16 %v295, %v294
    %v313 = vpack.c.b16 %v297, %v296
    %330 = vmatpush.bf16.msra.mxu0 %v305
    %331 = vmatpush.bf16.msra.mxu0 %v304
    %332 = vmatpush.bf16.msra.mxu0 %v303
    %333 = vmatpush.bf16.msra.mxu0 %v302
    %334 = vmatpush.bf16.msra.mxu0 %v301
    %335 = vmatpush.bf16.msra.mxu0 %v300
    %336 = vmatpush.bf16.msra.mxu0 %v299
    %337 = vmatpush.bf16.msra.mxu0 %v298
    %338 = vmatmul.bf16.gmra.mxu0 %v194
    %v339 = vpop.f32.mrf.mxu0
    %v340 = vadd.f32 %v232, %v339
    %v341 = vpop.f32.mrf.mxu0
    %v342 = vadd.f32 %v232, %v341
    %343 = vmatmul.bf16.gmra.mxu0 %v196
    %v344 = vpop.f32.mrf.mxu0
    %v345 = vadd.f32 %v232, %v344
    %v346 = vpop.f32.mrf.mxu0
    %v347 = vadd.f32 %v232, %v346
    %348 = vdwg.mxu0
    %349 = vmatpush.bf16.msra.mxu0 %v313
    %350 = vmatpush.bf16.msra.mxu0 %v312
    %351 = vmatpush.bf16.msra.mxu0 %v311
    %352 = vmatpush.bf16.msra.mxu0 %v310
    %353 = vmatpush.bf16.msra.mxu0 %v309
    %354 = vmatpush.bf16.msra.mxu0 %v308
    %355 = vmatpush.bf16.msra.mxu0 %v307
    %356 = vmatpush.bf16.msra.mxu0 %v306
    %357 = vmatmul.bf16.gmra.mxu0 %v195
    %v358 = vpop.f32.mrf.mxu0
    %v359 = vadd.f32 %v340, %v358
    %v360 = vpop.f32.mrf.mxu0
    %v361 = vadd.f32 %v342, %v360
    %362 = vmatmul.bf16.gmra.mxu0 %v197
    %v363 = vpop.f32.mrf.mxu0
    %v364 = vadd.f32 %v345, %v363
    %v365 = vpop.f32.mrf.mxu0
    %v366 = vadd.f32 %v347, %v365
    %367 = vdwg.mxu0
    %v368 = vadd.f32 %v40, %v359
    %v369 = vadd.f32 %v41, %v361
    %v370 = vadd.f32 %v42, %v364
    %v371 = vadd.f32 %v43, %v366
    %v372 = vld [vmem:[%s5] sm:$0x1]
    %v373 = vld [vmem:[%s6] sm:$0x1]
    %374 = vadd.xlane.f32.xlu0 %v368
    %v375 = vpop.xlane.xlu0 %374
    %376 = vadd.xlane.f32.xlu0 %v369
    %v377 = vpop.xlane.xlu0 %376
    %378 = vadd.xlane.f32.xlu0 %v370
    %v379 = vpop.xlane.xlu0 %378
    %380 = vadd.xlane.f32.xlu0 %v371
    %v381 = vpop.xlane.xlu0 %380
    %v382 = vrcp.pop 128.0
    %v383 = vmul.f32 128.0, %v382
    %v384 = vsub.f32 1.0, %v383
    %v385 = vmul.f32 %v382, %v384
    %v386 = vadd.f32 %v382, %v385
    %vm387 = vweird.f32 %v382
    %v388 = vsel %vm387, %v382, %v386
    %v389 = vmul.f32 %v375, %v388
    %v390 = vmul.f32 %v377, %v388
    %v391 = vmul.f32 %v379, %v388
    %v392 = vmul.f32 %v381, %v388
    %v393 = vsub.f32 %v368, %v389
    %v394 = vsub.f32 %v369, %v390
    %v395 = vsub.f32 %v370, %v391
    %v396 = vsub.f32 %v371, %v392
    %v397 = vmul.f32 %v393, %v393
    %v398 = vmul.f32 %v394, %v394
    %v399 = vmul.f32 %v395, %v395
    %v400 = vmul.f32 %v396, %v396
    %401 = vadd.xlane.f32.xlu0 %v397
    %v402 = vpop.xlane.xlu0 %401
    %403 = vadd.xlane.f32.xlu0 %v398
    %v404 = vpop.xlane.xlu0 %403
    %405 = vadd.xlane.f32.xlu0 %v399
    %v406 = vpop.xlane.xlu0 %405
    %407 = vadd.xlane.f32.xlu0 %v400
    %v408 = vpop.xlane.xlu0 %407
    %v409 = vmul.f32 %v402, %v388
    %v410 = vmul.f32 %v404, %v388
    %v411 = vmul.f32 %v406, %v388
    %v412 = vmul.f32 %v408, %v388
    %v413 = vadd.f32 %v409, 1e-05
    %v414 = vadd.f32 %v410, 1e-05
    %v415 = vadd.f32 %v411, 1e-05
    %v416 = vadd.f32 %v412, 1e-05
    %v417 = vrsqrt.pop %v413
    %v418 = vmul.f32 %v417, %v413
    %v419 = vmul.f32 %v418, %v417
    %v420 = vmul.f32 0.5, %v419
    %v421 = vsub.f32 1.5, %v420
    %v422 = vmul.f32 %v417, %v421
    %vm423 = vweird.f32 %v413
    %vm424 = vweird.f32 %v417
    %vm425 = vmor %vm423, %vm424
    %v426 = vsel %vm425, %v417, %v422
    %v427 = vrsqrt.pop %v414
    %v428 = vmul.f32 %v427, %v414
    %v429 = vmul.f32 %v428, %v427
    %v430 = vmul.f32 0.5, %v429
    %v431 = vsub.f32 1.5, %v430
    %v432 = vmul.f32 %v427, %v431
    %vm433 = vweird.f32 %v414
    %vm434 = vweird.f32 %v427
    %vm435 = vmor %vm433, %vm434
    %v436 = vsel %vm435, %v427, %v432
    %v437 = vrsqrt.pop %v415
    %v438 = vmul.f32 %v437, %v415
    %v439 = vmul.f32 %v438, %v437
    %v440 = vmul.f32 0.5, %v439
    %v441 = vsub.f32 1.5, %v440
    %v442 = vmul.f32 %v437, %v441
    %vm443 = vweird.f32 %v415
    %vm444 = vweird.f32 %v437
    %vm445 = vmor %vm443, %vm444
    %v446 = vsel %vm445, %v437, %v442
    %v447 = vrsqrt.pop %v416
    %v448 = vmul.f32 %v447, %v416
    %v449 = vmul.f32 %v448, %v447
    %v450 = vmul.f32 0.5, %v449
    %v451 = vsub.f32 1.5, %v450
    %v452 = vmul.f32 %v447, %v451
    %vm453 = vweird.f32 %v416
    %vm454 = vweird.f32 %v447
    %vm455 = vmor %vm453, %vm454
    %v456 = vsel %vm455, %v447, %v452
    %v457 = vmul.f32 %v393, %v426
    %v458 = vmul.f32 %v394, %v436
    %v459 = vmul.f32 %v395, %v446
    %v460 = vmul.f32 %v396, %v456
    %v462 = vperm.slane %v372, 0
    %v464 = vmul.f32 %v457, %v462
    %v465 = vmul.f32 %v458, %v462
    %v466 = vmul.f32 %v459, %v462
    %v467 = vmul.f32 %v460, %v462
    %v469 = vperm.slane %v373, 0
    %v471 = vadd.f32 %v464, %v469
    %v472 = vadd.f32 %v465, %v469
    %v473 = vadd.f32 %v466, %v469
    %v474 = vadd.f32 %v467, %v469
    %475 = vst [vmem:[%s7] sm:$0xff] %v471
    %476 = vst [vmem:[%s7 + $0x8] sm:$0xff] %v472
    %477 = vst [vmem:[%s7 + $0x10] sm:$0xff] %v473
    %478 = vst [vmem:[%s7 + $0x18] sm:$0xff] %v474
    // Predicated region
    $region34: #{transformer_decoder_layer.5} parent=1 // pred_check
      _
    $region35: #{transformer_decoder_layer.5} parent=1 // pred_check_branch
      %480 = sbr.rel (0) target = $region37
    $region36: #{transformer_decoder_layer.5} parent=1 // pred_region
      _
    $region37: #{transformer_decoder_layer.5} parent=1 // pred_fallthru
      _
    // Predicated region
    $region38: #{transformer_decoder_layer.5} parent=1 // pred_check
      _
    $region39: #{transformer_decoder_layer.5} parent=1 // pred_check_branch
      %482 = sbr.rel (0) target = $region41
    $region40: #{transformer_decoder_layer.5} parent=1 // pred_region
      _
    $region41: #{transformer_decoder_layer.5} parent=1 // pred_fallthru
      _
    %483 = vsyncpa [#allocation3], 1

// kernel: transformer_decoder_layer.3
$region0: #{transformer_decoder_layer.3}
  #allocation0 [shape = 'u32[]', space=smem, size = 0x4, offset = 0x4, fixed_abs, tag = 'smem constant byte address 0x4 - core index']
  #allocation1 [shape = 'u32[72,128]{1,0:T(1,128)}', space=vmem, size = 0x9000, scoped, tag = 'internal scratch']
  %s0 = inlined_call_operand.vmem [shape: f32[4,8,128], index: 0, kind: input, shape index: {}]
  %s1 = inlined_call_operand.vmem [shape: f32[4,8,128], index: 1, kind: input, shape index: {}]
  %s2 = inlined_call_operand.hbm [shape: bf16[128,256], index: 2, kind: input, shape index: {}]
  %s3 = inlined_call_operand.vmem [shape: f32[1,256], index: 3, kind: input, shape index: {}]
  %s4 = inlined_call_operand.hbm [shape: bf16[128,128], index: 4, kind: input, shape index: {}]
  %s5 = inlined_call_operand.vmem [shape: f32[1,128], index: 5, kind: input, shape index: {}]
  %s6 = inlined_call_operand.hbm [shape: bf16[128,128], index: 6, kind: input, shape index: {}]
  %s7 = inlined_call_operand.vmem [shape: f32[1,128], index: 7, kind: input, shape index: {}]
  %s8 = inlined_call_operand.vmem [shape: f32[1,128], index: 8, kind: input, shape index: {}]
  %s9 = inlined_call_operand.vmem [shape: f32[1,128], index: 9, kind: input, shape index: {}]
  %s10 = inlined_call_operand.vmem [shape: f32[4,8,128], index: 10, kind: output, shape index: {}]
  %s11 = sld [smem:[#allocation0]]
  $region85: #{transformer_decoder_layer.3} parent=0
    _
  %s13 = ssub.s32 1, %s11
  %s14 = scalar_select 0, %s13, %s11
  $region1: #{transformer_decoder_layer.3} parent=0
    #allocation2 [shape = 'u8[65536]{0}', space=vmem, size = 0x10000, scoped, tag = 'input window, operand 2, single buffered']
    #allocation3 [shape = 's32[2]{0}', space=sflag, size = 0x8, scoped, tag = 'scoped memory for transformer_decoder_layer.3']
    #allocation4 [shape = 'u8[32768]{0}', space=vmem, size = 0x8000, scoped, tag = 'input window, operand 4, single buffered']
    #allocation5 [shape = 's32[1]{0}', space=sflag, size = 0x4, scoped, tag = 'scoped memory for transformer_decoder_layer.3']
    #allocation6 [shape = 'u8[32768]{0}', space=vmem, size = 0x8000, scoped, tag = 'input window, operand 6, single buffered']
    %15 = vsyncpa [#allocation3], 0
    %16 = vsyncpa [#allocation5], 0
    loop: start=0, step=1, limit=4
    $region2: #{transformer_decoder_layer.3} parent=1 // loop_pre_header
      _
    $region3: #{transformer_decoder_layer.3} parent=1 // loop_header
      %s18 = sphi 0, %s22
      %p19 = scmp.ge.s32.totalorder %s18, 4
      %s28 = sphi 0, %s30
      %s31 = sphi 0, %s28
      %s32 = sphi 0, %s31
      %s48 = sphi 0, %s32
      %s54 = sphi 0, %s56
      %s57 = sphi 0, %s54
      %s58 = sphi 0, %s57
      %s74 = sphi 0, %s58
      %s78 = sphi 0, %s78
      %s80 = sphi 0, %s78
      %s81 = sphi 0, %s80
      %s95 = sphi 0, %s81
      %s99 = sphi 0, %s99
      %s101 = sphi 0, %s99
      %s102 = sphi 0, %s101
      %s116 = sphi 0, %s102
      %s120 = sphi 0, %s120
      %s122 = sphi 0, %s120
      %s123 = sphi 0, %s122
      %s137 = sphi 0, %s123
      %s141 = sphi 0, %s141
      %s143 = sphi 0, %s141
      %s144 = sphi 0, %s143
      %s158 = sphi 0, %s144
      %s162 = sphi 0, %s162
      %s164 = sphi 0, %s162
      %s165 = sphi 0, %s164
      %s179 = sphi 0, %s165
      %s183 = sphi 0, %s183
      %s185 = sphi 0, %s183
      %s186 = sphi 0, %s185
      %s200 = sphi 0, %s186
      %s204 = sphi 0, %s204
      %s206 = sphi 0, %s204
      %s207 = sphi 0, %s206
      %s221 = sphi 0, %s207
      %s225 = sphi 0, %s225
      %s227 = sphi 0, %s225
      %s228 = sphi 0, %s227
      %s242 = sphi 0, %s228
      %s248 = sphi 0, %s250
      %s251 = sphi 0, %s248
      %s252 = sphi 0, %s251
      %s268 = sphi 0, %s252
    $region4: #{transformer_decoder_layer.3} parent=1 // loop_header_branch
      %21 = sbr.rel (%p19) target = $region8
    $region5: #{transformer_decoder_layer.3} parent=1 // loop_body
      %s23 = ssub.s32 %s18, 1
      %s24 = ssub.s32 %s18, 2
      %s25 = sadd.s32 %s18, 1
      %s26 = ssub.s32 %s18, %s25
      %p27 = scmp.eq.s32.totalorder %s26, 0
      %s29 = sadd.s32 %s28, 1
      %s30 = scalar_select %p27, %s28, %s29
      %p33 = pneg %p27
      %p34 = scmp.eq.s32.totalorder %s18, 1
      %p35 = por %p33, %p34
      %p36 = scmp.ne.s32.totalorder %s28, %s31
      %p37 = scmp.eq.s32.totalorder %s18, 0
      %p38 = por %p36, %p37
      %p39 = scmp.ne.s32.totalorder %s28, %s31
      %p40 = scmp.eq.s32.totalorder %s23, 1
      %p41 = por %p39, %p40
      %p42 = scmp.ne.s32.totalorder %s31, %s32
      %p43 = scmp.eq.s32.totalorder %s23, 0
      %p44 = por %p42, %p43
      %p45 = scmp.ne.s32.totalorder %s31, %s32
      %p46 = scmp.eq.s32.totalorder %s24, 1
      %p47 = por %p45, %p46
      %p49 = scmp.ne.s32.totalorder %s32, %s48
      %p50 = scmp.eq.s32.totalorder %s24, 0
      %p51 = por %p49, %p50
      %s52 = ssub.s32 %s18, %s25
      %p53 = scmp.eq.s32.totalorder %s52, 0
      %s55 = sadd.s32 %s54, 1
      %s56 = scalar_select %p53, %s54, %s55
      %p59 = pneg %p53
      %p60 = scmp.eq.s32.totalorder %s18, 1
      %p61 = por %p59, %p60
      %p62 = scmp.ne.s32.totalorder %s54, %s57
      %p63 = scmp.eq.s32.totalorder %s18, 0
      %p64 = por %p62, %p63
      %p65 = scmp.ne.s32.totalorder %s54, %s57
      %p66 = scmp.eq.s32.totalorder %s23, 1
      %p67 = por %p65, %p66
      %p68 = scmp.ne.s32.totalorder %s57, %s58
      %p69 = scmp.eq.s32.totalorder %s23, 0
      %p70 = por %p68, %p69
      %p71 = scmp.ne.s32.totalorder %s57, %s58
      %p72 = scmp.eq.s32.totalorder %s24, 1
      %p73 = por %p71, %p72
      %p75 = scmp.ne.s32.totalorder %s58, %s74
      %p76 = scmp.eq.s32.totalorder %s24, 0
      %p77 = por %p75, %p76
      %s79 = sadd.s32 %s78, 1
      %p82 = scmp.eq.s32.totalorder %s18, 1
      %p83 = scmp.ne.s32.totalorder %s78, %s80
      %p84 = scmp.eq.s32.totalorder %s18, 0
      %p85 = por %p83, %p84
      %p86 = scmp.ne.s32.totalorder %s78, %s80
      %p87 = scmp.eq.s32.totalorder %s23, 1
      %p88 = por %p86, %p87
      %p89 = scmp.ne.s32.totalorder %s80, %s81
      %p90 = scmp.eq.s32.totalorder %s23, 0
      %p91 = por %p89, %p90
      %p92 = scmp.ne.s32.totalorder %s80, %s81
      %p93 = scmp.eq.s32.totalorder %s24, 1
      %p94 = por %p92, %p93
      %p96 = scmp.ne.s32.totalorder %s81, %s95
      %p97 = scmp.eq.s32.totalorder %s24, 0
      %p98 = por %p96, %p97
      %s100 = sadd.s32 %s99, 1
      %p103 = scmp.eq.s32.totalorder %s18, 1
      %p104 = scmp.ne.s32.totalorder %s99, %s101
      %p105 = scmp.eq.s32.totalorder %s18, 0
      %p106 = por %p104, %p105
      %p107 = scmp.ne.s32.totalorder %s99, %s101
      %p108 = scmp.eq.s32.totalorder %s23, 1
      %p109 = por %p107, %p108
      %p110 = scmp.ne.s32.totalorder %s101, %s102
      %p111 = scmp.eq.s32.totalorder %s23, 0
      %p112 = por %p110, %p111
      %p113 = scmp.ne.s32.totalorder %s101, %s102
      %p114 = scmp.eq.s32.totalorder %s24, 1
      %p115 = por %p113, %p114
      %p117 = scmp.ne.s32.totalorder %s102, %s116
      %p118 = scmp.eq.s32.totalorder %s24, 0
      %p119 = por %p117, %p118
      %s121 = sadd.s32 %s120, 1
      %p124 = scmp.eq.s32.totalorder %s18, 1
      %p125 = scmp.ne.s32.totalorder %s120, %s122
      %p126 = scmp.eq.s32.totalorder %s18, 0
      %p127 = por %p125, %p126
      %p128 = scmp.ne.s32.totalorder %s120, %s122
      %p129 = scmp.eq.s32.totalorder %s23, 1
      %p130 = por %p128, %p129
      %p131 = scmp.ne.s32.totalorder %s122, %s123
      %p132 = scmp.eq.s32.totalorder %s23, 0
      %p133 = por %p131, %p132
      %p134 = scmp.ne.s32.totalorder %s122, %s123
      %p135 = scmp.eq.s32.totalorder %s24, 1
      %p136 = por %p134, %p135
      %p138 = scmp.ne.s32.totalorder %s123, %s137
      %p139 = scmp.eq.s32.totalorder %s24, 0
      %p140 = por %p138, %p139
      %s142 = sadd.s32 %s141, 1
      %p145 = scmp.eq.s32.totalorder %s18, 1
      %p146 = scmp.ne.s32.totalorder %s141, %s143
      %p147 = scmp.eq.s32.totalorder %s18, 0
      %p148 = por %p146, %p147
      %p149 = scmp.ne.s32.totalorder %s141, %s143
      %p150 = scmp.eq.s32.totalorder %s23, 1
      %p151 = por %p149, %p150
      %p152 = scmp.ne.s32.totalorder %s143, %s144
      %p153 = scmp.eq.s32.totalorder %s23, 0
      %p154 = por %p152, %p153
      %p155 = scmp.ne.s32.totalorder %s143, %s144
      %p156 = scmp.eq.s32.totalorder %s24, 1
      %p157 = por %p155, %p156
      %p159 = scmp.ne.s32.totalorder %s144, %s158
      %p160 = scmp.eq.s32.totalorder %s24, 0
      %p161 = por %p159, %p160
      %s163 = sadd.s32 %s162, 1
      %p166 = scmp.eq.s32.totalorder %s18, 1
      %p167 = scmp.ne.s32.totalorder %s162, %s164
      %p168 = scmp.eq.s32.totalorder %s18, 0
      %p169 = por %p167, %p168
      %p170 = scmp.ne.s32.totalorder %s162, %s164
      %p171 = scmp.eq.s32.totalorder %s23, 1
      %p172 = por %p170, %p171
      %p173 = scmp.ne.s32.totalorder %s164, %s165
      %p174 = scmp.eq.s32.totalorder %s23, 0
      %p175 = por %p173, %p174
      %p176 = scmp.ne.s32.totalorder %s164, %s165
      %p177 = scmp.eq.s32.totalorder %s24, 1
      %p178 = por %p176, %p177
      %p180 = scmp.ne.s32.totalorder %s165, %s179
      %p181 = scmp.eq.s32.totalorder %s24, 0
      %p182 = por %p180, %p181
      %s184 = sadd.s32 %s183, 1
      %p187 = scmp.eq.s32.totalorder %s18, 1
      %p188 = scmp.ne.s32.totalorder %s183, %s185
      %p189 = scmp.eq.s32.totalorder %s18, 0
      %p190 = por %p188, %p189
      %p191 = scmp.ne.s32.totalorder %s183, %s185
      %p192 = scmp.eq.s32.totalorder %s23, 1
      %p193 = por %p191, %p192
      %p194 = scmp.ne.s32.totalorder %s185, %s186
      %p195 = scmp.eq.s32.totalorder %s23, 0
      %p196 = por %p194, %p195
      %p197 = scmp.ne.s32.totalorder %s185, %s186
      %p198 = scmp.eq.s32.totalorder %s24, 1
      %p199 = por %p197, %p198
      %p201 = scmp.ne.s32.totalorder %s186, %s200
      %p202 = scmp.eq.s32.totalorder %s24, 0
      %p203 = por %p201, %p202
      %s205 = sadd.s32 %s204, 1
      %p208 = scmp.eq.s32.totalorder %s18, 1
      %p209 = scmp.ne.s32.totalorder %s204, %s206
      %p210 = scmp.eq.s32.totalorder %s18, 0
      %p211 = por %p209, %p210
      %p212 = scmp.ne.s32.totalorder %s204, %s206
      %p213 = scmp.eq.s32.totalorder %s23, 1
      %p214 = por %p212, %p213
      %p215 = scmp.ne.s32.totalorder %s206, %s207
      %p216 = scmp.eq.s32.totalorder %s23, 0
      %p217 = por %p215, %p216
      %p218 = scmp.ne.s32.totalorder %s206, %s207
      %p219 = scmp.eq.s32.totalorder %s24, 1
      %p220 = por %p218, %p219
      %p222 = scmp.ne.s32.totalorder %s207, %s221
      %p223 = scmp.eq.s32.totalorder %s24, 0
      %p224 = por %p222, %p223
      %s226 = sadd.s32 %s225, 1
      %p229 = scmp.eq.s32.totalorder %s18, 1
      %p230 = scmp.ne.s32.totalorder %s225, %s227
      %p231 = scmp.eq.s32.totalorder %s18, 0
      %p232 = por %p230, %p231
      %p233 = scmp.ne.s32.totalorder %s225, %s227
      %p234 = scmp.eq.s32.totalorder %s23, 1
      %p235 = por %p233, %p234
      %p236 = scmp.ne.s32.totalorder %s227, %s228
      %p237 = scmp.eq.s32.totalorder %s23, 0
      %p238 = por %p236, %p237
      %p239 = scmp.ne.s32.totalorder %s227, %s228
      %p240 = scmp.eq.s32.totalorder %s24, 1
      %p241 = por %p239, %p240
      %p243 = scmp.ne.s32.totalorder %s228, %s242
      %p244 = scmp.eq.s32.totalorder %s24, 0
      %p245 = por %p243, %p244
      %s246 = ssub.s32 %s18, %s25
      %p247 = scmp.eq.s32.totalorder %s246, 0
      %s249 = sadd.s32 %s248, 1
      %s250 = scalar_select %p247, %s248, %s249
      %p253 = pneg %p247
      %p254 = scmp.eq.s32.totalorder %s18, 1
      %p255 = por %p253, %p254
      %p256 = scmp.ne.s32.totalorder %s248, %s251
      %p257 = scmp.eq.s32.totalorder %s18, 0
      %p258 = por %p256, %p257
      %p259 = scmp.ne.s32.totalorder %s248, %s251
      %p260 = scmp.eq.s32.totalorder %s23, 1
      %p261 = por %p259, %p260
      %p262 = scmp.ne.s32.totalorder %s251, %s252
      %p263 = scmp.eq.s32.totalorder %s23, 0
      %p264 = por %p262, %p263
      %p265 = scmp.ne.s32.totalorder %s251, %s252
      %p266 = scmp.eq.s32.totalorder %s24, 1
      %p267 = por %p265, %p266
      %p269 = scmp.ne.s32.totalorder %s252, %s268
      %p270 = scmp.eq.s32.totalorder %s24, 0
      %p271 = por %p269, %p270
      %p272 = scmp.le.s32.totalorder 1, %s18
      %p273 = scmp.lt.s32.totalorder %s18, 3
      %p274 = pnand %p272, %p273
      %p275 = pneg %p274
      // Predicated region
      $region9: #{transformer_decoder_layer.3} parent=5 // pred_check
        _
      $region10: #{transformer_decoder_layer.3} parent=5 // pred_check_branch
        %277 = sbr.rel (%p274) target = $region12
      $region11: #{transformer_decoder_layer.3} parent=5 // pred_region
        %s278 = ssub.s32 %s18, 1
        // Predicated region
        $region13: #{transformer_decoder_layer.3} parent=11 // pred_check
          %p279 = pneg %p91
        $region14: #{transformer_decoder_layer.3} parent=11 // pred_check_branch
          %281 = sbr.rel (%p279) target = $region16
        $region15: #{transformer_decoder_layer.3} parent=11 // pred_region
          %283 = vsyncadd [#allocation3], 0
          %s284 = sshll.u32 %s2, 4
          %s285 = int_to_ptr.hbm [resolvable:$true] %s284
          %s286 = sshll.u32 [#allocation2], 4
          %s287 = int_to_ptr.vmem [resolvable:$true] %s286
          %292 = dma.hbm_to_vmem [thread:$0]  %s285, 2048, %s287, [#allocation3], 128, 128, 8
        $region16: #{transformer_decoder_layer.3} parent=11 // pred_fallthru
          _
        // Predicated region
        $region17: #{transformer_decoder_layer.3} parent=11 // pred_check
          %p293 = pneg %p112
        $region18: #{transformer_decoder_layer.3} parent=11 // pred_check_branch
          %295 = sbr.rel (%p293) target = $region20
        $region19: #{transformer_decoder_layer.3} parent=11 // pred_region
          _
        $region20: #{transformer_decoder_layer.3} parent=11 // pred_fallthru
          _
        // Predicated region
        $region21: #{transformer_decoder_layer.3} parent=11 // pred_check
          %p296 = pneg %p133
        $region22: #{transformer_decoder_layer.3} parent=11 // pred_check_branch
          %298 = sbr.rel (%p296) target = $region24
        $region23: #{transformer_decoder_layer.3} parent=11 // pred_region
          %300 = vsyncadd [#allocation5], 0
          %s301 = sshll.u32 %s4, 4
          %s302 = int_to_ptr.hbm [resolvable:$true] %s301
          %s303 = sshll.u32 [#allocation4], 4
          %s304 = int_to_ptr.vmem [resolvable:$true] %s303
          %309 = dma.hbm_to_vmem [thread:$0]  %s302, 1024, %s304, [#allocation5], 64, 64, 4
        $region24: #{transformer_decoder_layer.3} parent=11 // pred_fallthru
          _
        // Predicated region
        $region25: #{transformer_decoder_layer.3} parent=11 // pred_check
          %p310 = pneg %p154
        $region26: #{transformer_decoder_layer.3} parent=11 // pred_check_branch
          %312 = sbr.rel (%p310) target = $region28
        $region27: #{transformer_decoder_layer.3} parent=11 // pred_region
          _
        $region28: #{transformer_decoder_layer.3} parent=11 // pred_fallthru
          _
        // Predicated region
        $region29: #{transformer_decoder_layer.3} parent=11 // pred_check
          %p313 = pneg %p175
        $region30: #{transformer_decoder_layer.3} parent=11 // pred_check_branch
          %315 = sbr.rel (%p313) target = $region32
        $region31: #{transformer_decoder_layer.3} parent=11 // pred_region
          %317 = vsyncadd [#allocation5], 0
          %s318 = sshll.u32 %s6, 4
          %s319 = int_to_ptr.hbm [resolvable:$true] %s318
          %s320 = sshll.u32 [#allocation6], 4
          %s321 = int_to_ptr.vmem [resolvable:$true] %s320
          %326 = dma.hbm_to_vmem [thread:$0]  %s319, 1024, %s321, [#allocation5], 64, 64, 4
        $region32: #{transformer_decoder_layer.3} parent=11 // pred_fallthru
          _
        // Predicated region
        $region33: #{transformer_decoder_layer.3} parent=11 // pred_check
          %p327 = pneg %p196
        $region34: #{transformer_decoder_layer.3} parent=11 // pred_check_branch
          %329 = sbr.rel (%p327) target = $region36
        $region35: #{transformer_decoder_layer.3} parent=11 // pred_region
          _
        $region36: #{transformer_decoder_layer.3} parent=11 // pred_fallthru
          _
        // Predicated region
        $region37: #{transformer_decoder_layer.3} parent=11 // pred_check
          %p330 = pneg %p217
        $region38: #{transformer_decoder_layer.3} parent=11 // pred_check_branch
          %332 = sbr.rel (%p330) target = $region40
        $region39: #{transformer_decoder_layer.3} parent=11 // pred_region
          _
        $region40: #{transformer_decoder_layer.3} parent=11 // pred_fallthru
          _
        // Predicated region
        $region41: #{transformer_decoder_layer.3} parent=11 // pred_check
          %p333 = pneg %p238
        $region42: #{transformer_decoder_layer.3} parent=11 // pred_check_branch
          %335 = sbr.rel (%p333) target = $region44
        $region43: #{transformer_decoder_layer.3} parent=11 // pred_region
          _
        $region44: #{transformer_decoder_layer.3} parent=11 // pred_fallthru
          _
      $region12: #{transformer_decoder_layer.3} parent=5 // pred_fallthru
        _
      %p336 = scmp.lt.s32.totalorder %s18, 2
      // Predicated region
      $region45: #{transformer_decoder_layer.3} parent=5 // pred_check
        %p337 = pneg %p336
      $region46: #{transformer_decoder_layer.3} parent=5 // pred_check_branch
        %339 = sbr.rel (%p337) target = $region48
      $region47: #{transformer_decoder_layer.3} parent=5 // pred_region
        // Predicated region
        $region49: #{transformer_decoder_layer.3} parent=47 // pred_check
          %p340 = pneg %p38
        $region50: #{transformer_decoder_layer.3} parent=47 // pred_check_branch
          %342 = sbr.rel (%p340) target = $region52
        $region51: #{transformer_decoder_layer.3} parent=47 // pred_region
          %s343 = smul.u32 2, %s18
          %p344 = scmp.lt.s32.totalorder %s343, 3
          %s345 = scalar_select %p344, %s343, 3
          %s346 = smul.addr %s345, 8
          %s347 = scalar_lea.vmem %s0, %s346
          %s348 = smul.u32 2, %s18
        $region52: #{transformer_decoder_layer.3} parent=47 // pred_fallthru
          _
        // Predicated region
        $region53: #{transformer_decoder_layer.3} parent=47 // pred_check
          %p349 = pneg %p64
        $region54: #{transformer_decoder_layer.3} parent=47 // pred_check_branch
          %351 = sbr.rel (%p349) target = $region56
        $region55: #{transformer_decoder_layer.3} parent=47 // pred_region
          %s352 = smul.u32 2, %s18
          %p353 = scmp.lt.s32.totalorder %s352, 3
          %s354 = scalar_select %p353, %s352, 3
          %s355 = smul.addr %s354, 8
          %s356 = scalar_lea.vmem %s1, %s355
          %s357 = smul.u32 2, %s18
        $region56: #{transformer_decoder_layer.3} parent=47 // pred_fallthru
          _
      $region48: #{transformer_decoder_layer.3} parent=5 // pred_fallthru
        _
      %p358 = scmp.le.s32.totalorder 1, %s18
      %p359 = scmp.lt.s32.totalorder %s18, 3
      %p360 = pnand %p358, %p359
      %p361 = pneg %p360
      // Predicated region
      $region57: #{transformer_decoder_layer.3} parent=5 // pred_check
        _
      $region58: #{transformer_decoder_layer.3} parent=5 // pred_check_branch
        %363 = sbr.rel (%p360) target = $region60
      $region59: #{transformer_decoder_layer.3} parent=5 // pred_region
        %s364 = ssub.s32 %s18, 1
        // Predicated region
        $region61: #{transformer_decoder_layer.3} parent=59 // pred_check
          %p365 = pneg %p91
        $region62: #{transformer_decoder_layer.3} parent=59 // pred_check_branch
          %367 = sbr.rel (%p365) target = $region64
        $region63: #{transformer_decoder_layer.3} parent=59 // pred_region
          %369 = dma.done [#allocation3], 2048
        $region64: #{transformer_decoder_layer.3} parent=59 // pred_fallthru
          _
        // Predicated region
        $region65: #{transformer_decoder_layer.3} parent=59 // pred_check
          %p370 = pneg %p133
        $region66: #{transformer_decoder_layer.3} parent=59 // pred_check_branch
          %372 = sbr.rel (%p370) target = $region68
        $region67: #{transformer_decoder_layer.3} parent=59 // pred_region
          %374 = dma.done [#allocation5], 1024
        $region68: #{transformer_decoder_layer.3} parent=59 // pred_fallthru
          _
        // Predicated region
        $region69: #{transformer_decoder_layer.3} parent=59 // pred_check
          %p375 = pneg %p175
        $region70: #{transformer_decoder_layer.3} parent=59 // pred_check_branch
          %377 = sbr.rel (%p375) target = $region72
        $region71: #{transformer_decoder_layer.3} parent=59 // pred_region
          %379 = dma.done [#allocation5], 1024
        $region72: #{transformer_decoder_layer.3} parent=59 // pred_fallthru
          _
        %s380 = smul.u32 2, %s23
        %p381 = scmp.lt.s32.totalorder %s380, 3
        %s382 = scalar_select %p381, %s380, 3
        %s383 = smul.addr %s382, 8
        %s384 = scalar_lea.vmem %s0, %s383
        %p385 = pneg %p44
        %p386 = pneg %p41
        %s387 = smul.u32 2, %s23
        %p388 = scmp.lt.s32.totalorder %s387, 3
        %s389 = scalar_select %p388, %s387, 3
        %s390 = smul.addr %s389, 8
        %s391 = scalar_lea.vmem %s1, %s390
        %p392 = pneg %p70
        %p393 = pneg %p67
        %p394 = pneg %p91
        %p395 = pneg %p88
        %p396 = pneg %p112
        %p397 = pneg %p109
        %p398 = pneg %p133
        %p399 = pneg %p130
        %p400 = pneg %p154
        %p401 = pneg %p151
        %p402 = pneg %p175
        %p403 = pneg %p172
        %p404 = pneg %p196
        %p405 = pneg %p193
        %p406 = pneg %p217
        %p407 = pneg %p214
        %p408 = pneg %p238
        %p409 = pneg %p235
        %p410 = pneg %p264
        %p411 = pneg %p261
        %s412 = smul.u32 2, %s23
        %p413 = scmp.lt.s32.totalorder %s412, 3
        %s414 = scalar_select %p413, %s412, 3
        %s415 = smul.addr %s414, 8
        %s416 = scalar_lea.vmem %s10, %s415
        %s417 = smul.u32 2, %s23
        %p418 = scmp.lt.s32.totalorder %s417, 3
        %s419 = scalar_select %p418, %s417, 3
        %s420 = smul.addr %s419, 8
        %s421 = scalar_lea.vmem %s0, %s420
        %s422 = smul.u32 2, %s23
        %s423 = smul.u32 2, %s23
        %p424 = scmp.lt.s32.totalorder %s423, 3
        %s425 = scalar_select %p424, %s423, 3
        %s426 = smul.addr %s425, 8
        %s427 = scalar_lea.vmem %s1, %s426
        %s428 = smul.u32 2, %s23
        %s429 = smul.u32 2, %s23
        %p430 = scmp.lt.s32.totalorder %s429, 3
        %s431 = scalar_select %p430, %s429, 3
        %s432 = smul.addr %s431, 8
        %s433 = scalar_lea.vmem %s10, %s432
        %s434 = smul.u32 2, %s23
        %v436 = vld [vmem:[%s421] sm:$0xff]
        %v437 = vld [vmem:[%s421 + $0x8] sm:$0xff]
        %v438 = vld [vmem:[%s427] sm:$0xff]
        %v439 = vld [vmem:[%s427 + $0x8] sm:$0xff]
        %v440 = vadd.f32 %v436, %v438
        %v441 = vadd.f32 %v437, %v439
        %v442 = vpack.c.bf16 %v441, %v440
        %v443 = vld [vmem:[#allocation2] sm:$0xff]
        %v444 = vld [vmem:[#allocation2 + $0x8] sm:$0xff]
        %v445 = vld [vmem:[#allocation2 + $0x10] sm:$0xff]
        %v446 = vld [vmem:[#allocation2 + $0x18] sm:$0xff]
        %v447 = vld [vmem:[#allocation2 + $0x20] sm:$0xff]
        %v448 = vld [vmem:[#allocation2 + $0x28] sm:$0xff]
        %v449 = vld [vmem:[#allocation2 + $0x30] sm:$0xff]
        %v450 = vld [vmem:[#allocation2 + $0x38] sm:$0xff]
        %v451 = vld [vmem:[#allocation2 + $0x40] sm:$0xff]
        %v452 = vld [vmem:[#allocation2 + $0x48] sm:$0xff]
        %v453 = vld [vmem:[#allocation2 + $0x50] sm:$0xff]
        %v454 = vld [vmem:[#allocation2 + $0x58] sm:$0xff]
        %v455 = vld [vmem:[#allocation2 + $0x60] sm:$0xff]
        %v456 = vld [vmem:[#allocation2 + $0x68] sm:$0xff]
        %v457 = vld [vmem:[#allocation2 + $0x70] sm:$0xff]
        %v458 = vld [vmem:[#allocation2 + $0x78] sm:$0xff]
        %v459 = vld [vmem:[%s3] sm:$0x3]
        %v461 = vperm.slane %v459, 0
        %v462 = vperm.slane %v459, 1
        %v481 = vunpack.c.l.b16 %v443
        %v482 = vunpack.c.h.b16 %v443
        %v483 = vunpack.c.l.b16 %v444
        %v484 = vunpack.c.h.b16 %v444
        %v485 = vunpack.c.l.b16 %v445
        %v486 = vunpack.c.h.b16 %v445
        %v487 = vunpack.c.l.b16 %v446
        %v488 = vunpack.c.h.b16 %v446
        %v489 = vunpack.c.l.b16 %v447
        %v490 = vunpack.c.h.b16 %v447
        %v491 = vunpack.c.l.b16 %v448
        %v492 = vunpack.c.h.b16 %v448
        %v493 = vunpack.c.l.b16 %v449
        %v494 = vunpack.c.h.b16 %v449
        %v495 = vunpack.c.l.b16 %v450
        %v496 = vunpack.c.h.b16 %v450
        %v497 = vunpack.c.l.b16 %v451
        %v498 = vunpack.c.h.b16 %v451
        %v499 = vunpack.c.l.b16 %v452
        %v500 = vunpack.c.h.b16 %v452
        %v501 = vunpack.c.l.b16 %v453
        %v502 = vunpack.c.h.b16 %v453
        %v503 = vunpack.c.l.b16 %v454
        %v504 = vunpack.c.h.b16 %v454
        %v505 = vunpack.c.l.b16 %v455
        %v506 = vunpack.c.h.b16 %v455
        %v507 = vunpack.c.l.b16 %v456
        %v508 = vunpack.c.h.b16 %v456
        %v509 = vunpack.c.l.b16 %v457
        %v510 = vunpack.c.h.b16 %v457
        %v511 = vunpack.c.l.b16 %v458
        %v512 = vunpack.c.h.b16 %v458
        %v513 = vpack.c.b16 %v483, %v481
        %v514 = vpack.c.b16 %v484, %v482
        %v515 = vpack.c.b16 %v487, %v485
        %v516 = vpack.c.b16 %v488, %v486
        %v517 = vpack.c.b16 %v491, %v489
        %v518 = vpack.c.b16 %v492, %v490
        %v519 = vpack.c.b16 %v495, %v493
        %v520 = vpack.c.b16 %v496, %v494
        %v521 = vpack.c.b16 %v499, %v497
        %v522 = vpack.c.b16 %v500, %v498
        %v523 = vpack.c.b16 %v503, %v501
        %v524 = vpack.c.b16 %v504, %v502
        %v525 = vpack.c.b16 %v507, %v505
        %v526 = vpack.c.b16 %v508, %v506
        %v527 = vpack.c.b16 %v511, %v509
        %v528 = vpack.c.b16 %v512, %v510
        %545 = vmatpush.bf16.msra.mxu0 %v527
        %546 = vmatpush.bf16.msra.mxu0 %v525
        %547 = vmatpush.bf16.msra.mxu0 %v523
        %548 = vmatpush.bf16.msra.mxu0 %v521
        %549 = vmatpush.bf16.msra.mxu0 %v519
        %550 = vmatpush.bf16.msra.mxu0 %v517
        %551 = vmatpush.bf16.msra.mxu0 %v515
        %552 = vmatpush.bf16.msra.mxu0 %v513
        %553 = vmatmul.bf16.gmra.mxu0 %v442
        %v554 = vpop.f32.mrf.mxu0
        %v555 = vadd.f32 %v461, %v554
        %v556 = vpop.f32.mrf.mxu0
        %v557 = vadd.f32 %v461, %v556
        %558 = vdwg.mxu0
        %559 = vmatpush.bf16.msra.mxu0 %v528
        %560 = vmatpush.bf16.msra.mxu0 %v526
        %561 = vmatpush.bf16.msra.mxu0 %v524
        %562 = vmatpush.bf16.msra.mxu0 %v522
        %563 = vmatpush.bf16.msra.mxu0 %v520
        %564 = vmatpush.bf16.msra.mxu0 %v518
        %565 = vmatpush.bf16.msra.mxu0 %v516
        %566 = vmatpush.bf16.msra.mxu0 %v514
        %567 = vmatmul.bf16.gmra.mxu0 %v442
        %v568 = vpop.f32.mrf.mxu0
        %v569 = vadd.f32 %v462, %v568
        %v570 = vpop.f32.mrf.mxu0
        %v571 = vadd.f32 %v462, %v570
        %572 = vdwg.mxu0
        %v573 = vpack.c.bf16 %v437, %v436
        %v574 = vld [vmem:[#allocation4] sm:$0xf]
        %v575 = vld [vmem:[#allocation4 + $0x4] sm:$0xf]
        %v576 = vld [vmem:[#allocation4 + $0x8] sm:$0xf]
        %v577 = vld [vmem:[#allocation4 + $0xc] sm:$0xf]
        %v578 = vld [vmem:[#allocation4 + $0x10] sm:$0xf]
        %v579 = vld [vmem:[#allocation4 + $0x14] sm:$0xf]
        %v580 = vld [vmem:[#allocation4 + $0x18] sm:$0xf]
        %v581 = vld [vmem:[#allocation4 + $0x1c] sm:$0xf]
        %v582 = vld [vmem:[#allocation4 + $0x20] sm:$0xf]
        %v583 = vld [vmem:[#allocation4 + $0x24] sm:$0xf]
        %v584 = vld [vmem:[#allocation4 + $0x28] sm:$0xf]
        %v585 = vld [vmem:[#allocation4 + $0x2c] sm:$0xf]
        %v586 = vld [vmem:[#allocation4 + $0x30] sm:$0xf]
        %v587 = vld [vmem:[#allocation4 + $0x34] sm:$0xf]
        %v588 = vld [vmem:[#allocation4 + $0x38] sm:$0xf]
        %v589 = vld [vmem:[#allocation4 + $0x3c] sm:$0xf]
        %v590 = vld [vmem:[%s5] sm:$0x1]
        %v592 = vperm.slane %v590, 0
        %v610 = vunpack.c.l.b16 %v574
        %v611 = vunpack.c.l.b16 %v575
        %v612 = vunpack.c.l.b16 %v576
        %v613 = vunpack.c.l.b16 %v577
        %v614 = vunpack.c.l.b16 %v578
        %v615 = vunpack.c.l.b16 %v579
        %v616 = vunpack.c.l.b16 %v580
        %v617 = vunpack.c.l.b16 %v581
        %v618 = vunpack.c.l.b16 %v582
        %v619 = vunpack.c.l.b16 %v583
        %v620 = vunpack.c.l.b16 %v584
        %v621 = vunpack.c.l.b16 %v585
        %v622 = vunpack.c.l.b16 %v586
        %v623 = vunpack.c.l.b16 %v587
        %v624 = vunpack.c.l.b16 %v588
        %v625 = vunpack.c.l.b16 %v589
        %v626 = vpack.c.b16 %v611, %v610
        %v627 = vpack.c.b16 %v613, %v612
        %v628 = vpack.c.b16 %v615, %v614
        %v629 = vpack.c.b16 %v617, %v616
        %v630 = vpack.c.b16 %v619, %v618
        %v631 = vpack.c.b16 %v621, %v620
        %v632 = vpack.c.b16 %v623, %v622
        %v633 = vpack.c.b16 %v625, %v624
        %642 = vmatpush.bf16.msra.mxu0 %v633
        %643 = vmatpush.bf16.msra.mxu0 %v632
        %644 = vmatpush.bf16.msra.mxu0 %v631
        %645 = vmatpush.bf16.msra.mxu0 %v630
        %646 = vmatpush.bf16.msra.mxu0 %v629
        %647 = vmatpush.bf16.msra.mxu0 %v628
        %648 = vmatpush.bf16.msra.mxu0 %v627
        %649 = vmatpush.bf16.msra.mxu0 %v626
        %650 = vmatmul.bf16.gmra.mxu0 %v573
        %v651 = vpop.f32.mrf.mxu0
        %v652 = vadd.f32 %v592, %v651
        %v653 = vpop.f32.mrf.mxu0
        %v654 = vadd.f32 %v592, %v653
        %655 = vdwg.mxu0
        %657 = vrot.lane.b32.xlu0 %v555, 96
        %v658 = vpop.permute.xlu0 %657
        %660 = vrot.lane.b32.xlu0 %v555, 64
        %v661 = vpop.permute.xlu0 %660
        %663 = vrot.lane.b32.xlu0 %v555, 32
        %v664 = vpop.permute.xlu0 %663
        %667 = vrot.lane.b32.xlu0 %v557, 96
        %v668 = vpop.permute.xlu0 %667
        %670 = vrot.lane.b32.xlu0 %v557, 64
        %v671 = vpop.permute.xlu0 %670
        %673 = vrot.lane.b32.xlu0 %v557, 32
        %v674 = vpop.permute.xlu0 %673
        %v676 = vpack.c.bf16 %v555, %v555
        %v677 = vpack.c.bf16 %v658, %v658
        %v678 = vpack.c.bf16 %v661, %v661
        %v679 = vpack.c.bf16 %v664, %v664
        %v680 = vpack.c.bf16 %v557, %v557
        %v681 = vpack.c.bf16 %v668, %v668
        %v682 = vpack.c.bf16 %v671, %v671
        %v683 = vpack.c.bf16 %v674, %v674
        %685 = vrot.lane.b32.xlu0 %v569, 96
        %v686 = vpop.permute.xlu0 %685
        %688 = vrot.lane.b32.xlu0 %v569, 64
        %v689 = vpop.permute.xlu0 %688
        %691 = vrot.lane.b32.xlu0 %v569, 32
        %v692 = vpop.permute.xlu0 %691
        %695 = vrot.lane.b32.xlu0 %v571, 96
        %v696 = vpop.permute.xlu0 %695
        %698 = vrot.lane.b32.xlu0 %v571, 64
        %v699 = vpop.permute.xlu0 %698
        %701 = vrot.lane.b32.xlu0 %v571, 32
        %v702 = vpop.permute.xlu0 %701
        %v704 = vpack.c.bf16 %v569, %v569
        %v705 = vpack.c.bf16 %v686, %v686
        %v706 = vpack.c.bf16 %v689, %v689
        %v707 = vpack.c.bf16 %v692, %v692
        %v708 = vpack.c.bf16 %v571, %v571
        %v709 = vpack.c.bf16 %v696, %v696
        %v710 = vpack.c.bf16 %v699, %v699
        %v711 = vpack.c.bf16 %v702, %v702
        %713 = vrot.lane.b32.xlu0 %v652, 96
        %v714 = vpop.permute.xlu0 %713
        %716 = vrot.lane.b32.xlu0 %v652, 64
        %v717 = vpop.permute.xlu0 %716
        %719 = vrot.lane.b32.xlu0 %v652, 32
        %v720 = vpop.permute.xlu0 %719
        %723 = vrot.lane.b32.xlu0 %v654, 96
        %v724 = vpop.permute.xlu0 %723
        %726 = vrot.lane.b32.xlu0 %v654, 64
        %v727 = vpop.permute.xlu0 %726
        %729 = vrot.lane.b32.xlu0 %v654, 32
        %v730 = vpop.permute.xlu0 %729
        %v732 = vpack.c.bf16 %v652, %v652
        %v733 = vpack.c.bf16 %v714, %v714
        %v734 = vpack.c.bf16 %v717, %v717
        %v735 = vpack.c.bf16 %v720, %v720
        %v736 = vpack.c.bf16 %v654, %v654
        %v737 = vpack.c.bf16 %v724, %v724
        %v738 = vpack.c.bf16 %v727, %v727
        %v739 = vpack.c.bf16 %v730, %v730
        %vm740 = vcmask 261120
        %v742 = vsel %vm740, %v676, 0
        %v745 = vsel %vm740, %v704, 0
        %747 = vmatpush.bf16.xpose.msra.mxu0 0
        %748 = vmatpush.bf16.xpose.msra.mxu0 0
        %749 = vmatpush.bf16.xpose.msra.mxu0 0
        %750 = vmatpush.bf16.xpose.msra.mxu0 0
        %751 = vmatpush.bf16.xpose.msra.mxu0 0
        %752 = vmatpush.bf16.xpose.msra.mxu0 0
        %753 = vmatpush.bf16.xpose.msra.mxu0 0
        %754 = vmatpush.bf16.xpose.msra.mxu0 %v745
        %755 = vmatmul.bf16.gmra.mxu0 %v742
        %v756 = vpop.f32.mrf.mxu0
        %v757 = vadd.f32 0.0, %v756
        %v758 = vpop.f32.mrf.mxu0
        %759 = vdwg.mxu0
        %v761 = vsel %vm740, %v677, 0
        %v764 = vsel %vm740, %v705, 0
        %766 = vmatpush.bf16.xpose.msra.mxu0 0
        %767 = vmatpush.bf16.xpose.msra.mxu0 0
        %768 = vmatpush.bf16.xpose.msra.mxu0 0
        %769 = vmatpush.bf16.xpose.msra.mxu0 0
        %770 = vmatpush.bf16.xpose.msra.mxu0 0
        %771 = vmatpush.bf16.xpose.msra.mxu0 0
        %772 = vmatpush.bf16.xpose.msra.mxu0 0
        %773 = vmatpush.bf16.xpose.msra.mxu0 %v764
        %774 = vmatmul.bf16.gmra.mxu0 %v761
        %v775 = vpop.f32.mrf.mxu0
        %v776 = vadd.f32 0.0, %v775
        %v777 = vpop.f32.mrf.mxu0
        %778 = vdwg.mxu0
        %v780 = vsel %vm740, %v678, 0
        %v783 = vsel %vm740, %v706, 0
        %785 = vmatpush.bf16.xpose.msra.mxu0 0
        %786 = vmatpush.bf16.xpose.msra.mxu0 0
        %787 = vmatpush.bf16.xpose.msra.mxu0 0
        %788 = vmatpush.bf16.xpose.msra.mxu0 0
        %789 = vmatpush.bf16.xpose.msra.mxu0 0
        %790 = vmatpush.bf16.xpose.msra.mxu0 0
        %791 = vmatpush.bf16.xpose.msra.mxu0 0
        %792 = vmatpush.bf16.xpose.msra.mxu0 %v783
        %793 = vmatmul.bf16.gmra.mxu0 %v780
        %v794 = vpop.f32.mrf.mxu0
        %v795 = vadd.f32 0.0, %v794
        %v796 = vpop.f32.mrf.mxu0
        %797 = vdwg.mxu0
        %v799 = vsel %vm740, %v679, 0
        %v802 = vsel %vm740, %v707, 0
        %804 = vmatpush.bf16.xpose.msra.mxu0 0
        %805 = vmatpush.bf16.xpose.msra.mxu0 0
        %806 = vmatpush.bf16.xpose.msra.mxu0 0
        %807 = vmatpush.bf16.xpose.msra.mxu0 0
        %808 = vmatpush.bf16.xpose.msra.mxu0 0
        %809 = vmatpush.bf16.xpose.msra.mxu0 0
        %810 = vmatpush.bf16.xpose.msra.mxu0 0
        %811 = vmatpush.bf16.xpose.msra.mxu0 %v802
        %812 = vmatmul.bf16.gmra.mxu0 %v799
        %v813 = vpop.f32.mrf.mxu0
        %v814 = vadd.f32 0.0, %v813
        %v815 = vpop.f32.mrf.mxu0
        %816 = vdwg.mxu0
        %v818 = vsel %vm740, %v680, 0
        %v821 = vsel %vm740, %v708, 0
        %823 = vmatpush.bf16.xpose.msra.mxu0 0
        %824 = vmatpush.bf16.xpose.msra.mxu0 0
        %825 = vmatpush.bf16.xpose.msra.mxu0 0
        %826 = vmatpush.bf16.xpose.msra.mxu0 0
        %827 = vmatpush.bf16.xpose.msra.mxu0 0
        %828 = vmatpush.bf16.xpose.msra.mxu0 0
        %829 = vmatpush.bf16.xpose.msra.mxu0 0
        %830 = vmatpush.bf16.xpose.msra.mxu0 %v821
        %831 = vmatmul.bf16.gmra.mxu0 %v818
        %v832 = vpop.f32.mrf.mxu0
        %v833 = vadd.f32 0.0, %v832
        %v834 = vpop.f32.mrf.mxu0
        %835 = vdwg.mxu0
        %v837 = vsel %vm740, %v681, 0
        %v840 = vsel %vm740, %v709, 0
        %842 = vmatpush.bf16.xpose.msra.mxu0 0
        %843 = vmatpush.bf16.xpose.msra.mxu0 0
        %844 = vmatpush.bf16.xpose.msra.mxu0 0
        %845 = vmatpush.bf16.xpose.msra.mxu0 0
        %846 = vmatpush.bf16.xpose.msra.mxu0 0
        %847 = vmatpush.bf16.xpose.msra.mxu0 0
        %848 = vmatpush.bf16.xpose.msra.mxu0 0
        %849 = vmatpush.bf16.xpose.msra.mxu0 %v840
        %850 = vmatmul.bf16.gmra.mxu0 %v837
        %v851 = vpop.f32.mrf.mxu0
        %v852 = vadd.f32 0.0, %v851
        %v853 = vpop.f32.mrf.mxu0
        %854 = vdwg.mxu0
        %v856 = vsel %vm740, %v682, 0
        %v859 = vsel %vm740, %v710, 0
        %861 = vmatpush.bf16.xpose.msra.mxu0 0
        %862 = vmatpush.bf16.xpose.msra.mxu0 0
        %863 = vmatpush.bf16.xpose.msra.mxu0 0
        %864 = vmatpush.bf16.xpose.msra.mxu0 0
        %865 = vmatpush.bf16.xpose.msra.mxu0 0
        %866 = vmatpush.bf16.xpose.msra.mxu0 0
        %867 = vmatpush.bf16.xpose.msra.mxu0 0
        %868 = vmatpush.bf16.xpose.msra.mxu0 %v859
        %869 = vmatmul.bf16.gmra.mxu0 %v856
        %v870 = vpop.f32.mrf.mxu0
        %v871 = vadd.f32 0.0, %v870
        %v872 = vpop.f32.mrf.mxu0
        %873 = vdwg.mxu0
        %v875 = vsel %vm740, %v683, 0
        %v878 = vsel %vm740, %v711, 0
        %880 = vmatpush.bf16.xpose.msra.mxu0 0
        %881 = vmatpush.bf16.xpose.msra.mxu0 0
        %882 = vmatpush.bf16.xpose.msra.mxu0 0
        %883 = vmatpush.bf16.xpose.msra.mxu0 0
        %884 = vmatpush.bf16.xpose.msra.mxu0 0
        %885 = vmatpush.bf16.xpose.msra.mxu0 0
        %886 = vmatpush.bf16.xpose.msra.mxu0 0
        %887 = vmatpush.bf16.xpose.msra.mxu0 %v878
        %888 = vmatmul.bf16.gmra.mxu0 %v875
        %v889 = vpop.f32.mrf.mxu0
        %v890 = vadd.f32 0.0, %v889
        %v891 = vpop.f32.mrf.mxu0
        %892 = vdwg.mxu0
        %vm893 = vcmask 64512
        %v894 = vsel %vm893, %v757, -inf
        %895 = vmax.xlane.f32.xlu0 %v894
        %v896 = vpop.xlane.xlu0 %895
        %v897 = vsel %vm893, %v776, -inf
        %898 = vmax.xlane.f32.xlu0 %v897
        %v899 = vpop.xlane.xlu0 %898
        %v900 = vsel %vm893, %v795, -inf
        %901 = vmax.xlane.f32.xlu0 %v900
        %v902 = vpop.xlane.xlu0 %901
        %v903 = vsel %vm893, %v814, -inf
        %904 = vmax.xlane.f32.xlu0 %v903
        %v905 = vpop.xlane.xlu0 %904
        %v906 = vsel %vm893, %v833, -inf
        %907 = vmax.xlane.f32.xlu0 %v906
        %v908 = vpop.xlane.xlu0 %907
        %v909 = vsel %vm893, %v852, -inf
        %910 = vmax.xlane.f32.xlu0 %v909
        %v911 = vpop.xlane.xlu0 %910
        %v912 = vsel %vm893, %v871, -inf
        %913 = vmax.xlane.f32.xlu0 %v912
        %v914 = vpop.xlane.xlu0 %913
        %v915 = vsel %vm893, %v890, -inf
        %916 = vmax.xlane.f32.xlu0 %v915
        %v917 = vpop.xlane.xlu0 %916
        %v918 = vsub.f32 %v757, %v896
        %v919 = vsub.f32 %v776, %v899
        %v920 = vsub.f32 %v795, %v902
        %v921 = vsub.f32 %v814, %v905
        %v922 = vsub.f32 %v833, %v908
        %v923 = vsub.f32 %v852, %v911
        %v924 = vsub.f32 %v871, %v914
        %v925 = vsub.f32 %v890, %v917
        %v926 = vmul.f32 %v918, 1.442695
        %v927 = vpow.pop %v926
        %v928 = vmul.f32 %v919, 1.442695
        %v929 = vpow.pop %v928
        %v930 = vmul.f32 %v920, 1.442695
        %v931 = vpow.pop %v930
        %v932 = vmul.f32 %v921, 1.442695
        %v933 = vpow.pop %v932
        %v934 = vmul.f32 %v922, 1.442695
        %v935 = vpow.pop %v934
        %v936 = vmul.f32 %v923, 1.442695
        %v937 = vpow.pop %v936
        %v938 = vmul.f32 %v924, 1.442695
        %v939 = vpow.pop %v938
        %v940 = vmul.f32 %v925, 1.442695
        %v941 = vpow.pop %v940
        %v942 = vsel %vm893, %v927, 0.0
        %943 = vadd.xlane.f32.xlu0 %v942
        %v944 = vpop.xlane.xlu0 %943
        %v945 = vsel %vm893, %v929, 0.0
        %946 = vadd.xlane.f32.xlu0 %v945
        %v947 = vpop.xlane.xlu0 %946
        %v948 = vsel %vm893, %v931, 0.0
        %949 = vadd.xlane.f32.xlu0 %v948
        %v950 = vpop.xlane.xlu0 %949
        %v951 = vsel %vm893, %v933, 0.0
        %952 = vadd.xlane.f32.xlu0 %v951
        %v953 = vpop.xlane.xlu0 %952
        %v954 = vsel %vm893, %v935, 0.0
        %955 = vadd.xlane.f32.xlu0 %v954
        %v956 = vpop.xlane.xlu0 %955
        %v957 = vsel %vm893, %v937, 0.0
        %958 = vadd.xlane.f32.xlu0 %v957
        %v959 = vpop.xlane.xlu0 %958
        %v960 = vsel %vm893, %v939, 0.0
        %961 = vadd.xlane.f32.xlu0 %v960
        %v962 = vpop.xlane.xlu0 %961
        %v963 = vsel %vm893, %v941, 0.0
        %964 = vadd.xlane.f32.xlu0 %v963
        %v965 = vpop.xlane.xlu0 %964
        %v966 = vrcp.pop %v944
        %v967 = vmul.f32 %v944, %v966
        %v968 = vsub.f32 1.0, %v967
        %v969 = vmul.f32 %v966, %v968
        %v970 = vadd.f32 %v966, %v969
        %vm971 = vweird.f32 %v944
        %vm972 = vweird.f32 %v966
        %vm973 = vmor %vm971, %vm972
        %v974 = vsel %vm973, %v966, %v970
        %v975 = vand.u32 2147483647, %v944
        %vm976 = vcmp.eq.f32.partialorder %v975, 8.507059e+37
        %v977 = vand.u32 %v944, 2147483648
        %v978 = vor.u32 1.1754944e-38, %v977
        %v979 = vsel %vm976, %v978, %v974
        %v980 = vmul.f32 %v927, %v979
        %v981 = vrcp.pop %v947
        %v982 = vmul.f32 %v947, %v981
        %v983 = vsub.f32 1.0, %v982
        %v984 = vmul.f32 %v981, %v983
        %v985 = vadd.f32 %v981, %v984
        %vm986 = vweird.f32 %v947
        %vm987 = vweird.f32 %v981
        %vm988 = vmor %vm986, %vm987
        %v989 = vsel %vm988, %v981, %v985
        %v990 = vand.u32 2147483647, %v947
        %vm991 = vcmp.eq.f32.partialorder %v990, 8.507059e+37
        %v992 = vand.u32 %v947, 2147483648
        %v993 = vor.u32 1.1754944e-38, %v992
        %v994 = vsel %vm991, %v993, %v989
        %v995 = vmul.f32 %v929, %v994
        %v996 = vrcp.pop %v950
        %v997 = vmul.f32 %v950, %v996
        %v998 = vsub.f32 1.0, %v997
        %v999 = vmul.f32 %v996, %v998
        %v1000 = vadd.f32 %v996, %v999
        %vm1001 = vweird.f32 %v950
        %vm1002 = vweird.f32 %v996
        %vm1003 = vmor %vm1001, %vm1002
        %v1004 = vsel %vm1003, %v996, %v1000
        %v1005 = vand.u32 2147483647, %v950
        %vm1006 = vcmp.eq.f32.partialorder %v1005, 8.507059e+37
        %v1007 = vand.u32 %v950, 2147483648
        %v1008 = vor.u32 1.1754944e-38, %v1007
        %v1009 = vsel %vm1006, %v1008, %v1004
        %v1010 = vmul.f32 %v931, %v1009
        %v1011 = vrcp.pop %v953
        %v1012 = vmul.f32 %v953, %v1011
        %v1013 = vsub.f32 1.0, %v1012
        %v1014 = vmul.f32 %v1011, %v1013
        %v1015 = vadd.f32 %v1011, %v1014
        %vm1016 = vweird.f32 %v953
        %vm1017 = vweird.f32 %v1011
        %vm1018 = vmor %vm1016, %vm1017
        %v1019 = vsel %vm1018, %v1011, %v1015
        %v1020 = vand.u32 2147483647, %v953
        %vm1021 = vcmp.eq.f32.partialorder %v1020, 8.507059e+37
        %v1022 = vand.u32 %v953, 2147483648
        %v1023 = vor.u32 1.1754944e-38, %v1022
        %v1024 = vsel %vm1021, %v1023, %v1019
        %v1025 = vmul.f32 %v933, %v1024
        %v1026 = vrcp.pop %v956
        %v1027 = vmul.f32 %v956, %v1026
        %v1028 = vsub.f32 1.0, %v1027
        %v1029 = vmul.f32 %v1026, %v1028
        %v1030 = vadd.f32 %v1026, %v1029
        %vm1031 = vweird.f32 %v956
        %vm1032 = vweird.f32 %v1026
        %vm1033 = vmor %vm1031, %vm1032
        %v1034 = vsel %vm1033, %v1026, %v1030
        %v1035 = vand.u32 2147483647, %v956
        %vm1036 = vcmp.eq.f32.partialorder %v1035, 8.507059e+37
        %v1037 = vand.u32 %v956, 2147483648
        %v1038 = vor.u32 1.1754944e-38, %v1037
        %v1039 = vsel %vm1036, %v1038, %v1034
        %v1040 = vmul.f32 %v935, %v1039
        %v1041 = vrcp.pop %v959
        %v1042 = vmul.f32 %v959, %v1041
        %v1043 = vsub.f32 1.0, %v1042
        %v1044 = vmul.f32 %v1041, %v1043
        %v1045 = vadd.f32 %v1041, %v1044
        %vm1046 = vweird.f32 %v959
        %vm1047 = vweird.f32 %v1041
        %vm1048 = vmor %vm1046, %vm1047
        %v1049 = vsel %vm1048, %v1041, %v1045
        %v1050 = vand.u32 2147483647, %v959
        %vm1051 = vcmp.eq.f32.partialorder %v1050, 8.507059e+37
        %v1052 = vand.u32 %v959, 2147483648
        %v1053 = vor.u32 1.1754944e-38, %v1052
        %v1054 = vsel %vm1051, %v1053, %v1049
        %v1055 = vmul.f32 %v937, %v1054
        %v1056 = vrcp.pop %v962
        %v1057 = vmul.f32 %v962, %v1056
        %v1058 = vsub.f32 1.0, %v1057
        %v1059 = vmul.f32 %v1056, %v1058
        %v1060 = vadd.f32 %v1056, %v1059
        %vm1061 = vweird.f32 %v962
        %vm1062 = vweird.f32 %v1056
        %vm1063 = vmor %vm1061, %vm1062
        %v1064 = vsel %vm1063, %v1056, %v1060
        %v1065 = vand.u32 2147483647, %v962
        %vm1066 = vcmp.eq.f32.partialorder %v1065, 8.507059e+37
        %v1067 = vand.u32 %v962, 2147483648
        %v1068 = vor.u32 1.1754944e-38, %v1067
        %v1069 = vsel %vm1066, %v1068, %v1064
        %v1070 = vmul.f32 %v939, %v1069
        %v1071 = vrcp.pop %v965
        %v1072 = vmul.f32 %v965, %v1071
        %v1073 = vsub.f32 1.0, %v1072
        %v1074 = vmul.f32 %v1071, %v1073
        %v1075 = vadd.f32 %v1071, %v1074
        %vm1076 = vweird.f32 %v965
        %vm1077 = vweird.f32 %v1071
        %vm1078 = vmor %vm1076, %vm1077
        %v1079 = vsel %vm1078, %v1071, %v1075
        %v1080 = vand.u32 2147483647, %v965
        %vm1081 = vcmp.eq.f32.partialorder %v1080, 8.507059e+37
        %v1082 = vand.u32 %v965, 2147483648
        %v1083 = vor.u32 1.1754944e-38, %v1082
        %v1084 = vsel %vm1081, %v1083, %v1079
        %v1085 = vmul.f32 %v941, %v1084
        %v1086 = vpack.c.bf16 %v980, %v980
        %v1087 = vpack.c.bf16 %v995, %v995
        %v1088 = vpack.c.bf16 %v1010, %v1010
        %v1089 = vpack.c.bf16 %v1025, %v1025
        %v1090 = vpack.c.bf16 %v1040, %v1040
        %v1091 = vpack.c.bf16 %v1055, %v1055
        %v1092 = vpack.c.bf16 %v1070, %v1070
        %v1093 = vpack.c.bf16 %v1085, %v1085
        %v1095 = vsel %vm893, %v1086, 0
        %vm1097 = vcmask 1043456
        %v1099 = vsel %vm1097, %v732, 0
        %1101 = vmatpush.bf16.msra.mxu0 0
        %1102 = vmatpush.bf16.msra.mxu0 0
        %1103 = vmatpush.bf16.msra.mxu0 0
        %1104 = vmatpush.bf16.msra.mxu0 0
        %1105 = vmatpush.bf16.msra.mxu0 0
        %1106 = vmatpush.bf16.msra.mxu0 0
        %1107 = vmatpush.bf16.msra.mxu0 0
        %1108 = vmatpush.bf16.msra.mxu0 %v1099
        %1109 = vmatmul.bf16.gmra.mxu0 %v1095
        %v1110 = vpop.f32.mrf.mxu0
        %v1111 = vadd.f32 0.0, %v1110
        %v1112 = vpop.f32.mrf.mxu0
        %1113 = vdwg.mxu0
        %v1115 = vsel %vm893, %v1087, 0
        %v1118 = vsel %vm1097, %v733, 0
        %1120 = vmatpush.bf16.msra.mxu0 0
        %1121 = vmatpush.bf16.msra.mxu0 0
        %1122 = vmatpush.bf16.msra.mxu0 0
        %1123 = vmatpush.bf16.msra.mxu0 0
        %1124 = vmatpush.bf16.msra.mxu0 0
        %1125 = vmatpush.bf16.msra.mxu0 0
        %1126 = vmatpush.bf16.msra.mxu0 0
        %1127 = vmatpush.bf16.msra.mxu0 %v1118
        %1128 = vmatmul.bf16.gmra.mxu0 %v1115
        %v1129 = vpop.f32.mrf.mxu0
        %v1130 = vadd.f32 0.0, %v1129
        %v1131 = vpop.f32.mrf.mxu0
        %1132 = vdwg.mxu0
        %v1134 = vsel %vm893, %v1088, 0
        %v1137 = vsel %vm1097, %v734, 0
        %1139 = vmatpush.bf16.msra.mxu0 0
        %1140 = vmatpush.bf16.msra.mxu0 0
        %1141 = vmatpush.bf16.msra.mxu0 0
        %1142 = vmatpush.bf16.msra.mxu0 0
        %1143 = vmatpush.bf16.msra.mxu0 0
        %1144 = vmatpush.bf16.msra.mxu0 0
        %1145 = vmatpush.bf16.msra.mxu0 0
        %1146 = vmatpush.bf16.msra.mxu0 %v1137
        %1147 = vmatmul.bf16.gmra.mxu0 %v1134
        %v1148 = vpop.f32.mrf.mxu0
        %v1149 = vadd.f32 0.0, %v1148
        %v1150 = vpop.f32.mrf.mxu0
        %1151 = vdwg.mxu0
        %v1153 = vsel %vm893, %v1089, 0
        %v1156 = vsel %vm1097, %v735, 0
        %1158 = vmatpush.bf16.msra.mxu0 0
        %1159 = vmatpush.bf16.msra.mxu0 0
        %1160 = vmatpush.bf16.msra.mxu0 0
        %1161 = vmatpush.bf16.msra.mxu0 0
        %1162 = vmatpush.bf16.msra.mxu0 0
        %1163 = vmatpush.bf16.msra.mxu0 0
        %1164 = vmatpush.bf16.msra.mxu0 0
        %1165 = vmatpush.bf16.msra.mxu0 %v1156
        %1166 = vmatmul.bf16.gmra.mxu0 %v1153
        %v1167 = vpop.f32.mrf.mxu0
        %v1168 = vadd.f32 0.0, %v1167
        %v1169 = vpop.f32.mrf.mxu0
        %1170 = vdwg.mxu0
        %v1172 = vsel %vm893, %v1090, 0
        %v1175 = vsel %vm1097, %v736, 0
        %1177 = vmatpush.bf16.msra.mxu0 0
        %1178 = vmatpush.bf16.msra.mxu0 0
        %1179 = vmatpush.bf16.msra.mxu0 0
        %1180 = vmatpush.bf16.msra.mxu0 0
        %1181 = vmatpush.bf16.msra.mxu0 0
        %1182 = vmatpush.bf16.msra.mxu0 0
        %1183 = vmatpush.bf16.msra.mxu0 0
        %1184 = vmatpush.bf16.msra.mxu0 %v1175
        %1185 = vmatmul.bf16.gmra.mxu0 %v1172
        %v1186 = vpop.f32.mrf.mxu0
        %v1187 = vadd.f32 0.0, %v1186
        %v1188 = vpop.f32.mrf.mxu0
        %1189 = vdwg.mxu0
        %v1191 = vsel %vm893, %v1091, 0
        %v1194 = vsel %vm1097, %v737, 0
        %1196 = vmatpush.bf16.msra.mxu0 0
        %1197 = vmatpush.bf16.msra.mxu0 0
        %1198 = vmatpush.bf16.msra.mxu0 0
        %1199 = vmatpush.bf16.msra.mxu0 0
        %1200 = vmatpush.bf16.msra.mxu0 0
        %1201 = vmatpush.bf16.msra.mxu0 0
        %1202 = vmatpush.bf16.msra.mxu0 0
        %1203 = vmatpush.bf16.msra.mxu0 %v1194
        %1204 = vmatmul.bf16.gmra.mxu0 %v1191
        %v1205 = vpop.f32.mrf.mxu0
        %v1206 = vadd.f32 0.0, %v1205
        %v1207 = vpop.f32.mrf.mxu0
        %1208 = vdwg.mxu0
        %v1210 = vsel %vm893, %v1092, 0
        %v1213 = vsel %vm1097, %v738, 0
        %1215 = vmatpush.bf16.msra.mxu0 0
        %1216 = vmatpush.bf16.msra.mxu0 0
        %1217 = vmatpush.bf16.msra.mxu0 0
        %1218 = vmatpush.bf16.msra.mxu0 0
        %1219 = vmatpush.bf16.msra.mxu0 0
        %1220 = vmatpush.bf16.msra.mxu0 0
        %1221 = vmatpush.bf16.msra.mxu0 0
        %1222 = vmatpush.bf16.msra.mxu0 %v1213
        %1223 = vmatmul.bf16.gmra.mxu0 %v1210
        %v1224 = vpop.f32.mrf.mxu0
        %v1225 = vadd.f32 0.0, %v1224
        %v1226 = vpop.f32.mrf.mxu0
        %1227 = vdwg.mxu0
        %v1229 = vsel %vm893, %v1093, 0
        %v1232 = vsel %vm1097, %v739, 0
        %1234 = vmatpush.bf16.msra.mxu0 0
        %1235 = vmatpush.bf16.msra.mxu0 0
        %1236 = vmatpush.bf16.msra.mxu0 0
        %1237 = vmatpush.bf16.msra.mxu0 0
        %1238 = vmatpush.bf16.msra.mxu0 0
        %1239 = vmatpush.bf16.msra.mxu0 0
        %1240 = vmatpush.bf16.msra.mxu0 0
        %1241 = vmatpush.bf16.msra.mxu0 %v1232
        %1242 = vmatmul.bf16.gmra.mxu0 %v1229
        %v1243 = vpop.f32.mrf.mxu0
        %v1244 = vadd.f32 0.0, %v1243
        %v1245 = vpop.f32.mrf.mxu0
        %1246 = vdwg.mxu0
        %1248 = vrot.lane.b32.xlu0 %v1130, 32
        %v1249 = vpop.permute.xlu0 %1248
        %1252 = vrot.lane.b32.xlu0 %v1149, 64
        %v1253 = vpop.permute.xlu0 %1252
        %1256 = vrot.lane.b32.xlu0 %v1168, 96
        %v1257 = vpop.permute.xlu0 %1256
        %v1259 = vsel %vm740, %v1111, %v1249
        %vm1260 = vcmask 523264
        %v1261 = vsel %vm1260, %v1259, %v1253
        %vm1262 = vcmask 785408
        %v1263 = vsel %vm1262, %v1261, %v1257
        %1265 = vrot.lane.b32.xlu0 %v1206, 32
        %v1266 = vpop.permute.xlu0 %1265
        %1269 = vrot.lane.b32.xlu0 %v1225, 64
        %v1270 = vpop.permute.xlu0 %1269
        %1273 = vrot.lane.b32.xlu0 %v1244, 96
        %v1274 = vpop.permute.xlu0 %1273
        %v1276 = vsel %vm740, %v1187, %v1266
        %v1277 = vsel %vm1260, %v1276, %v1270
        %v1278 = vsel %vm1262, %v1277, %v1274
        %v1279 = vpack.c.bf16 %v1278, %v1263
        %v1280 = vld [vmem:[#allocation6] sm:$0xf]
        %v1281 = vld [vmem:[#allocation6 + $0x4] sm:$0xf]
        %v1282 = vld [vmem:[#allocation6 + $0x8] sm:$0xf]
        %v1283 = vld [vmem:[#allocation6 + $0xc] sm:$0xf]
        %v1284 = vld [vmem:[#allocation6 + $0x10] sm:$0xf]
        %v1285 = vld [vmem:[#allocation6 + $0x14] sm:$0xf]
        %v1286 = vld [vmem:[#allocation6 + $0x18] sm:$0xf]
        %v1287 = vld [vmem:[#allocation6 + $0x1c] sm:$0xf]
        %v1288 = vld [vmem:[#allocation6 + $0x20] sm:$0xf]
        %v1289 = vld [vmem:[#allocation6 + $0x24] sm:$0xf]
        %v1290 = vld [vmem:[#allocation6 + $0x28] sm:$0xf]
        %v1291 = vld [vmem:[#allocation6 + $0x2c] sm:$0xf]
        %v1292 = vld [vmem:[#allocation6 + $0x30] sm:$0xf]
        %v1293 = vld [vmem:[#allocation6 + $0x34] sm:$0xf]
        %v1294 = vld [vmem:[#allocation6 + $0x38] sm:$0xf]
        %v1295 = vld [vmem:[#allocation6 + $0x3c] sm:$0xf]
        %v1296 = vld [vmem:[%s7] sm:$0x1]
        %v1298 = vperm.slane %v1296, 0
        %v1316 = vunpack.c.l.b16 %v1280
        %v1317 = vunpack.c.l.b16 %v1281
        %v1318 = vunpack.c.l.b16 %v1282
        %v1319 = vunpack.c.l.b16 %v1283
        %v1320 = vunpack.c.l.b16 %v1284
        %v1321 = vunpack.c.l.b16 %v1285
        %v1322 = vunpack.c.l.b16 %v1286
        %v1323 = vunpack.c.l.b16 %v1287
        %v1324 = vunpack.c.l.b16 %v1288
        %v1325 = vunpack.c.l.b16 %v1289
        %v1326 = vunpack.c.l.b16 %v1290
        %v1327 = vunpack.c.l.b16 %v1291
        %v1328 = vunpack.c.l.b16 %v1292
        %v1329 = vunpack.c.l.b16 %v1293
        %v1330 = vunpack.c.l.b16 %v1294
        %v1331 = vunpack.c.l.b16 %v1295
        %v1332 = vpack.c.b16 %v1317, %v1316
        %v1333 = vpack.c.b16 %v1319, %v1318
        %v1334 = vpack.c.b16 %v1321, %v1320
        %v1335 = vpack.c.b16 %v1323, %v1322
        %v1336 = vpack.c.b16 %v1325, %v1324
        %v1337 = vpack.c.b16 %v1327, %v1326
        %v1338 = vpack.c.b16 %v1329, %v1328
        %v1339 = vpack.c.b16 %v1331, %v1330
        %1348 = vmatpush.bf16.msra.mxu0 %v1339
        %1349 = vmatpush.bf16.msra.mxu0 %v1338
        %1350 = vmatpush.bf16.msra.mxu0 %v1337
        %1351 = vmatpush.bf16.msra.mxu0 %v1336
        %1352 = vmatpush.bf16.msra.mxu0 %v1335
        %1353 = vmatpush.bf16.msra.mxu0 %v1334
        %1354 = vmatpush.bf16.msra.mxu0 %v1333
        %1355 = vmatpush.bf16.msra.mxu0 %v1332
        %1356 = vmatmul.bf16.gmra.mxu0 %v1279
        %v1357 = vpop.f32.mrf.mxu0
        %v1358 = vadd.f32 %v1298, %v1357
        %v1359 = vpop.f32.mrf.mxu0
        %v1360 = vadd.f32 %v1298, %v1359
        %1361 = vdwg.mxu0
        %v1362 = vadd.f32 %v436, %v1358
        %v1363 = vadd.f32 %v437, %v1360
        %v1364 = vld [vmem:[%s8] sm:$0x1]
        %v1365 = vld [vmem:[%s9] sm:$0x1]
        %1366 = vadd.xlane.f32.xlu0 %v1362
        %v1367 = vpop.xlane.xlu0 %1366
        %1368 = vadd.xlane.f32.xlu0 %v1363
        %v1369 = vpop.xlane.xlu0 %1368
        %v1370 = vrcp.pop 128.0
        %v1371 = vmul.f32 128.0, %v1370
        %v1372 = vsub.f32 1.0, %v1371
        %v1373 = vmul.f32 %v1370, %v1372
        %v1374 = vadd.f32 %v1370, %v1373
        %vm1375 = vweird.f32 %v1370
        %v1376 = vsel %vm1375, %v1370, %v1374
        %v1377 = vmul.f32 %v1367, %v1376
        %v1378 = vmul.f32 %v1369, %v1376
        %v1379 = vsub.f32 %v1362, %v1377
        %v1380 = vsub.f32 %v1363, %v1378
        %v1381 = vmul.f32 %v1379, %v1379
        %v1382 = vmul.f32 %v1380, %v1380
        %1383 = vadd.xlane.f32.xlu0 %v1381
        %v1384 = vpop.xlane.xlu0 %1383
        %1385 = vadd.xlane.f32.xlu0 %v1382
        %v1386 = vpop.xlane.xlu0 %1385
        %v1387 = vmul.f32 %v1384, %v1376
        %v1388 = vmul.f32 %v1386, %v1376
        %v1389 = vadd.f32 %v1387, 1e-05
        %v1390 = vadd.f32 %v1388, 1e-05
        %v1391 = vrsqrt.pop %v1389
        %v1392 = vmul.f32 %v1391, %v1389
        %v1393 = vmul.f32 %v1392, %v1391
        %v1394 = vmul.f32 0.5, %v1393
        %v1395 = vsub.f32 1.5, %v1394
        %v1396 = vmul.f32 %v1391, %v1395
        %vm1397 = vweird.f32 %v1389
        %vm1398 = vweird.f32 %v1391
        %vm1399 = vmor %vm1397, %vm1398
        %v1400 = vsel %vm1399, %v1391, %v1396
        %v1401 = vrsqrt.pop %v1390
        %v1402 = vmul.f32 %v1401, %v1390
        %v1403 = vmul.f32 %v1402, %v1401
        %v1404 = vmul.f32 0.5, %v1403
        %v1405 = vsub.f32 1.5, %v1404
        %v1406 = vmul.f32 %v1401, %v1405
        %vm1407 = vweird.f32 %v1390
        %vm1408 = vweird.f32 %v1401
        %vm1409 = vmor %vm1407, %vm1408
        %v1410 = vsel %vm1409, %v1401, %v1406
        %v1411 = vmul.f32 %v1379, %v1400
        %v1412 = vmul.f32 %v1380, %v1410
        %v1414 = vperm.slane %v1364, 0
        %v1416 = vmul.f32 %v1411, %v1414
        %v1417 = vmul.f32 %v1412, %v1414
        %v1419 = vperm.slane %v1365, 0
        %v1421 = vadd.f32 %v1416, %v1419
        %v1422 = vadd.f32 %v1417, %v1419
        %1423 = vst [vmem:[%s433] sm:$0xff] %v1421
        %1424 = vst [vmem:[%s433 + $0x8] sm:$0xff] %v1422
        %s1425 = smul.u32 2, %s23
        %p1426 = scmp.lt.s32.totalorder %s1425, 3
        %s1427 = scalar_select %p1426, %s1425, 3
        %s1428 = smul.addr %s1427, 8
        %s1429 = scalar_lea.vmem %s10, %s1428
        // Predicated region
        $region73: #{transformer_decoder_layer.3} parent=59 // pred_check
          %p1430 = pneg %p261
        $region74: #{transformer_decoder_layer.3} parent=59 // pred_check_branch
          %1432 = sbr.rel (%p1430) target = $region76
        $region75: #{transformer_decoder_layer.3} parent=59 // pred_region
          %s1433 = smul.u32 2, %s23
        $region76: #{transformer_decoder_layer.3} parent=59 // pred_fallthru
          _
      $region60: #{transformer_decoder_layer.3} parent=5 // pred_fallthru
        _
      %p1434 = scmp.le.s32.totalorder 2, %s18
      // Predicated region
      $region77: #{transformer_decoder_layer.3} parent=5 // pred_check
        %p1435 = pneg %p1434
      $region78: #{transformer_decoder_layer.3} parent=5 // pred_check_branch
        %1437 = sbr.rel (%p1435) target = $region80
      $region79: #{transformer_decoder_layer.3} parent=5 // pred_region
        %s1438 = ssub.s32 %s18, 2
        // Predicated region
        $region81: #{transformer_decoder_layer.3} parent=79 // pred_check
          %p1439 = pneg %p267
        $region82: #{transformer_decoder_layer.3} parent=79 // pred_check_branch
          %1441 = sbr.rel (%p1439) target = $region84
        $region83: #{transformer_decoder_layer.3} parent=79 // pred_region
          %s1442 = smul.u32 2, %s24
          %p1443 = scmp.lt.s32.totalorder %s1442, 3
          %s1444 = scalar_select %p1443, %s1442, 3
          %s1445 = smul.addr %s1444, 8
          %s1446 = scalar_lea.vmem %s10, %s1445
        $region84: #{transformer_decoder_layer.3} parent=79 // pred_fallthru
          _
      $region80: #{transformer_decoder_layer.3} parent=5 // pred_fallthru
        _
    $region6: #{transformer_decoder_layer.3} parent=1 // loop_footer
      %s22 = sadd.s32 1, %s18
    $region7: #{transformer_decoder_layer.3} parent=1 // loop_footer_branch
      %17 = sbr.rel target = $region3
    $region8: #{transformer_decoder_layer.3} parent=1 // loop_exit
      _
    %1447 = vsyncpa [#allocation3], 1
    %s1448 = scalar_lea.sflag [#allocation3], 1
    %1449 = vsyncpa %s1448, 1
    %1450 = vsyncpa [#allocation5], 1

// kernel: transformer_decoder_layer.4
$region0: #{transformer_decoder_layer.4}
  #allocation0 [shape = 'u32[]', space=smem, size = 0x4, offset = 0x4, fixed_abs, tag = 'smem constant byte address 0x4 - core index']
  #allocation1 [shape = 'u32[72,128]{1,0:T(1,128)}', space=vmem, size = 0x9000, scoped, tag = 'internal scratch']
  %s0 = inlined_call_operand.vmem [shape: f32[4,8,128], index: 0, kind: input, shape index: {}]
  %s1 = inlined_call_operand.vmem [shape: f32[4,8,128], index: 1, kind: input, shape index: {}]
  %s2 = inlined_call_operand.vmem [shape: f32[4,16,128], index: 2, kind: input, shape index: {}]
  %s3 = inlined_call_operand.vmem [shape: f32[4,16,128], index: 3, kind: input, shape index: {}]
  %s4 = inlined_call_operand.hbm [shape: bf16[128,128], index: 4, kind: input, shape index: {}]
  %s5 = inlined_call_operand.hbm [shape: f32[1,128], index: 5, kind: input, shape index: {}]
  %s6 = inlined_call_operand.hbm [shape: bf16[128,128], index: 6, kind: input, shape index: {}]
  %s7 = inlined_call_operand.hbm [shape: f32[1,128], index: 7, kind: input, shape index: {}]
  %s8 = inlined_call_operand.hbm [shape: bf16[128,128], index: 8, kind: input, shape index: {}]
  %s9 = inlined_call_operand.hbm [shape: f32[1,128], index: 9, kind: input, shape index: {}]
  %s10 = inlined_call_operand.hbm [shape: bf16[128,128], index: 10, kind: input, shape index: {}]
  %s11 = inlined_call_operand.hbm [shape: f32[1,128], index: 11, kind: input, shape index: {}]
  %s12 = inlined_call_operand.vmem [shape: f32[1,128], index: 12, kind: input, shape index: {}]
  %s13 = inlined_call_operand.vmem [shape: f32[1,128], index: 13, kind: input, shape index: {}]
  %s14 = inlined_call_operand.vmem [shape: f32[4,8,128], index: 14, kind: output, shape index: {}]
  %s15 = sld [smem:[#allocation0]]
  $region121: #{transformer_decoder_layer.4} parent=0
    _
  %s17 = ssub.s32 1, %s15
  %s18 = scalar_select 0, %s17, %s15
  $region1: #{transformer_decoder_layer.4} parent=0
    #allocation2 [shape = 'u8[32768]{0}', space=vmem, size = 0x8000, scoped, tag = 'input window, operand 4, single buffered']
    #allocation3 [shape = 's32[2]{0}', space=sflag, size = 0x8, scoped, tag = 'scoped memory for transformer_decoder_layer.4']
    #allocation4 [shape = 'u8[512]{0}', space=vmem, size = 0x400, scoped, tag = 'input window, operand 5, single buffered']
    #allocation5 [shape = 's32[1]{0}', space=sflag, size = 0x4, scoped, tag = 'scoped memory for transformer_decoder_layer.4']
    #allocation6 [shape = 'u8[32768]{0}', space=vmem, size = 0x8000, scoped, tag = 'input window, operand 6, single buffered']
    #allocation7 [shape = 'u8[512]{0}', space=vmem, size = 0x400, scoped, tag = 'input window, operand 7, single buffered']
    #allocation8 [shape = 's32[1]{0}', space=sflag, size = 0x4, scoped, tag = 'scoped memory for transformer_decoder_layer.4']
    #allocation9 [shape = 'u8[32768]{0}', space=vmem, size = 0x8000, scoped, tag = 'input window, operand 8, single buffered']
    #allocation10 [shape = 'u8[512]{0}', space=vmem, size = 0x400, scoped, tag = 'input window, operand 9, single buffered']
    #allocation11 [shape = 's32[1]{0}', space=sflag, size = 0x4, scoped, tag = 'scoped memory for transformer_decoder_layer.4']
    #allocation12 [shape = 'u8[32768]{0}', space=vmem, size = 0x8000, scoped, tag = 'input window, operand 10, single buffered']
    #allocation13 [shape = 'u8[512]{0}', space=vmem, size = 0x400, scoped, tag = 'input window, operand 11, single buffered']
    #allocation14 [shape = 's32[1]{0}', space=sflag, size = 0x4, scoped, tag = 'scoped memory for transformer_decoder_layer.4']
    %19 = vsyncpa [#allocation3], 0
    %20 = vsyncpa [#allocation5], 0
    %21 = vsyncpa [#allocation8], 0
    %22 = vsyncpa [#allocation11], 0
    %23 = vsyncpa [#allocation14], 0
    loop: start=0, step=1, limit=4
    $region2: #{transformer_decoder_layer.4} parent=1 // loop_pre_header
      _
    $region3: #{transformer_decoder_layer.4} parent=1 // loop_header
      %s25 = sphi 0, %s29
      %p26 = scmp.ge.s32.totalorder %s25, 4
      %s35 = sphi 0, %s37
      %s38 = sphi 0, %s35
      %s39 = sphi 0, %s38
      %s55 = sphi 0, %s39
      %s61 = sphi 0, %s63
      %s64 = sphi 0, %s61
      %s65 = sphi 0, %s64
      %s81 = sphi 0, %s65
      %s87 = sphi 0, %s89
      %s90 = sphi 0, %s87
      %s91 = sphi 0, %s90
      %s107 = sphi 0, %s91
      %s113 = sphi 0, %s115
      %s116 = sphi 0, %s113
      %s117 = sphi 0, %s116
      %s133 = sphi 0, %s117
      %s137 = sphi 0, %s137
      %s139 = sphi 0, %s137
      %s140 = sphi 0, %s139
      %s154 = sphi 0, %s140
      %s158 = sphi 0, %s158
      %s160 = sphi 0, %s158
      %s161 = sphi 0, %s160
      %s175 = sphi 0, %s161
      %s179 = sphi 0, %s179
      %s181 = sphi 0, %s179
      %s182 = sphi 0, %s181
      %s196 = sphi 0, %s182
      %s200 = sphi 0, %s200
      %s202 = sphi 0, %s200
      %s203 = sphi 0, %s202
      %s217 = sphi 0, %s203
      %s221 = sphi 0, %s221
      %s223 = sphi 0, %s221
      %s224 = sphi 0, %s223
      %s238 = sphi 0, %s224
      %s242 = sphi 0, %s242
      %s244 = sphi 0, %s242
      %s245 = sphi 0, %s244
      %s259 = sphi 0, %s245
      %s263 = sphi 0, %s263
      %s265 = sphi 0, %s263
      %s266 = sphi 0, %s265
      %s280 = sphi 0, %s266
      %s284 = sphi 0, %s284
      %s286 = sphi 0, %s284
      %s287 = sphi 0, %s286
      %s301 = sphi 0, %s287
      %s305 = sphi 0, %s305
      %s307 = sphi 0, %s305
      %s308 = sphi 0, %s307
      %s322 = sphi 0, %s308
      %s326 = sphi 0, %s326
      %s328 = sphi 0, %s326
      %s329 = sphi 0, %s328
      %s343 = sphi 0, %s329
      %s349 = sphi 0, %s351
      %s352 = sphi 0, %s349
      %s353 = sphi 0, %s352
      %s369 = sphi 0, %s353
    $region4: #{transformer_decoder_layer.4} parent=1 // loop_header_branch
      %28 = sbr.rel (%p26) target = $region8
    $region5: #{transformer_decoder_layer.4} parent=1 // loop_body
      %s30 = ssub.s32 %s25, 1
      %s31 = ssub.s32 %s25, 2
      %s32 = sadd.s32 %s25, 1
      %s33 = ssub.s32 %s25, %s32
      %p34 = scmp.eq.s32.totalorder %s33, 0
      %s36 = sadd.s32 %s35, 1
      %s37 = scalar_select %p34, %s35, %s36
      %p40 = pneg %p34
      %p41 = scmp.eq.s32.totalorder %s25, 1
      %p42 = por %p40, %p41
      %p43 = scmp.ne.s32.totalorder %s35, %s38
      %p44 = scmp.eq.s32.totalorder %s25, 0
      %p45 = por %p43, %p44
      %p46 = scmp.ne.s32.totalorder %s35, %s38
      %p47 = scmp.eq.s32.totalorder %s30, 1
      %p48 = por %p46, %p47
      %p49 = scmp.ne.s32.totalorder %s38, %s39
      %p50 = scmp.eq.s32.totalorder %s30, 0
      %p51 = por %p49, %p50
      %p52 = scmp.ne.s32.totalorder %s38, %s39
      %p53 = scmp.eq.s32.totalorder %s31, 1
      %p54 = por %p52, %p53
      %p56 = scmp.ne.s32.totalorder %s39, %s55
      %p57 = scmp.eq.s32.totalorder %s31, 0
      %p58 = por %p56, %p57
      %s59 = ssub.s32 %s25, %s32
      %p60 = scmp.eq.s32.totalorder %s59, 0
      %s62 = sadd.s32 %s61, 1
      %s63 = scalar_select %p60, %s61, %s62
      %p66 = pneg %p60
      %p67 = scmp.eq.s32.totalorder %s25, 1
      %p68 = por %p66, %p67
      %p69 = scmp.ne.s32.totalorder %s61, %s64
      %p70 = scmp.eq.s32.totalorder %s25, 0
      %p71 = por %p69, %p70
      %p72 = scmp.ne.s32.totalorder %s61, %s64
      %p73 = scmp.eq.s32.totalorder %s30, 1
      %p74 = por %p72, %p73
      %p75 = scmp.ne.s32.totalorder %s64, %s65
      %p76 = scmp.eq.s32.totalorder %s30, 0
      %p77 = por %p75, %p76
      %p78 = scmp.ne.s32.totalorder %s64, %s65
      %p79 = scmp.eq.s32.totalorder %s31, 1
      %p80 = por %p78, %p79
      %p82 = scmp.ne.s32.totalorder %s65, %s81
      %p83 = scmp.eq.s32.totalorder %s31, 0
      %p84 = por %p82, %p83
      %s85 = ssub.s32 %s25, %s32
      %p86 = scmp.eq.s32.totalorder %s85, 0
      %s88 = sadd.s32 %s87, 1
      %s89 = scalar_select %p86, %s87, %s88
      %p92 = pneg %p86
      %p93 = scmp.eq.s32.totalorder %s25, 1
      %p94 = por %p92, %p93
      %p95 = scmp.ne.s32.totalorder %s87, %s90
      %p96 = scmp.eq.s32.totalorder %s25, 0
      %p97 = por %p95, %p96
      %p98 = scmp.ne.s32.totalorder %s87, %s90
      %p99 = scmp.eq.s32.totalorder %s30, 1
      %p100 = por %p98, %p99
      %p101 = scmp.ne.s32.totalorder %s90, %s91
      %p102 = scmp.eq.s32.totalorder %s30, 0
      %p103 = por %p101, %p102
      %p104 = scmp.ne.s32.totalorder %s90, %s91
      %p105 = scmp.eq.s32.totalorder %s31, 1
      %p106 = por %p104, %p105
      %p108 = scmp.ne.s32.totalorder %s91, %s107
      %p109 = scmp.eq.s32.totalorder %s31, 0
      %p110 = por %p108, %p109
      %s111 = ssub.s32 %s25, %s32
      %p112 = scmp.eq.s32.totalorder %s111, 0
      %s114 = sadd.s32 %s113, 1
      %s115 = scalar_select %p112, %s113, %s114
      %p118 = pneg %p112
      %p119 = scmp.eq.s32.totalorder %s25, 1
      %p120 = por %p118, %p119
      %p121 = scmp.ne.s32.totalorder %s113, %s116
      %p122 = scmp.eq.s32.totalorder %s25, 0
      %p123 = por %p121, %p122
      %p124 = scmp.ne.s32.totalorder %s113, %s116
      %p125 = scmp.eq.s32.totalorder %s30, 1
      %p126 = por %p124, %p125
      %p127 = scmp.ne.s32.totalorder %s116, %s117
      %p128 = scmp.eq.s32.totalorder %s30, 0
      %p129 = por %p127, %p128
      %p130 = scmp.ne.s32.totalorder %s116, %s117
      %p131 = scmp.eq.s32.totalorder %s31, 1
      %p132 = por %p130, %p131
      %p134 = scmp.ne.s32.totalorder %s117, %s133
      %p135 = scmp.eq.s32.totalorder %s31, 0
      %p136 = por %p134, %p135
      %s138 = sadd.s32 %s137, 1
      %p141 = scmp.eq.s32.totalorder %s25, 1
      %p142 = scmp.ne.s32.totalorder %s137, %s139
      %p143 = scmp.eq.s32.totalorder %s25, 0
      %p144 = por %p142, %p143
      %p145 = scmp.ne.s32.totalorder %s137, %s139
      %p146 = scmp.eq.s32.totalorder %s30, 1
      %p147 = por %p145, %p146
      %p148 = scmp.ne.s32.totalorder %s139, %s140
      %p149 = scmp.eq.s32.totalorder %s30, 0
      %p150 = por %p148, %p149
      %p151 = scmp.ne.s32.totalorder %s139, %s140
      %p152 = scmp.eq.s32.totalorder %s31, 1
      %p153 = por %p151, %p152
      %p155 = scmp.ne.s32.totalorder %s140, %s154
      %p156 = scmp.eq.s32.totalorder %s31, 0
      %p157 = por %p155, %p156
      %s159 = sadd.s32 %s158, 1
      %p162 = scmp.eq.s32.totalorder %s25, 1
      %p163 = scmp.ne.s32.totalorder %s158, %s160
      %p164 = scmp.eq.s32.totalorder %s25, 0
      %p165 = por %p163, %p164
      %p166 = scmp.ne.s32.totalorder %s158, %s160
      %p167 = scmp.eq.s32.totalorder %s30, 1
      %p168 = por %p166, %p167
      %p169 = scmp.ne.s32.totalorder %s160, %s161
      %p170 = scmp.eq.s32.totalorder %s30, 0
      %p171 = por %p169, %p170
      %p172 = scmp.ne.s32.totalorder %s160, %s161
      %p173 = scmp.eq.s32.totalorder %s31, 1
      %p174 = por %p172, %p173
      %p176 = scmp.ne.s32.totalorder %s161, %s175
      %p177 = scmp.eq.s32.totalorder %s31, 0
      %p178 = por %p176, %p177
      %s180 = sadd.s32 %s179, 1
      %p183 = scmp.eq.s32.totalorder %s25, 1
      %p184 = scmp.ne.s32.totalorder %s179, %s181
      %p185 = scmp.eq.s32.totalorder %s25, 0
      %p186 = por %p184, %p185
      %p187 = scmp.ne.s32.totalorder %s179, %s181
      %p188 = scmp.eq.s32.totalorder %s30, 1
      %p189 = por %p187, %p188
      %p190 = scmp.ne.s32.totalorder %s181, %s182
      %p191 = scmp.eq.s32.totalorder %s30, 0
      %p192 = por %p190, %p191
      %p193 = scmp.ne.s32.totalorder %s181, %s182
      %p194 = scmp.eq.s32.totalorder %s31, 1
      %p195 = por %p193, %p194
      %p197 = scmp.ne.s32.totalorder %s182, %s196
      %p198 = scmp.eq.s32.totalorder %s31, 0
      %p199 = por %p197, %p198
      %s201 = sadd.s32 %s200, 1
      %p204 = scmp.eq.s32.totalorder %s25, 1
      %p205 = scmp.ne.s32.totalorder %s200, %s202
      %p206 = scmp.eq.s32.totalorder %s25, 0
      %p207 = por %p205, %p206
      %p208 = scmp.ne.s32.totalorder %s200, %s202
      %p209 = scmp.eq.s32.totalorder %s30, 1
      %p210 = por %p208, %p209
      %p211 = scmp.ne.s32.totalorder %s202, %s203
      %p212 = scmp.eq.s32.totalorder %s30, 0
      %p213 = por %p211, %p212
      %p214 = scmp.ne.s32.totalorder %s202, %s203
      %p215 = scmp.eq.s32.totalorder %s31, 1
      %p216 = por %p214, %p215
      %p218 = scmp.ne.s32.totalorder %s203, %s217
      %p219 = scmp.eq.s32.totalorder %s31, 0
      %p220 = por %p218, %p219
      %s222 = sadd.s32 %s221, 1
      %p225 = scmp.eq.s32.totalorder %s25, 1
      %p226 = scmp.ne.s32.totalorder %s221, %s223
      %p227 = scmp.eq.s32.totalorder %s25, 0
      %p228 = por %p226, %p227
      %p229 = scmp.ne.s32.totalorder %s221, %s223
      %p230 = scmp.eq.s32.totalorder %s30, 1
      %p231 = por %p229, %p230
      %p232 = scmp.ne.s32.totalorder %s223, %s224
      %p233 = scmp.eq.s32.totalorder %s30, 0
      %p234 = por %p232, %p233
      %p235 = scmp.ne.s32.totalorder %s223, %s224
      %p236 = scmp.eq.s32.totalorder %s31, 1
      %p237 = por %p235, %p236
      %p239 = scmp.ne.s32.totalorder %s224, %s238
      %p240 = scmp.eq.s32.totalorder %s31, 0
      %p241 = por %p239, %p240
      %s243 = sadd.s32 %s242, 1
      %p246 = scmp.eq.s32.totalorder %s25, 1
      %p247 = scmp.ne.s32.totalorder %s242, %s244
      %p248 = scmp.eq.s32.totalorder %s25, 0
      %p249 = por %p247, %p248
      %p250 = scmp.ne.s32.totalorder %s242, %s244
      %p251 = scmp.eq.s32.totalorder %s30, 1
      %p252 = por %p250, %p251
      %p253 = scmp.ne.s32.totalorder %s244, %s245
      %p254 = scmp.eq.s32.totalorder %s30, 0
      %p255 = por %p253, %p254
      %p256 = scmp.ne.s32.totalorder %s244, %s245
      %p257 = scmp.eq.s32.totalorder %s31, 1
      %p258 = por %p256, %p257
      %p260 = scmp.ne.s32.totalorder %s245, %s259
      %p261 = scmp.eq.s32.totalorder %s31, 0
      %p262 = por %p260, %p261
      %s264 = sadd.s32 %s263, 1
      %p267 = scmp.eq.s32.totalorder %s25, 1
      %p268 = scmp.ne.s32.totalorder %s263, %s265
      %p269 = scmp.eq.s32.totalorder %s25, 0
      %p270 = por %p268, %p269
      %p271 = scmp.ne.s32.totalorder %s263, %s265
      %p272 = scmp.eq.s32.totalorder %s30, 1
      %p273 = por %p271, %p272
      %p274 = scmp.ne.s32.totalorder %s265, %s266
      %p275 = scmp.eq.s32.totalorder %s30, 0
      %p276 = por %p274, %p275
      %p277 = scmp.ne.s32.totalorder %s265, %s266
      %p278 = scmp.eq.s32.totalorder %s31, 1
      %p279 = por %p277, %p278
      %p281 = scmp.ne.s32.totalorder %s266, %s280
      %p282 = scmp.eq.s32.totalorder %s31, 0
      %p283 = por %p281, %p282
      %s285 = sadd.s32 %s284, 1
      %p288 = scmp.eq.s32.totalorder %s25, 1
      %p289 = scmp.ne.s32.totalorder %s284, %s286
      %p290 = scmp.eq.s32.totalorder %s25, 0
      %p291 = por %p289, %p290
      %p292 = scmp.ne.s32.totalorder %s284, %s286
      %p293 = scmp.eq.s32.totalorder %s30, 1
      %p294 = por %p292, %p293
      %p295 = scmp.ne.s32.totalorder %s286, %s287
      %p296 = scmp.eq.s32.totalorder %s30, 0
      %p297 = por %p295, %p296
      %p298 = scmp.ne.s32.totalorder %s286, %s287
      %p299 = scmp.eq.s32.totalorder %s31, 1
      %p300 = por %p298, %p299
      %p302 = scmp.ne.s32.totalorder %s287, %s301
      %p303 = scmp.eq.s32.totalorder %s31, 0
      %p304 = por %p302, %p303
      %s306 = sadd.s32 %s305, 1
      %p309 = scmp.eq.s32.totalorder %s25, 1
      %p310 = scmp.ne.s32.totalorder %s305, %s307
      %p311 = scmp.eq.s32.totalorder %s25, 0
      %p312 = por %p310, %p311
      %p313 = scmp.ne.s32.totalorder %s305, %s307
      %p314 = scmp.eq.s32.totalorder %s30, 1
      %p315 = por %p313, %p314
      %p316 = scmp.ne.s32.totalorder %s307, %s308
      %p317 = scmp.eq.s32.totalorder %s30, 0
      %p318 = por %p316, %p317
      %p319 = scmp.ne.s32.totalorder %s307, %s308
      %p320 = scmp.eq.s32.totalorder %s31, 1
      %p321 = por %p319, %p320
      %p323 = scmp.ne.s32.totalorder %s308, %s322
      %p324 = scmp.eq.s32.totalorder %s31, 0
      %p325 = por %p323, %p324
      %s327 = sadd.s32 %s326, 1
      %p330 = scmp.eq.s32.totalorder %s25, 1
      %p331 = scmp.ne.s32.totalorder %s326, %s328
      %p332 = scmp.eq.s32.totalorder %s25, 0
      %p333 = por %p331, %p332
      %p334 = scmp.ne.s32.totalorder %s326, %s328
      %p335 = scmp.eq.s32.totalorder %s30, 1
      %p336 = por %p334, %p335
      %p337 = scmp.ne.s32.totalorder %s328, %s329
      %p338 = scmp.eq.s32.totalorder %s30, 0
      %p339 = por %p337, %p338
      %p340 = scmp.ne.s32.totalorder %s328, %s329
      %p341 = scmp.eq.s32.totalorder %s31, 1
      %p342 = por %p340, %p341
      %p344 = scmp.ne.s32.totalorder %s329, %s343
      %p345 = scmp.eq.s32.totalorder %s31, 0
      %p346 = por %p344, %p345
      %s347 = ssub.s32 %s25, %s32
      %p348 = scmp.eq.s32.totalorder %s347, 0
      %s350 = sadd.s32 %s349, 1
      %s351 = scalar_select %p348, %s349, %s350
      %p354 = pneg %p348
      %p355 = scmp.eq.s32.totalorder %s25, 1
      %p356 = por %p354, %p355
      %p357 = scmp.ne.s32.totalorder %s349, %s352
      %p358 = scmp.eq.s32.totalorder %s25, 0
      %p359 = por %p357, %p358
      %p360 = scmp.ne.s32.totalorder %s349, %s352
      %p361 = scmp.eq.s32.totalorder %s30, 1
      %p362 = por %p360, %p361
      %p363 = scmp.ne.s32.totalorder %s352, %s353
      %p364 = scmp.eq.s32.totalorder %s30, 0
      %p365 = por %p363, %p364
      %p366 = scmp.ne.s32.totalorder %s352, %s353
      %p367 = scmp.eq.s32.totalorder %s31, 1
      %p368 = por %p366, %p367
      %p370 = scmp.ne.s32.totalorder %s353, %s369
      %p371 = scmp.eq.s32.totalorder %s31, 0
      %p372 = por %p370, %p371
      %p373 = scmp.le.s32.totalorder 1, %s25
      %p374 = scmp.lt.s32.totalorder %s25, 3
      %p375 = pnand %p373, %p374
      %p376 = pneg %p375
      // Predicated region
      $region9: #{transformer_decoder_layer.4} parent=5 // pred_check
        _
      $region10: #{transformer_decoder_layer.4} parent=5 // pred_check_branch
        %378 = sbr.rel (%p375) target = $region12
      $region11: #{transformer_decoder_layer.4} parent=5 // pred_region
        %s379 = ssub.s32 %s25, 1
        // Predicated region
        $region13: #{transformer_decoder_layer.4} parent=11 // pred_check
          %p380 = pneg %p150
        $region14: #{transformer_decoder_layer.4} parent=11 // pred_check_branch
          %382 = sbr.rel (%p380) target = $region16
        $region15: #{transformer_decoder_layer.4} parent=11 // pred_region
          %384 = vsyncadd [#allocation3], 0
          %s385 = sshll.u32 %s4, 4
          %s386 = int_to_ptr.hbm [resolvable:$true] %s385
          %s387 = sshll.u32 [#allocation2], 4
          %s388 = int_to_ptr.vmem [resolvable:$true] %s387
          %393 = dma.hbm_to_vmem [thread:$0]  %s386, 1024, %s388, [#allocation3], 64, 64, 4
        $region16: #{transformer_decoder_layer.4} parent=11 // pred_fallthru
          _
        // Predicated region
        $region17: #{transformer_decoder_layer.4} parent=11 // pred_check
          %p394 = pneg %p171
        $region18: #{transformer_decoder_layer.4} parent=11 // pred_check_branch
          %396 = sbr.rel (%p394) target = $region20
        $region19: #{transformer_decoder_layer.4} parent=11 // pred_region
          %398 = vsyncadd [#allocation5], 0
          %s400 = sshll.u32 %s5, 4
          %s401 = int_to_ptr.hbm [resolvable:$true] %s400
          %s402 = sshll.u32 [#allocation4], 4
          %s403 = int_to_ptr.vmem [resolvable:$true] %s402
          %405 = dma.hbm_to_vmem [thread:$0]  %s401, 16, %s403, [#allocation5]
        $region20: #{transformer_decoder_layer.4} parent=11 // pred_fallthru
          _
        // Predicated region
        $region21: #{transformer_decoder_layer.4} parent=11 // pred_check
          %p406 = pneg %p192
        $region22: #{transformer_decoder_layer.4} parent=11 // pred_check_branch
          %408 = sbr.rel (%p406) target = $region24
        $region23: #{transformer_decoder_layer.4} parent=11 // pred_region
          %410 = vsyncadd [#allocation5], 0
          %s411 = sshll.u32 %s6, 4
          %s412 = int_to_ptr.hbm [resolvable:$true] %s411
          %s413 = sshll.u32 [#allocation6], 4
          %s414 = int_to_ptr.vmem [resolvable:$true] %s413
          %419 = dma.hbm_to_vmem [thread:$0]  %s412, 1024, %s414, [#allocation5], 64, 64, 4
        $region24: #{transformer_decoder_layer.4} parent=11 // pred_fallthru
          _
        // Predicated region
        $region25: #{transformer_decoder_layer.4} parent=11 // pred_check
          %p420 = pneg %p213
        $region26: #{transformer_decoder_layer.4} parent=11 // pred_check_branch
          %422 = sbr.rel (%p420) target = $region28
        $region27: #{transformer_decoder_layer.4} parent=11 // pred_region
          %424 = vsyncadd [#allocation8], 0
          %s426 = sshll.u32 %s7, 4
          %s427 = int_to_ptr.hbm [resolvable:$true] %s426
          %s428 = sshll.u32 [#allocation7], 4
          %s429 = int_to_ptr.vmem [resolvable:$true] %s428
          %431 = dma.hbm_to_vmem [thread:$0]  %s427, 16, %s429, [#allocation8]
        $region28: #{transformer_decoder_layer.4} parent=11 // pred_fallthru
          _
        // Predicated region
        $region29: #{transformer_decoder_layer.4} parent=11 // pred_check
          %p432 = pneg %p234
        $region30: #{transformer_decoder_layer.4} parent=11 // pred_check_branch
          %434 = sbr.rel (%p432) target = $region32
        $region31: #{transformer_decoder_layer.4} parent=11 // pred_region
          %436 = vsyncadd [#allocation8], 0
          %s437 = sshll.u32 %s8, 4
          %s438 = int_to_ptr.hbm [resolvable:$true] %s437
          %s439 = sshll.u32 [#allocation9], 4
          %s440 = int_to_ptr.vmem [resolvable:$true] %s439
          %445 = dma.hbm_to_vmem [thread:$0]  %s438, 1024, %s440, [#allocation8], 64, 64, 4
        $region32: #{transformer_decoder_layer.4} parent=11 // pred_fallthru
          _
        // Predicated region
        $region33: #{transformer_decoder_layer.4} parent=11 // pred_check
          %p446 = pneg %p255
        $region34: #{transformer_decoder_layer.4} parent=11 // pred_check_branch
          %448 = sbr.rel (%p446) target = $region36
        $region35: #{transformer_decoder_layer.4} parent=11 // pred_region
          %450 = vsyncadd [#allocation11], 0
          %s452 = sshll.u32 %s9, 4
          %s453 = int_to_ptr.hbm [resolvable:$true] %s452
          %s454 = sshll.u32 [#allocation10], 4
          %s455 = int_to_ptr.vmem [resolvable:$true] %s454
          %457 = dma.hbm_to_vmem [thread:$0]  %s453, 16, %s455, [#allocation11]
        $region36: #{transformer_decoder_layer.4} parent=11 // pred_fallthru
          _
        // Predicated region
        $region37: #{transformer_decoder_layer.4} parent=11 // pred_check
          %p458 = pneg %p276
        $region38: #{transformer_decoder_layer.4} parent=11 // pred_check_branch
          %460 = sbr.rel (%p458) target = $region40
        $region39: #{transformer_decoder_layer.4} parent=11 // pred_region
          %462 = vsyncadd [#allocation11], 0
          %s463 = sshll.u32 %s10, 4
          %s464 = int_to_ptr.hbm [resolvable:$true] %s463
          %s465 = sshll.u32 [#allocation12], 4
          %s466 = int_to_ptr.vmem [resolvable:$true] %s465
          %471 = dma.hbm_to_vmem [thread:$0]  %s464, 1024, %s466, [#allocation11], 64, 64, 4
        $region40: #{transformer_decoder_layer.4} parent=11 // pred_fallthru
          _
        // Predicated region
        $region41: #{transformer_decoder_layer.4} parent=11 // pred_check
          %p472 = pneg %p297
        $region42: #{transformer_decoder_layer.4} parent=11 // pred_check_branch
          %474 = sbr.rel (%p472) target = $region44
        $region43: #{transformer_decoder_layer.4} parent=11 // pred_region
          %476 = vsyncadd [#allocation14], 0
          %s478 = sshll.u32 %s11, 4
          %s479 = int_to_ptr.hbm [resolvable:$true] %s478
          %s480 = sshll.u32 [#allocation13], 4
          %s481 = int_to_ptr.vmem [resolvable:$true] %s480
          %483 = dma.hbm_to_vmem [thread:$0]  %s479, 16, %s481, [#allocation14]
        $region44: #{transformer_decoder_layer.4} parent=11 // pred_fallthru
          _
        // Predicated region
        $region45: #{transformer_decoder_layer.4} parent=11 // pred_check
          %p484 = pneg %p318
        $region46: #{transformer_decoder_layer.4} parent=11 // pred_check_branch
          %486 = sbr.rel (%p484) target = $region48
        $region47: #{transformer_decoder_layer.4} parent=11 // pred_region
          _
        $region48: #{transformer_decoder_layer.4} parent=11 // pred_fallthru
          _
        // Predicated region
        $region49: #{transformer_decoder_layer.4} parent=11 // pred_check
          %p487 = pneg %p339
        $region50: #{transformer_decoder_layer.4} parent=11 // pred_check_branch
          %489 = sbr.rel (%p487) target = $region52
        $region51: #{transformer_decoder_layer.4} parent=11 // pred_region
          _
        $region52: #{transformer_decoder_layer.4} parent=11 // pred_fallthru
          _
      $region12: #{transformer_decoder_layer.4} parent=5 // pred_fallthru
        _
      %p490 = scmp.lt.s32.totalorder %s25, 2
      // Predicated region
      $region53: #{transformer_decoder_layer.4} parent=5 // pred_check
        %p491 = pneg %p490
      $region54: #{transformer_decoder_layer.4} parent=5 // pred_check_branch
        %493 = sbr.rel (%p491) target = $region56
      $region55: #{transformer_decoder_layer.4} parent=5 // pred_region
        // Predicated region
        $region57: #{transformer_decoder_layer.4} parent=55 // pred_check
          %p494 = pneg %p45
        $region58: #{transformer_decoder_layer.4} parent=55 // pred_check_branch
          %496 = sbr.rel (%p494) target = $region60
        $region59: #{transformer_decoder_layer.4} parent=55 // pred_region
          %s497 = smul.u32 2, %s25
          %p498 = scmp.lt.s32.totalorder %s497, 3
          %s499 = scalar_select %p498, %s497, 3
          %s500 = smul.addr %s499, 8
          %s501 = scalar_lea.vmem %s0, %s500
          %s502 = smul.u32 2, %s25
        $region60: #{transformer_decoder_layer.4} parent=55 // pred_fallthru
          _
        // Predicated region
        $region61: #{transformer_decoder_layer.4} parent=55 // pred_check
          %p503 = pneg %p71
        $region62: #{transformer_decoder_layer.4} parent=55 // pred_check_branch
          %505 = sbr.rel (%p503) target = $region64
        $region63: #{transformer_decoder_layer.4} parent=55 // pred_region
          %s506 = smul.u32 2, %s25
          %p507 = scmp.lt.s32.totalorder %s506, 3
          %s508 = scalar_select %p507, %s506, 3
          %s509 = smul.addr %s508, 8
          %s510 = scalar_lea.vmem %s1, %s509
          %s511 = smul.u32 2, %s25
        $region64: #{transformer_decoder_layer.4} parent=55 // pred_fallthru
          _
        // Predicated region
        $region65: #{transformer_decoder_layer.4} parent=55 // pred_check
          %p512 = pneg %p97
        $region66: #{transformer_decoder_layer.4} parent=55 // pred_check_branch
          %514 = sbr.rel (%p512) target = $region68
        $region67: #{transformer_decoder_layer.4} parent=55 // pred_region
          %s515 = smul.u32 2, %s25
          %p516 = scmp.lt.s32.totalorder %s515, 3
          %s517 = scalar_select %p516, %s515, 3
          %s518 = smul.addr %s517, 2
          %s519 = smul.addr %s518, 8
          %s520 = scalar_lea.vmem %s2, %s519
          %s521 = smul.u32 2, %s25
        $region68: #{transformer_decoder_layer.4} parent=55 // pred_fallthru
          _
        // Predicated region
        $region69: #{transformer_decoder_layer.4} parent=55 // pred_check
          %p522 = pneg %p123
        $region70: #{transformer_decoder_layer.4} parent=55 // pred_check_branch
          %524 = sbr.rel (%p522) target = $region72
        $region71: #{transformer_decoder_layer.4} parent=55 // pred_region
          %s525 = smul.u32 2, %s25
          %p526 = scmp.lt.s32.totalorder %s525, 3
          %s527 = scalar_select %p526, %s525, 3
          %s528 = smul.addr %s527, 2
          %s529 = smul.addr %s528, 8
          %s530 = scalar_lea.vmem %s3, %s529
          %s531 = smul.u32 2, %s25
        $region72: #{transformer_decoder_layer.4} parent=55 // pred_fallthru
          _
      $region56: #{transformer_decoder_layer.4} parent=5 // pred_fallthru
        _
      %p532 = scmp.le.s32.totalorder 1, %s25
      %p533 = scmp.lt.s32.totalorder %s25, 3
      %p534 = pnand %p532, %p533
      %p535 = pneg %p534
      // Predicated region
      $region73: #{transformer_decoder_layer.4} parent=5 // pred_check
        _
      $region74: #{transformer_decoder_layer.4} parent=5 // pred_check_branch
        %537 = sbr.rel (%p534) target = $region76
      $region75: #{transformer_decoder_layer.4} parent=5 // pred_region
        %s538 = ssub.s32 %s25, 1
        // Predicated region
        $region77: #{transformer_decoder_layer.4} parent=75 // pred_check
          %p539 = pneg %p150
        $region78: #{transformer_decoder_layer.4} parent=75 // pred_check_branch
          %541 = sbr.rel (%p539) target = $region80
        $region79: #{transformer_decoder_layer.4} parent=75 // pred_region
          %543 = dma.done [#allocation3], 1024
        $region80: #{transformer_decoder_layer.4} parent=75 // pred_fallthru
          _
        // Predicated region
        $region81: #{transformer_decoder_layer.4} parent=75 // pred_check
          %p544 = pneg %p171
        $region82: #{transformer_decoder_layer.4} parent=75 // pred_check_branch
          %546 = sbr.rel (%p544) target = $region84
        $region83: #{transformer_decoder_layer.4} parent=75 // pred_region
          %548 = dma.done [#allocation5], 16
        $region84: #{transformer_decoder_layer.4} parent=75 // pred_fallthru
          _
        // Predicated region
        $region85: #{transformer_decoder_layer.4} parent=75 // pred_check
          %p549 = pneg %p192
        $region86: #{transformer_decoder_layer.4} parent=75 // pred_check_branch
          %551 = sbr.rel (%p549) target = $region88
        $region87: #{transformer_decoder_layer.4} parent=75 // pred_region
          %553 = dma.done [#allocation5], 1024
        $region88: #{transformer_decoder_layer.4} parent=75 // pred_fallthru
          _
        // Predicated region
        $region89: #{transformer_decoder_layer.4} parent=75 // pred_check
          %p554 = pneg %p213
        $region90: #{transformer_decoder_layer.4} parent=75 // pred_check_branch
          %556 = sbr.rel (%p554) target = $region92
        $region91: #{transformer_decoder_layer.4} parent=75 // pred_region
          %558 = dma.done [#allocation8], 16
        $region92: #{transformer_decoder_layer.4} parent=75 // pred_fallthru
          _
        // Predicated region
        $region93: #{transformer_decoder_layer.4} parent=75 // pred_check
          %p559 = pneg %p234
        $region94: #{transformer_decoder_layer.4} parent=75 // pred_check_branch
          %561 = sbr.rel (%p559) target = $region96
        $region95: #{transformer_decoder_layer.4} parent=75 // pred_region
          %563 = dma.done [#allocation8], 1024
        $region96: #{transformer_decoder_layer.4} parent=75 // pred_fallthru
          _
        // Predicated region
        $region97: #{transformer_decoder_layer.4} parent=75 // pred_check
          %p564 = pneg %p255
        $region98: #{transformer_decoder_layer.4} parent=75 // pred_check_branch
          %566 = sbr.rel (%p564) target = $region100
        $region99: #{transformer_decoder_layer.4} parent=75 // pred_region
          %568 = dma.done [#allocation11], 16
        $region100: #{transformer_decoder_layer.4} parent=75 // pred_fallthru
          _
        // Predicated region
        $region101: #{transformer_decoder_layer.4} parent=75 // pred_check
          %p569 = pneg %p276
        $region102: #{transformer_decoder_layer.4} parent=75 // pred_check_branch
          %571 = sbr.rel (%p569) target = $region104
        $region103: #{transformer_decoder_layer.4} parent=75 // pred_region
          %573 = dma.done [#allocation11], 1024
        $region104: #{transformer_decoder_layer.4} parent=75 // pred_fallthru
          _
        // Predicated region
        $region105: #{transformer_decoder_layer.4} parent=75 // pred_check
          %p574 = pneg %p297
        $region106: #{transformer_decoder_layer.4} parent=75 // pred_check_branch
          %576 = sbr.rel (%p574) target = $region108
        $region107: #{transformer_decoder_layer.4} parent=75 // pred_region
          %578 = dma.done [#allocation14], 16
        $region108: #{transformer_decoder_layer.4} parent=75 // pred_fallthru
          _
        %s579 = smul.u32 2, %s30
        %p580 = scmp.lt.s32.totalorder %s579, 3
        %s581 = scalar_select %p580, %s579, 3
        %s582 = smul.addr %s581, 8
        %s583 = scalar_lea.vmem %s0, %s582
        %p584 = pneg %p51
        %p585 = pneg %p48
        %s586 = smul.u32 2, %s30
        %p587 = scmp.lt.s32.totalorder %s586, 3
        %s588 = scalar_select %p587, %s586, 3
        %s589 = smul.addr %s588, 8
        %s590 = scalar_lea.vmem %s1, %s589
        %p591 = pneg %p77
        %p592 = pneg %p74
        %s593 = smul.u32 2, %s30
        %p594 = scmp.lt.s32.totalorder %s593, 3
        %s595 = scalar_select %p594, %s593, 3
        %s596 = smul.addr %s595, 2
        %s597 = smul.addr %s596, 8
        %s598 = scalar_lea.vmem %s2, %s597
        %p599 = pneg %p103
        %p600 = pneg %p100
        %s601 = smul.u32 2, %s30
        %p602 = scmp.lt.s32.totalorder %s601, 3
        %s603 = scalar_select %p602, %s601, 3
        %s604 = smul.addr %s603, 2
        %s605 = smul.addr %s604, 8
        %s606 = scalar_lea.vmem %s3, %s605
        %p607 = pneg %p129
        %p608 = pneg %p126
        %p609 = pneg %p150
        %p610 = pneg %p147
        %p611 = pneg %p171
        %p612 = pneg %p168
        %p613 = pneg %p192
        %p614 = pneg %p189
        %p615 = pneg %p213
        %p616 = pneg %p210
        %p617 = pneg %p234
        %p618 = pneg %p231
        %p619 = pneg %p255
        %p620 = pneg %p252
        %p621 = pneg %p276
        %p622 = pneg %p273
        %p623 = pneg %p297
        %p624 = pneg %p294
        %p625 = pneg %p318
        %p626 = pneg %p315
        %p627 = pneg %p339
        %p628 = pneg %p336
        %p629 = pneg %p365
        %p630 = pneg %p362
        %s631 = smul.u32 2, %s30
        %p632 = scmp.lt.s32.totalorder %s631, 3
        %s633 = scalar_select %p632, %s631, 3
        %s634 = smul.addr %s633, 8
        %s635 = scalar_lea.vmem %s14, %s634
        %s636 = smul.u32 2, %s30
        %p637 = scmp.lt.s32.totalorder %s636, 3
        %s638 = scalar_select %p637, %s636, 3
        %s639 = smul.addr %s638, 8
        %s640 = scalar_lea.vmem %s0, %s639
        %s641 = smul.u32 2, %s30
        %s642 = smul.u32 2, %s30
        %p643 = scmp.lt.s32.totalorder %s642, 3
        %s644 = scalar_select %p643, %s642, 3
        %s645 = smul.addr %s644, 8
        %s646 = scalar_lea.vmem %s1, %s645
        %s647 = smul.u32 2, %s30
        %s648 = smul.u32 2, %s30
        %p649 = scmp.lt.s32.totalorder %s648, 3
        %s650 = scalar_select %p649, %s648, 3
        %s651 = smul.addr %s650, 2
        %s652 = smul.addr %s651, 8
        %s653 = scalar_lea.vmem %s2, %s652
        %s654 = smul.u32 2, %s30
        %s655 = smul.u32 2, %s30
        %p656 = scmp.lt.s32.totalorder %s655, 3
        %s657 = scalar_select %p656, %s655, 3
        %s658 = smul.addr %s657, 2
        %s659 = smul.addr %s658, 8
        %s660 = scalar_lea.vmem %s3, %s659
        %s661 = smul.u32 2, %s30
        %s662 = smul.u32 2, %s30
        %p663 = scmp.lt.s32.totalorder %s662, 3
        %s664 = scalar_select %p663, %s662, 3
        %s665 = smul.addr %s664, 8
        %s666 = scalar_lea.vmem %s14, %s665
        %s667 = smul.u32 2, %s30
        %v669 = vld [vmem:[%s640] sm:$0xff]
        %v670 = vld [vmem:[%s640 + $0x8] sm:$0xff]
        %v671 = vld [vmem:[%s646] sm:$0xff]
        %v672 = vld [vmem:[%s646 + $0x8] sm:$0xff]
        %v673 = vadd.f32 %v669, %v671
        %v674 = vadd.f32 %v670, %v672
        %v675 = vpack.c.bf16 %v674, %v673
        %v676 = vld [vmem:[%s653] sm:$0xff]
        %v677 = vld [vmem:[%s653 + $0x8] sm:$0xff]
        %v678 = vld [vmem:[%s653 + $0x10] sm:$0xff]
        %v679 = vld [vmem:[%s653 + $0x18] sm:$0xff]
        %v680 = vld [vmem:[%s660] sm:$0xff]
        %v681 = vld [vmem:[%s660 + $0x8] sm:$0xff]
        %v682 = vld [vmem:[%s660 + $0x10] sm:$0xff]
        %v683 = vld [vmem:[%s660 + $0x18] sm:$0xff]
        %v684 = vadd.f32 %v676, %v680
        %v685 = vadd.f32 %v677, %v681
        %v686 = vadd.f32 %v678, %v682
        %v687 = vadd.f32 %v679, %v683
        %v688 = vpack.c.bf16 %v685, %v684
        %v689 = vpack.c.bf16 %v687, %v686
        %v690 = vpack.c.bf16 %v677, %v676
        %v691 = vpack.c.bf16 %v679, %v678
        %v692 = vld [vmem:[#allocation2] sm:$0xf]
        %v693 = vld [vmem:[#allocation2 + $0x4] sm:$0xf]
        %v694 = vld [vmem:[#allocation2 + $0x8] sm:$0xf]
        %v695 = vld [vmem:[#allocation2 + $0xc] sm:$0xf]
        %v696 = vld [vmem:[#allocation2 + $0x10] sm:$0xf]
        %v697 = vld [vmem:[#allocation2 + $0x14] sm:$0xf]
        %v698 = vld [vmem:[#allocation2 + $0x18] sm:$0xf]
        %v699 = vld [vmem:[#allocation2 + $0x1c] sm:$0xf]
        %v700 = vld [vmem:[#allocation2 + $0x20] sm:$0xf]
        %v701 = vld [vmem:[#allocation2 + $0x24] sm:$0xf]
        %v702 = vld [vmem:[#allocation2 + $0x28] sm:$0xf]
        %v703 = vld [vmem:[#allocation2 + $0x2c] sm:$0xf]
        %v704 = vld [vmem:[#allocation2 + $0x30] sm:$0xf]
        %v705 = vld [vmem:[#allocation2 + $0x34] sm:$0xf]
        %v706 = vld [vmem:[#allocation2 + $0x38] sm:$0xf]
        %v707 = vld [vmem:[#allocation2 + $0x3c] sm:$0xf]
        %v708 = vld [vmem:[#allocation4] sm:$0x1]
        %v710 = vperm.slane %v708, 0
        %v728 = vunpack.c.l.b16 %v692
        %v729 = vunpack.c.l.b16 %v693
        %v730 = vunpack.c.l.b16 %v694
        %v731 = vunpack.c.l.b16 %v695
        %v732 = vunpack.c.l.b16 %v696
        %v733 = vunpack.c.l.b16 %v697
        %v734 = vunpack.c.l.b16 %v698
        %v735 = vunpack.c.l.b16 %v699
        %v736 = vunpack.c.l.b16 %v700
        %v737 = vunpack.c.l.b16 %v701
        %v738 = vunpack.c.l.b16 %v702
        %v739 = vunpack.c.l.b16 %v703
        %v740 = vunpack.c.l.b16 %v704
        %v741 = vunpack.c.l.b16 %v705
        %v742 = vunpack.c.l.b16 %v706
        %v743 = vunpack.c.l.b16 %v707
        %v744 = vpack.c.b16 %v729, %v728
        %v745 = vpack.c.b16 %v731, %v730
        %v746 = vpack.c.b16 %v733, %v732
        %v747 = vpack.c.b16 %v735, %v734
        %v748 = vpack.c.b16 %v737, %v736
        %v749 = vpack.c.b16 %v739, %v738
        %v750 = vpack.c.b16 %v741, %v740
        %v751 = vpack.c.b16 %v743, %v742
        %760 = vmatpush.bf16.msra.mxu0 %v751
        %761 = vmatpush.bf16.msra.mxu0 %v750
        %762 = vmatpush.bf16.msra.mxu0 %v749
        %763 = vmatpush.bf16.msra.mxu0 %v748
        %764 = vmatpush.bf16.msra.mxu0 %v747
        %765 = vmatpush.bf16.msra.mxu0 %v746
        %766 = vmatpush.bf16.msra.mxu0 %v745
        %767 = vmatpush.bf16.msra.mxu0 %v744
        %768 = vmatmul.bf16.gmra.mxu0 %v675
        %v769 = vpop.f32.mrf.mxu0
        %v770 = vadd.f32 %v710, %v769
        %v771 = vpop.f32.mrf.mxu0
        %v772 = vadd.f32 %v710, %v771
        %773 = vdwg.mxu0
        %v774 = vld [vmem:[#allocation6] sm:$0xf]
        %v775 = vld [vmem:[#allocation6 + $0x4] sm:$0xf]
        %v776 = vld [vmem:[#allocation6 + $0x8] sm:$0xf]
        %v777 = vld [vmem:[#allocation6 + $0xc] sm:$0xf]
        %v778 = vld [vmem:[#allocation6 + $0x10] sm:$0xf]
        %v779 = vld [vmem:[#allocation6 + $0x14] sm:$0xf]
        %v780 = vld [vmem:[#allocation6 + $0x18] sm:$0xf]
        %v781 = vld [vmem:[#allocation6 + $0x1c] sm:$0xf]
        %v782 = vld [vmem:[#allocation6 + $0x20] sm:$0xf]
        %v783 = vld [vmem:[#allocation6 + $0x24] sm:$0xf]
        %v784 = vld [vmem:[#allocation6 + $0x28] sm:$0xf]
        %v785 = vld [vmem:[#allocation6 + $0x2c] sm:$0xf]
        %v786 = vld [vmem:[#allocation6 + $0x30] sm:$0xf]
        %v787 = vld [vmem:[#allocation6 + $0x34] sm:$0xf]
        %v788 = vld [vmem:[#allocation6 + $0x38] sm:$0xf]
        %v789 = vld [vmem:[#allocation6 + $0x3c] sm:$0xf]
        %v790 = vld [vmem:[#allocation7] sm:$0x1]
        %v792 = vperm.slane %v790, 0
        %v810 = vunpack.c.l.b16 %v774
        %v811 = vunpack.c.l.b16 %v775
        %v812 = vunpack.c.l.b16 %v776
        %v813 = vunpack.c.l.b16 %v777
        %v814 = vunpack.c.l.b16 %v778
        %v815 = vunpack.c.l.b16 %v779
        %v816 = vunpack.c.l.b16 %v780
        %v817 = vunpack.c.l.b16 %v781
        %v818 = vunpack.c.l.b16 %v782
        %v819 = vunpack.c.l.b16 %v783
        %v820 = vunpack.c.l.b16 %v784
        %v821 = vunpack.c.l.b16 %v785
        %v822 = vunpack.c.l.b16 %v786
        %v823 = vunpack.c.l.b16 %v787
        %v824 = vunpack.c.l.b16 %v788
        %v825 = vunpack.c.l.b16 %v789
        %v826 = vpack.c.b16 %v811, %v810
        %v827 = vpack.c.b16 %v813, %v812
        %v828 = vpack.c.b16 %v815, %v814
        %v829 = vpack.c.b16 %v817, %v816
        %v830 = vpack.c.b16 %v819, %v818
        %v831 = vpack.c.b16 %v821, %v820
        %v832 = vpack.c.b16 %v823, %v822
        %v833 = vpack.c.b16 %v825, %v824
        %842 = vmatpush.bf16.msra.mxu0 %v833
        %843 = vmatpush.bf16.msra.mxu0 %v832
        %844 = vmatpush.bf16.msra.mxu0 %v831
        %845 = vmatpush.bf16.msra.mxu0 %v830
        %846 = vmatpush.bf16.msra.mxu0 %v829
        %847 = vmatpush.bf16.msra.mxu0 %v828
        %848 = vmatpush.bf16.msra.mxu0 %v827
        %849 = vmatpush.bf16.msra.mxu0 %v826
        %850 = vmatmul.bf16.gmra.mxu0 %v688
        %v851 = vpop.f32.mrf.mxu0
        %v852 = vadd.f32 %v792, %v851
        %v853 = vpop.f32.mrf.mxu0
        %v854 = vadd.f32 %v792, %v853
        %855 = vmatmul.bf16.gmra.mxu0 %v689
        %v856 = vpop.f32.mrf.mxu0
        %v857 = vadd.f32 %v792, %v856
        %v858 = vpop.f32.mrf.mxu0
        %v859 = vadd.f32 %v792, %v858
        %860 = vdwg.mxu0
        %v861 = vld [vmem:[#allocation9] sm:$0xf]
        %v862 = vld [vmem:[#allocation9 + $0x4] sm:$0xf]
        %v863 = vld [vmem:[#allocation9 + $0x8] sm:$0xf]
        %v864 = vld [vmem:[#allocation9 + $0xc] sm:$0xf]
        %v865 = vld [vmem:[#allocation9 + $0x10] sm:$0xf]
        %v866 = vld [vmem:[#allocation9 + $0x14] sm:$0xf]
        %v867 = vld [vmem:[#allocation9 + $0x18] sm:$0xf]
        %v868 = vld [vmem:[#allocation9 + $0x1c] sm:$0xf]
        %v869 = vld [vmem:[#allocation9 + $0x20] sm:$0xf]
        %v870 = vld [vmem:[#allocation9 + $0x24] sm:$0xf]
        %v871 = vld [vmem:[#allocation9 + $0x28] sm:$0xf]
        %v872 = vld [vmem:[#allocation9 + $0x2c] sm:$0xf]
        %v873 = vld [vmem:[#allocation9 + $0x30] sm:$0xf]
        %v874 = vld [vmem:[#allocation9 + $0x34] sm:$0xf]
        %v875 = vld [vmem:[#allocation9 + $0x38] sm:$0xf]
        %v876 = vld [vmem:[#allocation9 + $0x3c] sm:$0xf]
        %v877 = vld [vmem:[#allocation10] sm:$0x1]
        %v879 = vperm.slane %v877, 0
        %v897 = vunpack.c.l.b16 %v861
        %v898 = vunpack.c.l.b16 %v862
        %v899 = vunpack.c.l.b16 %v863
        %v900 = vunpack.c.l.b16 %v864
        %v901 = vunpack.c.l.b16 %v865
        %v902 = vunpack.c.l.b16 %v866
        %v903 = vunpack.c.l.b16 %v867
        %v904 = vunpack.c.l.b16 %v868
        %v905 = vunpack.c.l.b16 %v869
        %v906 = vunpack.c.l.b16 %v870
        %v907 = vunpack.c.l.b16 %v871
        %v908 = vunpack.c.l.b16 %v872
        %v909 = vunpack.c.l.b16 %v873
        %v910 = vunpack.c.l.b16 %v874
        %v911 = vunpack.c.l.b16 %v875
        %v912 = vunpack.c.l.b16 %v876
        %v913 = vpack.c.b16 %v898, %v897
        %v914 = vpack.c.b16 %v900, %v899
        %v915 = vpack.c.b16 %v902, %v901
        %v916 = vpack.c.b16 %v904, %v903
        %v917 = vpack.c.b16 %v906, %v905
        %v918 = vpack.c.b16 %v908, %v907
        %v919 = vpack.c.b16 %v910, %v909
        %v920 = vpack.c.b16 %v912, %v911
        %929 = vmatpush.bf16.msra.mxu0 %v920
        %930 = vmatpush.bf16.msra.mxu0 %v919
        %931 = vmatpush.bf16.msra.mxu0 %v918
        %932 = vmatpush.bf16.msra.mxu0 %v917
        %933 = vmatpush.bf16.msra.mxu0 %v916
        %934 = vmatpush.bf16.msra.mxu0 %v915
        %935 = vmatpush.bf16.msra.mxu0 %v914
        %936 = vmatpush.bf16.msra.mxu0 %v913
        %937 = vmatmul.bf16.gmra.mxu0 %v690
        %v938 = vpop.f32.mrf.mxu0
        %v939 = vadd.f32 %v879, %v938
        %v940 = vpop.f32.mrf.mxu0
        %v941 = vadd.f32 %v879, %v940
        %942 = vmatmul.bf16.gmra.mxu0 %v691
        %v943 = vpop.f32.mrf.mxu0
        %v944 = vadd.f32 %v879, %v943
        %v945 = vpop.f32.mrf.mxu0
        %v946 = vadd.f32 %v879, %v945
        %947 = vdwg.mxu0
        %949 = vrot.lane.b32.xlu0 %v770, 96
        %v950 = vpop.permute.xlu0 %949
        %952 = vrot.lane.b32.xlu0 %v770, 64
        %v953 = vpop.permute.xlu0 %952
        %955 = vrot.lane.b32.xlu0 %v770, 32
        %v956 = vpop.permute.xlu0 %955
        %959 = vrot.lane.b32.xlu0 %v772, 96
        %v960 = vpop.permute.xlu0 %959
        %962 = vrot.lane.b32.xlu0 %v772, 64
        %v963 = vpop.permute.xlu0 %962
        %965 = vrot.lane.b32.xlu0 %v772, 32
        %v966 = vpop.permute.xlu0 %965
        %v968 = vpack.c.bf16 %v770, %v770
        %v969 = vpack.c.bf16 %v950, %v950
        %v970 = vpack.c.bf16 %v953, %v953
        %v971 = vpack.c.bf16 %v956, %v956
        %v972 = vpack.c.bf16 %v772, %v772
        %v973 = vpack.c.bf16 %v960, %v960
        %v974 = vpack.c.bf16 %v963, %v963
        %v975 = vpack.c.bf16 %v966, %v966
        %978 = vrot.lane.b32.xlu0 %v852, 96
        %v979 = vpop.permute.xlu0 %978
        %980 = vrot.lane.b32.xlu0 %v854, 96
        %v981 = vpop.permute.xlu0 %980
        %984 = vrot.lane.b32.xlu0 %v852, 64
        %v985 = vpop.permute.xlu0 %984
        %986 = vrot.lane.b32.xlu0 %v854, 64
        %v987 = vpop.permute.xlu0 %986
        %990 = vrot.lane.b32.xlu0 %v852, 32
        %v991 = vpop.permute.xlu0 %990
        %992 = vrot.lane.b32.xlu0 %v854, 32
        %v993 = vpop.permute.xlu0 %992
        %998 = vrot.lane.b32.xlu0 %v857, 96
        %v999 = vpop.permute.xlu0 %998
        %1000 = vrot.lane.b32.xlu0 %v859, 96
        %v1001 = vpop.permute.xlu0 %1000
        %1004 = vrot.lane.b32.xlu0 %v857, 64
        %v1005 = vpop.permute.xlu0 %1004
        %1006 = vrot.lane.b32.xlu0 %v859, 64
        %v1007 = vpop.permute.xlu0 %1006
        %1010 = vrot.lane.b32.xlu0 %v857, 32
        %v1011 = vpop.permute.xlu0 %1010
        %1012 = vrot.lane.b32.xlu0 %v859, 32
        %v1013 = vpop.permute.xlu0 %1012
        %v1016 = vpack.c.bf16 %v852, %v852
        %v1017 = vpack.c.bf16 %v854, %v854
        %v1018 = vpack.c.bf16 %v979, %v979
        %v1019 = vpack.c.bf16 %v981, %v981
        %v1020 = vpack.c.bf16 %v985, %v985
        %v1021 = vpack.c.bf16 %v987, %v987
        %v1022 = vpack.c.bf16 %v991, %v991
        %v1023 = vpack.c.bf16 %v993, %v993
        %v1024 = vpack.c.bf16 %v857, %v857
        %v1025 = vpack.c.bf16 %v859, %v859
        %v1026 = vpack.c.bf16 %v999, %v999
        %v1027 = vpack.c.bf16 %v1001, %v1001
        %v1028 = vpack.c.bf16 %v1005, %v1005
        %v1029 = vpack.c.bf16 %v1007, %v1007
        %v1030 = vpack.c.bf16 %v1011, %v1011
        %v1031 = vpack.c.bf16 %v1013, %v1013
        %1034 = vrot.lane.b32.xlu0 %v939, 96
        %v1035 = vpop.permute.xlu0 %1034
        %1036 = vrot.lane.b32.xlu0 %v941, 96
        %v1037 = vpop.permute.xlu0 %1036
        %1040 = vrot.lane.b32.xlu0 %v939, 64
        %v1041 = vpop.permute.xlu0 %1040
        %1042 = vrot.lane.b32.xlu0 %v941, 64
        %v1043 = vpop.permute.xlu0 %1042
        %1046 = vrot.lane.b32.xlu0 %v939, 32
        %v1047 = vpop.permute.xlu0 %1046
        %1048 = vrot.lane.b32.xlu0 %v941, 32
        %v1049 = vpop.permute.xlu0 %1048
        %1054 = vrot.lane.b32.xlu0 %v944, 96
        %v1055 = vpop.permute.xlu0 %1054
        %1056 = vrot.lane.b32.xlu0 %v946, 96
        %v1057 = vpop.permute.xlu0 %1056
        %1060 = vrot.lane.b32.xlu0 %v944, 64
        %v1061 = vpop.permute.xlu0 %1060
        %1062 = vrot.lane.b32.xlu0 %v946, 64
        %v1063 = vpop.permute.xlu0 %1062
        %1066 = vrot.lane.b32.xlu0 %v944, 32
        %v1067 = vpop.permute.xlu0 %1066
        %1068 = vrot.lane.b32.xlu0 %v946, 32
        %v1069 = vpop.permute.xlu0 %1068
        %v1072 = vpack.c.bf16 %v939, %v939
        %v1073 = vpack.c.bf16 %v941, %v941
        %v1074 = vpack.c.bf16 %v1035, %v1035
        %v1075 = vpack.c.bf16 %v1037, %v1037
        %v1076 = vpack.c.bf16 %v1041, %v1041
        %v1077 = vpack.c.bf16 %v1043, %v1043
        %v1078 = vpack.c.bf16 %v1047, %v1047
        %v1079 = vpack.c.bf16 %v1049, %v1049
        %v1080 = vpack.c.bf16 %v944, %v944
        %v1081 = vpack.c.bf16 %v946, %v946
        %v1082 = vpack.c.bf16 %v1055, %v1055
        %v1083 = vpack.c.bf16 %v1057, %v1057
        %v1084 = vpack.c.bf16 %v1061, %v1061
        %v1085 = vpack.c.bf16 %v1063, %v1063
        %v1086 = vpack.c.bf16 %v1067, %v1067
        %v1087 = vpack.c.bf16 %v1069, %v1069
        %v1090 = vunpack.c.l.b16 %v1016
        %v1091 = vunpack.c.l.b16 %v1017
        %v1092 = vpack.c.b16 %v1091, %v1090
        %vm1093 = vcmask 261120
        %v1095 = vsel %vm1093, %v968, 0
        %v1098 = vsel %vm1093, %v1092, 0
        %1100 = vmatpush.bf16.xpose.msra.mxu0 0
        %1101 = vmatpush.bf16.xpose.msra.mxu0 0
        %1102 = vmatpush.bf16.xpose.msra.mxu0 0
        %1103 = vmatpush.bf16.xpose.msra.mxu0 0
        %1104 = vmatpush.bf16.xpose.msra.mxu0 0
        %1105 = vmatpush.bf16.xpose.msra.mxu0 0
        %1106 = vmatpush.bf16.xpose.msra.mxu0 0
        %1107 = vmatpush.bf16.xpose.msra.mxu0 %v1098
        %1108 = vmatmul.bf16.gmra.mxu0 %v1095
        %v1109 = vpop.f32.mrf.mxu0
        %v1110 = vadd.f32 0.0, %v1109
        %v1111 = vpop.f32.mrf.mxu0
        %1112 = vdwg.mxu0
        %v1115 = vunpack.c.l.b16 %v1018
        %v1116 = vunpack.c.l.b16 %v1019
        %v1117 = vpack.c.b16 %v1116, %v1115
        %v1119 = vsel %vm1093, %v969, 0
        %v1122 = vsel %vm1093, %v1117, 0
        %1124 = vmatpush.bf16.xpose.msra.mxu0 0
        %1125 = vmatpush.bf16.xpose.msra.mxu0 0
        %1126 = vmatpush.bf16.xpose.msra.mxu0 0
        %1127 = vmatpush.bf16.xpose.msra.mxu0 0
        %1128 = vmatpush.bf16.xpose.msra.mxu0 0
        %1129 = vmatpush.bf16.xpose.msra.mxu0 0
        %1130 = vmatpush.bf16.xpose.msra.mxu0 0
        %1131 = vmatpush.bf16.xpose.msra.mxu0 %v1122
        %1132 = vmatmul.bf16.gmra.mxu0 %v1119
        %v1133 = vpop.f32.mrf.mxu0
        %v1134 = vadd.f32 0.0, %v1133
        %v1135 = vpop.f32.mrf.mxu0
        %1136 = vdwg.mxu0
        %v1139 = vunpack.c.l.b16 %v1020
        %v1140 = vunpack.c.l.b16 %v1021
        %v1141 = vpack.c.b16 %v1140, %v1139
        %v1143 = vsel %vm1093, %v970, 0
        %v1146 = vsel %vm1093, %v1141, 0
        %1148 = vmatpush.bf16.xpose.msra.mxu0 0
        %1149 = vmatpush.bf16.xpose.msra.mxu0 0
        %1150 = vmatpush.bf16.xpose.msra.mxu0 0
        %1151 = vmatpush.bf16.xpose.msra.mxu0 0
        %1152 = vmatpush.bf16.xpose.msra.mxu0 0
        %1153 = vmatpush.bf16.xpose.msra.mxu0 0
        %1154 = vmatpush.bf16.xpose.msra.mxu0 0
        %1155 = vmatpush.bf16.xpose.msra.mxu0 %v1146
        %1156 = vmatmul.bf16.gmra.mxu0 %v1143
        %v1157 = vpop.f32.mrf.mxu0
        %v1158 = vadd.f32 0.0, %v1157
        %v1159 = vpop.f32.mrf.mxu0
        %1160 = vdwg.mxu0
        %v1163 = vunpack.c.l.b16 %v1022
        %v1164 = vunpack.c.l.b16 %v1023
        %v1165 = vpack.c.b16 %v1164, %v1163
        %v1167 = vsel %vm1093, %v971, 0
        %v1170 = vsel %vm1093, %v1165, 0
        %1172 = vmatpush.bf16.xpose.msra.mxu0 0
        %1173 = vmatpush.bf16.xpose.msra.mxu0 0
        %1174 = vmatpush.bf16.xpose.msra.mxu0 0
        %1175 = vmatpush.bf16.xpose.msra.mxu0 0
        %1176 = vmatpush.bf16.xpose.msra.mxu0 0
        %1177 = vmatpush.bf16.xpose.msra.mxu0 0
        %1178 = vmatpush.bf16.xpose.msra.mxu0 0
        %1179 = vmatpush.bf16.xpose.msra.mxu0 %v1170
        %1180 = vmatmul.bf16.gmra.mxu0 %v1167
        %v1181 = vpop.f32.mrf.mxu0
        %v1182 = vadd.f32 0.0, %v1181
        %v1183 = vpop.f32.mrf.mxu0
        %1184 = vdwg.mxu0
        %v1187 = vunpack.c.l.b16 %v1024
        %v1188 = vunpack.c.l.b16 %v1025
        %v1189 = vpack.c.b16 %v1188, %v1187
        %v1191 = vsel %vm1093, %v972, 0
        %v1194 = vsel %vm1093, %v1189, 0
        %1196 = vmatpush.bf16.xpose.msra.mxu0 0
        %1197 = vmatpush.bf16.xpose.msra.mxu0 0
        %1198 = vmatpush.bf16.xpose.msra.mxu0 0
        %1199 = vmatpush.bf16.xpose.msra.mxu0 0
        %1200 = vmatpush.bf16.xpose.msra.mxu0 0
        %1201 = vmatpush.bf16.xpose.msra.mxu0 0
        %1202 = vmatpush.bf16.xpose.msra.mxu0 0
        %1203 = vmatpush.bf16.xpose.msra.mxu0 %v1194
        %1204 = vmatmul.bf16.gmra.mxu0 %v1191
        %v1205 = vpop.f32.mrf.mxu0
        %v1206 = vadd.f32 0.0, %v1205
        %v1207 = vpop.f32.mrf.mxu0
        %1208 = vdwg.mxu0
        %v1211 = vunpack.c.l.b16 %v1026
        %v1212 = vunpack.c.l.b16 %v1027
        %v1213 = vpack.c.b16 %v1212, %v1211
        %v1215 = vsel %vm1093, %v973, 0
        %v1218 = vsel %vm1093, %v1213, 0
        %1220 = vmatpush.bf16.xpose.msra.mxu0 0
        %1221 = vmatpush.bf16.xpose.msra.mxu0 0
        %1222 = vmatpush.bf16.xpose.msra.mxu0 0
        %1223 = vmatpush.bf16.xpose.msra.mxu0 0
        %1224 = vmatpush.bf16.xpose.msra.mxu0 0
        %1225 = vmatpush.bf16.xpose.msra.mxu0 0
        %1226 = vmatpush.bf16.xpose.msra.mxu0 0
        %1227 = vmatpush.bf16.xpose.msra.mxu0 %v1218
        %1228 = vmatmul.bf16.gmra.mxu0 %v1215
        %v1229 = vpop.f32.mrf.mxu0
        %v1230 = vadd.f32 0.0, %v1229
        %v1231 = vpop.f32.mrf.mxu0
        %1232 = vdwg.mxu0
        %v1235 = vunpack.c.l.b16 %v1028
        %v1236 = vunpack.c.l.b16 %v1029
        %v1237 = vpack.c.b16 %v1236, %v1235
        %v1239 = vsel %vm1093, %v974, 0
        %v1242 = vsel %vm1093, %v1237, 0
        %1244 = vmatpush.bf16.xpose.msra.mxu0 0
        %1245 = vmatpush.bf16.xpose.msra.mxu0 0
        %1246 = vmatpush.bf16.xpose.msra.mxu0 0
        %1247 = vmatpush.bf16.xpose.msra.mxu0 0
        %1248 = vmatpush.bf16.xpose.msra.mxu0 0
        %1249 = vmatpush.bf16.xpose.msra.mxu0 0
        %1250 = vmatpush.bf16.xpose.msra.mxu0 0
        %1251 = vmatpush.bf16.xpose.msra.mxu0 %v1242
        %1252 = vmatmul.bf16.gmra.mxu0 %v1239
        %v1253 = vpop.f32.mrf.mxu0
        %v1254 = vadd.f32 0.0, %v1253
        %v1255 = vpop.f32.mrf.mxu0
        %1256 = vdwg.mxu0
        %v1259 = vunpack.c.l.b16 %v1030
        %v1260 = vunpack.c.l.b16 %v1031
        %v1261 = vpack.c.b16 %v1260, %v1259
        %v1263 = vsel %vm1093, %v975, 0
        %v1266 = vsel %vm1093, %v1261, 0
        %1268 = vmatpush.bf16.xpose.msra.mxu0 0
        %1269 = vmatpush.bf16.xpose.msra.mxu0 0
        %1270 = vmatpush.bf16.xpose.msra.mxu0 0
        %1271 = vmatpush.bf16.xpose.msra.mxu0 0
        %1272 = vmatpush.bf16.xpose.msra.mxu0 0
        %1273 = vmatpush.bf16.xpose.msra.mxu0 0
        %1274 = vmatpush.bf16.xpose.msra.mxu0 0
        %1275 = vmatpush.bf16.xpose.msra.mxu0 %v1266
        %1276 = vmatmul.bf16.gmra.mxu0 %v1263
        %v1277 = vpop.f32.mrf.mxu0
        %v1278 = vadd.f32 0.0, %v1277
        %v1279 = vpop.f32.mrf.mxu0
        %1280 = vdwg.mxu0
        %vm1281 = vcmask 130048
        %v1282 = vsel %vm1281, %v1110, -inf
        %1283 = vmax.xlane.f32.xlu0 %v1282
        %v1284 = vpop.xlane.xlu0 %1283
        %v1285 = vsel %vm1281, %v1134, -inf
        %1286 = vmax.xlane.f32.xlu0 %v1285
        %v1287 = vpop.xlane.xlu0 %1286
        %v1288 = vsel %vm1281, %v1158, -inf
        %1289 = vmax.xlane.f32.xlu0 %v1288
        %v1290 = vpop.xlane.xlu0 %1289
        %v1291 = vsel %vm1281, %v1182, -inf
        %1292 = vmax.xlane.f32.xlu0 %v1291
        %v1293 = vpop.xlane.xlu0 %1292
        %v1294 = vsel %vm1281, %v1206, -inf
        %1295 = vmax.xlane.f32.xlu0 %v1294
        %v1296 = vpop.xlane.xlu0 %1295
        %v1297 = vsel %vm1281, %v1230, -inf
        %1298 = vmax.xlane.f32.xlu0 %v1297
        %v1299 = vpop.xlane.xlu0 %1298
        %v1300 = vsel %vm1281, %v1254, -inf
        %1301 = vmax.xlane.f32.xlu0 %v1300
        %v1302 = vpop.xlane.xlu0 %1301
        %v1303 = vsel %vm1281, %v1278, -inf
        %1304 = vmax.xlane.f32.xlu0 %v1303
        %v1305 = vpop.xlane.xlu0 %1304
        %v1306 = vsub.f32 %v1110, %v1284
        %v1307 = vsub.f32 %v1134, %v1287
        %v1308 = vsub.f32 %v1158, %v1290
        %v1309 = vsub.f32 %v1182, %v1293
        %v1310 = vsub.f32 %v1206, %v1296
        %v1311 = vsub.f32 %v1230, %v1299
        %v1312 = vsub.f32 %v1254, %v1302
        %v1313 = vsub.f32 %v1278, %v1305
        %v1314 = vmul.f32 %v1306, 1.442695
        %v1315 = vpow.pop %v1314
        %v1316 = vmul.f32 %v1307, 1.442695
        %v1317 = vpow.pop %v1316
        %v1318 = vmul.f32 %v1308, 1.442695
        %v1319 = vpow.pop %v1318
        %v1320 = vmul.f32 %v1309, 1.442695
        %v1321 = vpow.pop %v1320
        %v1322 = vmul.f32 %v1310, 1.442695
        %v1323 = vpow.pop %v1322
        %v1324 = vmul.f32 %v1311, 1.442695
        %v1325 = vpow.pop %v1324
        %v1326 = vmul.f32 %v1312, 1.442695
        %v1327 = vpow.pop %v1326
        %v1328 = vmul.f32 %v1313, 1.442695
        %v1329 = vpow.pop %v1328
        %v1330 = vsel %vm1281, %v1315, 0.0
        %1331 = vadd.xlane.f32.xlu0 %v1330
        %v1332 = vpop.xlane.xlu0 %1331
        %v1333 = vsel %vm1281, %v1317, 0.0
        %1334 = vadd.xlane.f32.xlu0 %v1333
        %v1335 = vpop.xlane.xlu0 %1334
        %v1336 = vsel %vm1281, %v1319, 0.0
        %1337 = vadd.xlane.f32.xlu0 %v1336
        %v1338 = vpop.xlane.xlu0 %1337
        %v1339 = vsel %vm1281, %v1321, 0.0
        %1340 = vadd.xlane.f32.xlu0 %v1339
        %v1341 = vpop.xlane.xlu0 %1340
        %v1342 = vsel %vm1281, %v1323, 0.0
        %1343 = vadd.xlane.f32.xlu0 %v1342
        %v1344 = vpop.xlane.xlu0 %1343
        %v1345 = vsel %vm1281, %v1325, 0.0
        %1346 = vadd.xlane.f32.xlu0 %v1345
        %v1347 = vpop.xlane.xlu0 %1346
        %v1348 = vsel %vm1281, %v1327, 0.0
        %1349 = vadd.xlane.f32.xlu0 %v1348
        %v1350 = vpop.xlane.xlu0 %1349
        %v1351 = vsel %vm1281, %v1329, 0.0
        %1352 = vadd.xlane.f32.xlu0 %v1351
        %v1353 = vpop.xlane.xlu0 %1352
        %v1354 = vrcp.pop %v1332
        %v1355 = vmul.f32 %v1332, %v1354
        %v1356 = vsub.f32 1.0, %v1355
        %v1357 = vmul.f32 %v1354, %v1356
        %v1358 = vadd.f32 %v1354, %v1357
        %vm1359 = vweird.f32 %v1332
        %vm1360 = vweird.f32 %v1354
        %vm1361 = vmor %vm1359, %vm1360
        %v1362 = vsel %vm1361, %v1354, %v1358
        %v1363 = vand.u32 2147483647, %v1332
        %vm1364 = vcmp.eq.f32.partialorder %v1363, 8.507059e+37
        %v1365 = vand.u32 %v1332, 2147483648
        %v1366 = vor.u32 1.1754944e-38, %v1365
        %v1367 = vsel %vm1364, %v1366, %v1362
        %v1368 = vmul.f32 %v1315, %v1367
        %v1369 = vrcp.pop %v1335
        %v1370 = vmul.f32 %v1335, %v1369
        %v1371 = vsub.f32 1.0, %v1370
        %v1372 = vmul.f32 %v1369, %v1371
        %v1373 = vadd.f32 %v1369, %v1372
        %vm1374 = vweird.f32 %v1335
        %vm1375 = vweird.f32 %v1369
        %vm1376 = vmor %vm1374, %vm1375
        %v1377 = vsel %vm1376, %v1369, %v1373
        %v1378 = vand.u32 2147483647, %v1335
        %vm1379 = vcmp.eq.f32.partialorder %v1378, 8.507059e+37
        %v1380 = vand.u32 %v1335, 2147483648
        %v1381 = vor.u32 1.1754944e-38, %v1380
        %v1382 = vsel %vm1379, %v1381, %v1377
        %v1383 = vmul.f32 %v1317, %v1382
        %v1384 = vrcp.pop %v1338
        %v1385 = vmul.f32 %v1338, %v1384
        %v1386 = vsub.f32 1.0, %v1385
        %v1387 = vmul.f32 %v1384, %v1386
        %v1388 = vadd.f32 %v1384, %v1387
        %vm1389 = vweird.f32 %v1338
        %vm1390 = vweird.f32 %v1384
        %vm1391 = vmor %vm1389, %vm1390
        %v1392 = vsel %vm1391, %v1384, %v1388
        %v1393 = vand.u32 2147483647, %v1338
        %vm1394 = vcmp.eq.f32.partialorder %v1393, 8.507059e+37
        %v1395 = vand.u32 %v1338, 2147483648
        %v1396 = vor.u32 1.1754944e-38, %v1395
        %v1397 = vsel %vm1394, %v1396, %v1392
        %v1398 = vmul.f32 %v1319, %v1397
        %v1399 = vrcp.pop %v1341
        %v1400 = vmul.f32 %v1341, %v1399
        %v1401 = vsub.f32 1.0, %v1400
        %v1402 = vmul.f32 %v1399, %v1401
        %v1403 = vadd.f32 %v1399, %v1402
        %vm1404 = vweird.f32 %v1341
        %vm1405 = vweird.f32 %v1399
        %vm1406 = vmor %vm1404, %vm1405
        %v1407 = vsel %vm1406, %v1399, %v1403
        %v1408 = vand.u32 2147483647, %v1341
        %vm1409 = vcmp.eq.f32.partialorder %v1408, 8.507059e+37
        %v1410 = vand.u32 %v1341, 2147483648
        %v1411 = vor.u32 1.1754944e-38, %v1410
        %v1412 = vsel %vm1409, %v1411, %v1407
        %v1413 = vmul.f32 %v1321, %v1412
        %v1414 = vrcp.pop %v1344
        %v1415 = vmul.f32 %v1344, %v1414
        %v1416 = vsub.f32 1.0, %v1415
        %v1417 = vmul.f32 %v1414, %v1416
        %v1418 = vadd.f32 %v1414, %v1417
        %vm1419 = vweird.f32 %v1344
        %vm1420 = vweird.f32 %v1414
        %vm1421 = vmor %vm1419, %vm1420
        %v1422 = vsel %vm1421, %v1414, %v1418
        %v1423 = vand.u32 2147483647, %v1344
        %vm1424 = vcmp.eq.f32.partialorder %v1423, 8.507059e+37
        %v1425 = vand.u32 %v1344, 2147483648
        %v1426 = vor.u32 1.1754944e-38, %v1425
        %v1427 = vsel %vm1424, %v1426, %v1422
        %v1428 = vmul.f32 %v1323, %v1427
        %v1429 = vrcp.pop %v1347
        %v1430 = vmul.f32 %v1347, %v1429
        %v1431 = vsub.f32 1.0, %v1430
        %v1432 = vmul.f32 %v1429, %v1431
        %v1433 = vadd.f32 %v1429, %v1432
        %vm1434 = vweird.f32 %v1347
        %vm1435 = vweird.f32 %v1429
        %vm1436 = vmor %vm1434, %vm1435
        %v1437 = vsel %vm1436, %v1429, %v1433
        %v1438 = vand.u32 2147483647, %v1347
        %vm1439 = vcmp.eq.f32.partialorder %v1438, 8.507059e+37
        %v1440 = vand.u32 %v1347, 2147483648
        %v1441 = vor.u32 1.1754944e-38, %v1440
        %v1442 = vsel %vm1439, %v1441, %v1437
        %v1443 = vmul.f32 %v1325, %v1442
        %v1444 = vrcp.pop %v1350
        %v1445 = vmul.f32 %v1350, %v1444
        %v1446 = vsub.f32 1.0, %v1445
        %v1447 = vmul.f32 %v1444, %v1446
        %v1448 = vadd.f32 %v1444, %v1447
        %vm1449 = vweird.f32 %v1350
        %vm1450 = vweird.f32 %v1444
        %vm1451 = vmor %vm1449, %vm1450
        %v1452 = vsel %vm1451, %v1444, %v1448
        %v1453 = vand.u32 2147483647, %v1350
        %vm1454 = vcmp.eq.f32.partialorder %v1453, 8.507059e+37
        %v1455 = vand.u32 %v1350, 2147483648
        %v1456 = vor.u32 1.1754944e-38, %v1455
        %v1457 = vsel %vm1454, %v1456, %v1452
        %v1458 = vmul.f32 %v1327, %v1457
        %v1459 = vrcp.pop %v1353
        %v1460 = vmul.f32 %v1353, %v1459
        %v1461 = vsub.f32 1.0, %v1460
        %v1462 = vmul.f32 %v1459, %v1461
        %v1463 = vadd.f32 %v1459, %v1462
        %vm1464 = vweird.f32 %v1353
        %vm1465 = vweird.f32 %v1459
        %vm1466 = vmor %vm1464, %vm1465
        %v1467 = vsel %vm1466, %v1459, %v1463
        %v1468 = vand.u32 2147483647, %v1353
        %vm1469 = vcmp.eq.f32.partialorder %v1468, 8.507059e+37
        %v1470 = vand.u32 %v1353, 2147483648
        %v1471 = vor.u32 1.1754944e-38, %v1470
        %v1472 = vsel %vm1469, %v1471, %v1467
        %v1473 = vmul.f32 %v1329, %v1472
        %v1474 = vpack.c.bf16 %v1368, %v1368
        %v1475 = vpack.c.bf16 %v1383, %v1383
        %v1476 = vpack.c.bf16 %v1398, %v1398
        %v1477 = vpack.c.bf16 %v1413, %v1413
        %v1478 = vpack.c.bf16 %v1428, %v1428
        %v1479 = vpack.c.bf16 %v1443, %v1443
        %v1480 = vpack.c.bf16 %v1458, %v1458
        %v1481 = vpack.c.bf16 %v1473, %v1473
        %v1484 = vunpack.c.l.b16 %v1072
        %v1485 = vunpack.c.l.b16 %v1073
        %v1486 = vpack.c.b16 %v1485, %v1484
        %v1489 = vsel %vm1281, %v1474, 0
        %1491 = vmatpush.bf16.msra.mxu0 0
        %1492 = vmatpush.bf16.msra.mxu0 0
        %1493 = vmatpush.bf16.msra.mxu0 0
        %1494 = vmatpush.bf16.msra.mxu0 0
        %1495 = vmatpush.bf16.msra.mxu0 0
        %1496 = vmatpush.bf16.msra.mxu0 0
        %1497 = vmatpush.bf16.msra.mxu0 0
        %1498 = vmatpush.bf16.msra.mxu0 %v1486
        %1499 = vmatmul.bf16.gmra.mxu0 %v1489
        %v1500 = vpop.f32.mrf.mxu0
        %v1501 = vadd.f32 0.0, %v1500
        %v1502 = vpop.f32.mrf.mxu0
        %1503 = vdwg.mxu0
        %v1506 = vunpack.c.l.b16 %v1074
        %v1507 = vunpack.c.l.b16 %v1075
        %v1508 = vpack.c.b16 %v1507, %v1506
        %v1511 = vsel %vm1281, %v1475, 0
        %1513 = vmatpush.bf16.msra.mxu0 0
        %1514 = vmatpush.bf16.msra.mxu0 0
        %1515 = vmatpush.bf16.msra.mxu0 0
        %1516 = vmatpush.bf16.msra.mxu0 0
        %1517 = vmatpush.bf16.msra.mxu0 0
        %1518 = vmatpush.bf16.msra.mxu0 0
        %1519 = vmatpush.bf16.msra.mxu0 0
        %1520 = vmatpush.bf16.msra.mxu0 %v1508
        %1521 = vmatmul.bf16.gmra.mxu0 %v1511
        %v1522 = vpop.f32.mrf.mxu0
        %v1523 = vadd.f32 0.0, %v1522
        %v1524 = vpop.f32.mrf.mxu0
        %1525 = vdwg.mxu0
        %v1528 = vunpack.c.l.b16 %v1076
        %v1529 = vunpack.c.l.b16 %v1077
        %v1530 = vpack.c.b16 %v1529, %v1528
        %v1533 = vsel %vm1281, %v1476, 0
        %1535 = vmatpush.bf16.msra.mxu0 0
        %1536 = vmatpush.bf16.msra.mxu0 0
        %1537 = vmatpush.bf16.msra.mxu0 0
        %1538 = vmatpush.bf16.msra.mxu0 0
        %1539 = vmatpush.bf16.msra.mxu0 0
        %1540 = vmatpush.bf16.msra.mxu0 0
        %1541 = vmatpush.bf16.msra.mxu0 0
        %1542 = vmatpush.bf16.msra.mxu0 %v1530
        %1543 = vmatmul.bf16.gmra.mxu0 %v1533
        %v1544 = vpop.f32.mrf.mxu0
        %v1545 = vadd.f32 0.0, %v1544
        %v1546 = vpop.f32.mrf.mxu0
        %1547 = vdwg.mxu0
        %v1550 = vunpack.c.l.b16 %v1078
        %v1551 = vunpack.c.l.b16 %v1079
        %v1552 = vpack.c.b16 %v1551, %v1550
        %v1555 = vsel %vm1281, %v1477, 0
        %1557 = vmatpush.bf16.msra.mxu0 0
        %1558 = vmatpush.bf16.msra.mxu0 0
        %1559 = vmatpush.bf16.msra.mxu0 0
        %1560 = vmatpush.bf16.msra.mxu0 0
        %1561 = vmatpush.bf16.msra.mxu0 0
        %1562 = vmatpush.bf16.msra.mxu0 0
        %1563 = vmatpush.bf16.msra.mxu0 0
        %1564 = vmatpush.bf16.msra.mxu0 %v1552
        %1565 = vmatmul.bf16.gmra.mxu0 %v1555
        %v1566 = vpop.f32.mrf.mxu0
        %v1567 = vadd.f32 0.0, %v1566
        %v1568 = vpop.f32.mrf.mxu0
        %1569 = vdwg.mxu0
        %v1572 = vunpack.c.l.b16 %v1080
        %v1573 = vunpack.c.l.b16 %v1081
        %v1574 = vpack.c.b16 %v1573, %v1572
        %v1577 = vsel %vm1281, %v1478, 0
        %1579 = vmatpush.bf16.msra.mxu0 0
        %1580 = vmatpush.bf16.msra.mxu0 0
        %1581 = vmatpush.bf16.msra.mxu0 0
        %1582 = vmatpush.bf16.msra.mxu0 0
        %1583 = vmatpush.bf16.msra.mxu0 0
        %1584 = vmatpush.bf16.msra.mxu0 0
        %1585 = vmatpush.bf16.msra.mxu0 0
        %1586 = vmatpush.bf16.msra.mxu0 %v1574
        %1587 = vmatmul.bf16.gmra.mxu0 %v1577
        %v1588 = vpop.f32.mrf.mxu0
        %v1589 = vadd.f32 0.0, %v1588
        %v1590 = vpop.f32.mrf.mxu0
        %1591 = vdwg.mxu0
        %v1594 = vunpack.c.l.b16 %v1082
        %v1595 = vunpack.c.l.b16 %v1083
        %v1596 = vpack.c.b16 %v1595, %v1594
        %v1599 = vsel %vm1281, %v1479, 0
        %1601 = vmatpush.bf16.msra.mxu0 0
        %1602 = vmatpush.bf16.msra.mxu0 0
        %1603 = vmatpush.bf16.msra.mxu0 0
        %1604 = vmatpush.bf16.msra.mxu0 0
        %1605 = vmatpush.bf16.msra.mxu0 0
        %1606 = vmatpush.bf16.msra.mxu0 0
        %1607 = vmatpush.bf16.msra.mxu0 0
        %1608 = vmatpush.bf16.msra.mxu0 %v1596
        %1609 = vmatmul.bf16.gmra.mxu0 %v1599
        %v1610 = vpop.f32.mrf.mxu0
        %v1611 = vadd.f32 0.0, %v1610
        %v1612 = vpop.f32.mrf.mxu0
        %1613 = vdwg.mxu0
        %v1616 = vunpack.c.l.b16 %v1084
        %v1617 = vunpack.c.l.b16 %v1085
        %v1618 = vpack.c.b16 %v1617, %v1616
        %v1621 = vsel %vm1281, %v1480, 0
        %1623 = vmatpush.bf16.msra.mxu0 0
        %1624 = vmatpush.bf16.msra.mxu0 0
        %1625 = vmatpush.bf16.msra.mxu0 0
        %1626 = vmatpush.bf16.msra.mxu0 0
        %1627 = vmatpush.bf16.msra.mxu0 0
        %1628 = vmatpush.bf16.msra.mxu0 0
        %1629 = vmatpush.bf16.msra.mxu0 0
        %1630 = vmatpush.bf16.msra.mxu0 %v1618
        %1631 = vmatmul.bf16.gmra.mxu0 %v1621
        %v1632 = vpop.f32.mrf.mxu0
        %v1633 = vadd.f32 0.0, %v1632
        %v1634 = vpop.f32.mrf.mxu0
        %1635 = vdwg.mxu0
        %v1638 = vunpack.c.l.b16 %v1086
        %v1639 = vunpack.c.l.b16 %v1087
        %v1640 = vpack.c.b16 %v1639, %v1638
        %v1643 = vsel %vm1281, %v1481, 0
        %1645 = vmatpush.bf16.msra.mxu0 0
        %1646 = vmatpush.bf16.msra.mxu0 0
        %1647 = vmatpush.bf16.msra.mxu0 0
        %1648 = vmatpush.bf16.msra.mxu0 0
        %1649 = vmatpush.bf16.msra.mxu0 0
        %1650 = vmatpush.bf16.msra.mxu0 0
        %1651 = vmatpush.bf16.msra.mxu0 0
        %1652 = vmatpush.bf16.msra.mxu0 %v1640
        %1653 = vmatmul.bf16.gmra.mxu0 %v1643
        %v1654 = vpop.f32.mrf.mxu0
        %v1655 = vadd.f32 0.0, %v1654
        %v1656 = vpop.f32.mrf.mxu0
        %1657 = vdwg.mxu0
        %1659 = vrot.lane.b32.xlu0 %v1523, 32
        %v1660 = vpop.permute.xlu0 %1659
        %1663 = vrot.lane.b32.xlu0 %v1545, 64
        %v1664 = vpop.permute.xlu0 %1663
        %1667 = vrot.lane.b32.xlu0 %v1567, 96
        %v1668 = vpop.permute.xlu0 %1667
        %v1670 = vsel %vm1093, %v1501, %v1660
        %vm1671 = vcmask 523264
        %v1672 = vsel %vm1671, %v1670, %v1664
        %vm1673 = vcmask 785408
        %v1674 = vsel %vm1673, %v1672, %v1668
        %1676 = vrot.lane.b32.xlu0 %v1611, 32
        %v1677 = vpop.permute.xlu0 %1676
        %1680 = vrot.lane.b32.xlu0 %v1633, 64
        %v1681 = vpop.permute.xlu0 %1680
        %1684 = vrot.lane.b32.xlu0 %v1655, 96
        %v1685 = vpop.permute.xlu0 %1684
        %v1687 = vsel %vm1093, %v1589, %v1677
        %v1688 = vsel %vm1671, %v1687, %v1681
        %v1689 = vsel %vm1673, %v1688, %v1685
        %v1690 = vpack.c.bf16 %v1689, %v1674
        %v1691 = vld [vmem:[#allocation12] sm:$0xf]
        %v1692 = vld [vmem:[#allocation12 + $0x4] sm:$0xf]
        %v1693 = vld [vmem:[#allocation12 + $0x8] sm:$0xf]
        %v1694 = vld [vmem:[#allocation12 + $0xc] sm:$0xf]
        %v1695 = vld [vmem:[#allocation12 + $0x10] sm:$0xf]
        %v1696 = vld [vmem:[#allocation12 + $0x14] sm:$0xf]
        %v1697 = vld [vmem:[#allocation12 + $0x18] sm:$0xf]
        %v1698 = vld [vmem:[#allocation12 + $0x1c] sm:$0xf]
        %v1699 = vld [vmem:[#allocation12 + $0x20] sm:$0xf]
        %v1700 = vld [vmem:[#allocation12 + $0x24] sm:$0xf]
        %v1701 = vld [vmem:[#allocation12 + $0x28] sm:$0xf]
        %v1702 = vld [vmem:[#allocation12 + $0x2c] sm:$0xf]
        %v1703 = vld [vmem:[#allocation12 + $0x30] sm:$0xf]
        %v1704 = vld [vmem:[#allocation12 + $0x34] sm:$0xf]
        %v1705 = vld [vmem:[#allocation12 + $0x38] sm:$0xf]
        %v1706 = vld [vmem:[#allocation12 + $0x3c] sm:$0xf]
        %v1707 = vld [vmem:[#allocation13] sm:$0x1]
        %v1709 = vperm.slane %v1707, 0
        %v1727 = vunpack.c.l.b16 %v1691
        %v1728 = vunpack.c.l.b16 %v1692
        %v1729 = vunpack.c.l.b16 %v1693
        %v1730 = vunpack.c.l.b16 %v1694
        %v1731 = vunpack.c.l.b16 %v1695
        %v1732 = vunpack.c.l.b16 %v1696
        %v1733 = vunpack.c.l.b16 %v1697
        %v1734 = vunpack.c.l.b16 %v1698
        %v1735 = vunpack.c.l.b16 %v1699
        %v1736 = vunpack.c.l.b16 %v1700
        %v1737 = vunpack.c.l.b16 %v1701
        %v1738 = vunpack.c.l.b16 %v1702
        %v1739 = vunpack.c.l.b16 %v1703
        %v1740 = vunpack.c.l.b16 %v1704
        %v1741 = vunpack.c.l.b16 %v1705
        %v1742 = vunpack.c.l.b16 %v1706
        %v1743 = vpack.c.b16 %v1728, %v1727
        %v1744 = vpack.c.b16 %v1730, %v1729
        %v1745 = vpack.c.b16 %v1732, %v1731
        %v1746 = vpack.c.b16 %v1734, %v1733
        %v1747 = vpack.c.b16 %v1736, %v1735
        %v1748 = vpack.c.b16 %v1738, %v1737
        %v1749 = vpack.c.b16 %v1740, %v1739
        %v1750 = vpack.c.b16 %v1742, %v1741
        %1759 = vmatpush.bf16.msra.mxu0 %v1750
        %1760 = vmatpush.bf16.msra.mxu0 %v1749
        %1761 = vmatpush.bf16.msra.mxu0 %v1748
        %1762 = vmatpush.bf16.msra.mxu0 %v1747
        %1763 = vmatpush.bf16.msra.mxu0 %v1746
        %1764 = vmatpush.bf16.msra.mxu0 %v1745
        %1765 = vmatpush.bf16.msra.mxu0 %v1744
        %1766 = vmatpush.bf16.msra.mxu0 %v1743
        %1767 = vmatmul.bf16.gmra.mxu0 %v1690
        %v1768 = vpop.f32.mrf.mxu0
        %v1769 = vadd.f32 %v1709, %v1768
        %v1770 = vpop.f32.mrf.mxu0
        %v1771 = vadd.f32 %v1709, %v1770
        %1772 = vdwg.mxu0
        %v1773 = vadd.f32 %v669, %v1769
        %v1774 = vadd.f32 %v670, %v1771
        %v1775 = vld [vmem:[%s12] sm:$0x1]
        %v1776 = vld [vmem:[%s13] sm:$0x1]
        %1777 = vadd.xlane.f32.xlu0 %v1773
        %v1778 = vpop.xlane.xlu0 %1777
        %1779 = vadd.xlane.f32.xlu0 %v1774
        %v1780 = vpop.xlane.xlu0 %1779
        %v1781 = vrcp.pop 128.0
        %v1782 = vmul.f32 128.0, %v1781
        %v1783 = vsub.f32 1.0, %v1782
        %v1784 = vmul.f32 %v1781, %v1783
        %v1785 = vadd.f32 %v1781, %v1784
        %vm1786 = vweird.f32 %v1781
        %v1787 = vsel %vm1786, %v1781, %v1785
        %v1788 = vmul.f32 %v1778, %v1787
        %v1789 = vmul.f32 %v1780, %v1787
        %v1790 = vsub.f32 %v1773, %v1788
        %v1791 = vsub.f32 %v1774, %v1789
        %v1792 = vmul.f32 %v1790, %v1790
        %v1793 = vmul.f32 %v1791, %v1791
        %1794 = vadd.xlane.f32.xlu0 %v1792
        %v1795 = vpop.xlane.xlu0 %1794
        %1796 = vadd.xlane.f32.xlu0 %v1793
        %v1797 = vpop.xlane.xlu0 %1796
        %v1798 = vmul.f32 %v1795, %v1787
        %v1799 = vmul.f32 %v1797, %v1787
        %v1800 = vadd.f32 %v1798, 1e-05
        %v1801 = vadd.f32 %v1799, 1e-05
        %v1802 = vrsqrt.pop %v1800
        %v1803 = vmul.f32 %v1802, %v1800
        %v1804 = vmul.f32 %v1803, %v1802
        %v1805 = vmul.f32 0.5, %v1804
        %v1806 = vsub.f32 1.5, %v1805
        %v1807 = vmul.f32 %v1802, %v1806
        %vm1808 = vweird.f32 %v1800
        %vm1809 = vweird.f32 %v1802
        %vm1810 = vmor %vm1808, %vm1809
        %v1811 = vsel %vm1810, %v1802, %v1807
        %v1812 = vrsqrt.pop %v1801
        %v1813 = vmul.f32 %v1812, %v1801
        %v1814 = vmul.f32 %v1813, %v1812
        %v1815 = vmul.f32 0.5, %v1814
        %v1816 = vsub.f32 1.5, %v1815
        %v1817 = vmul.f32 %v1812, %v1816
        %vm1818 = vweird.f32 %v1801
        %vm1819 = vweird.f32 %v1812
        %vm1820 = vmor %vm1818, %vm1819
        %v1821 = vsel %vm1820, %v1812, %v1817
        %v1822 = vmul.f32 %v1790, %v1811
        %v1823 = vmul.f32 %v1791, %v1821
        %v1825 = vperm.slane %v1775, 0
        %v1827 = vmul.f32 %v1822, %v1825
        %v1828 = vmul.f32 %v1823, %v1825
        %v1830 = vperm.slane %v1776, 0
        %v1832 = vadd.f32 %v1827, %v1830
        %v1833 = vadd.f32 %v1828, %v1830
        %1834 = vst [vmem:[%s666] sm:$0xff] %v1832
        %1835 = vst [vmem:[%s666 + $0x8] sm:$0xff] %v1833
        %s1836 = smul.u32 2, %s30
        %p1837 = scmp.lt.s32.totalorder %s1836, 3
        %s1838 = scalar_select %p1837, %s1836, 3
        %s1839 = smul.addr %s1838, 8
        %s1840 = scalar_lea.vmem %s14, %s1839
        // Predicated region
        $region109: #{transformer_decoder_layer.4} parent=75 // pred_check
          %p1841 = pneg %p362
        $region110: #{transformer_decoder_layer.4} parent=75 // pred_check_branch
          %1843 = sbr.rel (%p1841) target = $region112
        $region111: #{transformer_decoder_layer.4} parent=75 // pred_region
          %s1844 = smul.u32 2, %s30
        $region112: #{transformer_decoder_layer.4} parent=75 // pred_fallthru
          _
      $region76: #{transformer_decoder_layer.4} parent=5 // pred_fallthru
        _
      %p1845 = scmp.le.s32.totalorder 2, %s25
      // Predicated region
      $region113: #{transformer_decoder_layer.4} parent=5 // pred_check
        %p1846 = pneg %p1845
      $region114: #{transformer_decoder_layer.4} parent=5 // pred_check_branch
        %1848 = sbr.rel (%p1846) target = $region116
      $region115: #{transformer_decoder_layer.4} parent=5 // pred_region
        %s1849 = ssub.s32 %s25, 2
        // Predicated region
        $region117: #{transformer_decoder_layer.4} parent=115 // pred_check
          %p1850 = pneg %p368
        $region118: #{transformer_decoder_layer.4} parent=115 // pred_check_branch
          %1852 = sbr.rel (%p1850) target = $region120
        $region119: #{transformer_decoder_layer.4} parent=115 // pred_region
          %s1853 = smul.u32 2, %s31
          %p1854 = scmp.lt.s32.totalorder %s1853, 3
          %s1855 = scalar_select %p1854, %s1853, 3
          %s1856 = smul.addr %s1855, 8
          %s1857 = scalar_lea.vmem %s14, %s1856
        $region120: #{transformer_decoder_layer.4} parent=115 // pred_fallthru
          _
      $region116: #{transformer_decoder_layer.4} parent=5 // pred_fallthru
        _
    $region6: #{transformer_decoder_layer.4} parent=1 // loop_footer
      %s29 = sadd.s32 1, %s25
    $region7: #{transformer_decoder_layer.4} parent=1 // loop_footer_branch
      %24 = sbr.rel target = $region3
    $region8: #{transformer_decoder_layer.4} parent=1 // loop_exit
      _
    %1858 = vsyncpa [#allocation3], 1
    %s1859 = scalar_lea.sflag [#allocation3], 1
    %1860 = vsyncpa %s1859, 1
    %1861 = vsyncpa [#allocation5], 1
    %1862 = vsyncpa [#allocation8], 1
    %1863 = vsyncpa [#allocation11], 1
    %1864 = vsyncpa [#allocation14], 1

</llo_original>
